<compile_context>
chip_gen: v6e
topology: v6e:2x2x1
jax: 0.10.0
libtpu: 0.0.40
codegen_flags: <defaults>
</compile_context>

<pallas_src>
import jax
import jax.numpy as jnp
from jax.experimental import pallas as pl
from jax.experimental.pallas import tpu as pltpu

C_IN, C_OUT, H, W, KH, KW = 22, 256, 8, 8, 3, 3
BN_EPS = 1e-5
MAX_TILE_IMAGES = 32            # 32 images * 64 px = 2048 rows per tile (safe on v5e/v6e/v7x)
VMEM_LIMIT_BYTES = 32 * 1024 * 1024


def _conv_tile(xp_ref, w_ref):
    """3x3/pad=1 conv on one padded NHWC tile: (T,10,10,22) -> (T*64, 256) f32."""
    x = xp_ref[...]                                  # (T, 10, 10, C_IN) f32
    rows = x.shape[0] * H * W
    acc = jnp.zeros((rows, C_OUT), jnp.float32)
    for k in range(KH * KW):                         # 9 shifted taps, unrolled
        i, j = k // KW, k % KW
        tap = x[:, i:i + H, j:j + W, :].reshape(rows, C_IN)
        acc = acc + jnp.dot(tap.astype(jnp.bfloat16), w_ref[k],
                            preferred_element_type=jnp.float32)
    return acc


def stats_kernel(xp_ref, w_ref, s1_ref, s2_ref):
    """Pass 1: accumulate per-channel sum and sum-of-squares of the conv output."""
    @pl.when(pl.program_id(0) == 0)
    def _():
        s1_ref[...] = jnp.zeros_like(s1_ref)
        s2_ref[...] = jnp.zeros_like(s2_ref)

    y = _conv_tile(xp_ref, w_ref)                    # (rows, 256) f32
    s1_ref[...] += jnp.sum(y, axis=0, keepdims=True)
    s2_ref[...] += jnp.sum(y * y, axis=0, keepdims=True)


def apply_kernel(xp_ref, w_ref, scale_ref, shift_ref, o_ref):
    """Pass 2: recompute conv tile, apply folded BN scale/shift + ReLU."""
    y = _conv_tile(xp_ref, w_ref)
    o_ref[...] = jnp.maximum(y * scale_ref[...] + shift_ref[...], 0.0)


def _pick_tile_images(n):
    """Largest divisor of n that is <= MAX_TILE_IMAGES (no padded rows -> BN stats exact)."""
    t = 1
    for d in range(1, min(n, MAX_TILE_IMAGES) + 1):
        if n % d == 0:
            t = d
    return t


@jax.jit
def conv_block_forward(s, conv_w, conv_b, bn_gamma, bn_beta):
    """Reproduces ConvBlock.forward (training-mode BN).  s reshapable to (-1, 22, 8, 8)."""
    del conv_b  # exactly cancelled by the BN mean subtraction (pure dead work otherwise)
    x = s.reshape(-1, C_IN, H, W).astype(jnp.float32)
    n = x.shape[0]
    tile_n = _pick_tile_images(n)
    grid_n = n // tile_n
    rows = tile_n * H * W
    M = n * H * W

    # NCHW -> NHWC, zero-pad spatially for the 3x3 / pad=1 conv (only ~1.56x inflation).
    x_pad = jnp.pad(jnp.transpose(x, (0, 2, 3, 1)),
                    ((0, 0), (1, 1), (1, 1), (0, 0)))            # (n, 10, 10, 22)

    # (C_OUT, C_IN, KH, KW) -> (KH*KW, C_IN, C_OUT), bf16 operands for the MXU.
    w_taps = jnp.transpose(conv_w, (2, 3, 1, 0)).reshape(KH * KW, C_IN, C_OUT)
    w_taps = w_taps.astype(jnp.bfloat16)

    xpad_spec = pl.BlockSpec((tile_n, H + 2, W + 2, C_IN), lambda b: (b, 0, 0, 0))
    w_spec = pl.BlockSpec((KH * KW, C_IN, C_OUT), lambda b: (0, 0, 0))
    chan_spec = pl.BlockSpec((1, C_OUT), lambda b: (0, 0))

    # ---- Pass 1: per-channel sum / sum-of-squares (resident accumulator outputs). ----
    s1, s2 = pl.pallas_call(
        stats_kernel,
        out_shape=(jax.ShapeDtypeStruct((1, C_OUT), jnp.float32),
                   jax.ShapeDtypeStruct((1, C_OUT), jnp.float32)),
        grid=(grid_n,),
        in_specs=[xpad_spec, w_spec],
        out_specs=(chan_spec, chan_spec),
        compiler_params=pltpu.CompilerParams(
            dimension_semantics=("arbitrary",),
            vmem_limit_bytes=VMEM_LIMIT_BYTES),
    )(x_pad, w_taps)

    # Fold training-mode BN (biased variance) into one scale/shift per channel (f32).
    inv_m = 1.0 / float(M)
    mean = s1 * inv_m
    var = jnp.maximum(s2 * inv_m - mean * mean, 0.0)
    scale = bn_gamma.reshape(1, C_OUT).astype(jnp.float32) * jax.lax.rsqrt(var + BN_EPS)
    shift = bn_beta.reshape(1, C_OUT).astype(jnp.float32) - mean * scale

    # ---- Pass 2: recompute conv + normalize + ReLU ("parallel" -> v7x megacore). ----
    out_flat = pl.pallas_call(
        apply_kernel,
        out_shape=jax.ShapeDtypeStruct((M, C_OUT), jnp.float32),
        grid=(grid_n,),
        in_specs=[xpad_spec, w_spec, chan_spec, chan_spec],
        out_specs=pl.BlockSpec((rows, C_OUT), lambda b: (b, 0)),
        compiler_params=pltpu.CompilerParams(
            dimension_semantics=("parallel",),
            vmem_limit_bytes=VMEM_LIMIT_BYTES),
    )(x_pad, w_taps, scale, shift)

    # (N*H*W, C_OUT) -> NCHW to match the PyTorch module's output layout.
    return jnp.transpose(out_flat.reshape(n, H, W, C_OUT), (0, 3, 1, 2))


def _reference(x, conv_w, conv_b, bn_gamma, bn_beta):
    """Pure-JAX f32 reference of ConvBlock.forward with training-mode BN."""
    y = jax.lax.conv_general_dilated(
        x, conv_w, window_strides=(1, 1), padding=((1, 1), (1, 1)),
        dimension_numbers=("NCHW", "OIHW", "NCHW"))
    y = y + conv_b.reshape(1, C_OUT, 1, 1)
    mean = jnp.mean(y, axis=(0, 2, 3), keepdims=True)
    var = jnp.mean((y - mean) ** 2, axis=(0, 2, 3), keepdims=True)
    y_hat = (y - mean) * jax.lax.rsqrt(var + BN_EPS)
    out = y_hat * bn_gamma.reshape(1, C_OUT, 1, 1) + bn_beta.reshape(1, C_OUT, 1, 1)
    return jnp.maximum(out, 0.0)


if __name__ == "__main__":
    key = jax.random.PRNGKey(0)
    k_x, k_w, k_b = jax.random.split(key, 3)

    # Small deterministic example: batch=2, NCHW (2, 22, 8, 8).
    x = jax.random.normal(k_x, (2, C_IN, H, W), dtype=jnp.float32)

    fan_in = C_IN * KH * KW
    bound = 1.0 / (fan_in ** 0.5)
    conv_w = jax.random.uniform(k_w, (C_OUT, C_IN, KH, KW),
                                minval=-bound, maxval=bound, dtype=jnp.float32)
    conv_b = jax.random.uniform(k_b, (C_OUT,),
                                minval=-bound, maxval=bound, dtype=jnp.float32)
    bn_gamma = jnp.ones((C_OUT,), jnp.float32)
    bn_beta = jnp.zeros((C_OUT,), jnp.float32)
    # TODO(synk): BN running_mean/running_var momentum updates are a training-time side
    # effect (not part of the returned forward value) and are not modeled here.

    out = conv_block_forward(x, conv_w, conv_b, bn_gamma, bn_beta)
    jax.block_until_ready(out)
    assert out.shape == (2, C_OUT, H, W), out.shape

    # Loose-tolerance sanity check vs pure-JAX f32 reference (kernel matmuls are bf16).
    ref = _reference(x, conv_w, conv_b, bn_gamma, bn_beta)
    max_err = float(jnp.max(jnp.abs(out - ref)))
    assert max_err < 1e-1, f"max abs err {max_err}"
    print("KERNEL_OK")
</pallas_src>

<mosaic_0001>
module attributes {stable_mosaic.version = 11 : i64} {
  func.func @stats_kernel(%arg0: i32, %arg1: memref<2x10x10x22xf32, #tpu.memory_space<vmem>>, %arg2: memref<9x22x256xbf16, #tpu.memory_space<vmem>>, %arg3: memref<1x256xf32, #tpu.memory_space<vmem>>, %arg4: memref<1x256xf32, #tpu.memory_space<vmem>>) attributes {dimension_semantics = [#tpu.dimension_semantics<arbitrary>], iteration_bounds = array<i64: 1>, scalar_prefetch = 0 : i64, scratch_operands = 0 : i64, tpu.core_type = #tpu.core_type<tc>, window_params = [{transform_indices = @transform_0, window_bounds = array<i64: 2, 10, 10, 22>}, {pipeline_mode = #tpu.pipeline_mode<synchronous>, transform_indices = @transform_1, window_bounds = array<i64: 9, 22, 256>}, {pipeline_mode = #tpu.pipeline_mode<synchronous>, transform_indices = @transform_2, window_bounds = array<i64: 1, 256>}, {pipeline_mode = #tpu.pipeline_mode<synchronous>, transform_indices = @transform_3, window_bounds = array<i64: 1, 256>}]} {
    %c0_i32 = arith.constant 0 : i32
    %0 = arith.cmpi eq, %arg0, %c0_i32 : i32
    %1 = arith.extui %0 : i1 to i32
    %c0_i32_0 = arith.constant 0 : i32
    %2 = arith.cmpi ne, %1, %c0_i32_0 : i32
    scf.if %2 {
      %cst_42 = arith.constant 0.000000e+00 : f32
      %79 = vector.broadcast %cst_42 : f32 to vector<1x256xf32>
      %c0_43 = arith.constant 0 : index
      %c0_44 = arith.constant 0 : index
      %80 = vector.load %arg3[%c0_43, %c0_44] : memref<1x256xf32, #tpu.memory_space<vmem>>, vector<1x256xf32>
      tpu.vector_store %arg3[%c0_43, %c0_44], %79 {strides = array<i32>} : memref<1x256xf32, #tpu.memory_space<vmem>>, vector<1x256xf32>,
      %cst_45 = arith.constant 0.000000e+00 : f32
      %81 = vector.broadcast %cst_45 : f32 to vector<1x256xf32>
      %c0_46 = arith.constant 0 : index
      %c0_47 = arith.constant 0 : index
      %82 = vector.load %arg4[%c0_46, %c0_47] : memref<1x256xf32, #tpu.memory_space<vmem>>, vector<1x256xf32>
      tpu.vector_store %arg4[%c0_46, %c0_47], %81 {strides = array<i32>} : memref<1x256xf32, #tpu.memory_space<vmem>>, vector<1x256xf32>,
    } else {
    }
    %c0 = arith.constant 0 : index
    %c0_1 = arith.constant 0 : index
    %c0_2 = arith.constant 0 : index
    %c0_3 = arith.constant 0 : index
    %3 = vector.load %arg1[%c0, %c0_1, %c0_2, %c0_3] : memref<2x10x10x22xf32, #tpu.memory_space<vmem>>, vector<2x10x10x22xf32>
    %cst = arith.constant 0.000000e+00 : f32
    %4 = vector.broadcast %cst : f32 to vector<128x256xf32>
    %5 = vector.extract_strided_slice %3 {offsets = [0, 0, 0, 0], sizes = [2, 8, 8, 22], strides = [1, 1, 1, 1]} : vector<2x10x10x22xf32> to vector<2x8x8x22xf32>
    %6 = vector.shape_cast %5 : vector<2x8x8x22xf32> to vector<128x22xf32>
    %7 = arith.truncf %6 : vector<128x22xf32> to vector<128x22xbf16>
    %c0_4 = arith.constant 0 : index
    %c0_5 = arith.constant 0 : index
    %c0_6 = arith.constant 0 : index
    %8 = vector.load %arg2[%c0_4, %c0_5, %c0_6] : memref<9x22x256xbf16, #tpu.memory_space<vmem>>, vector<1x22x256xbf16>
    %9 = vector.shape_cast %8 : vector<1x22x256xbf16> to vector<22x256xbf16>
    %cst_7 = arith.constant dense<0.000000e+00> : vector<128x256xf32>
    %10 = tpu.matmul %7, %9, %cst_7 {dimension_numbers = #tpu.dot_dimension_numbers<[1], [0], [0], [1], [0, 0, 1, 1], [], []>} : vector<128x22xbf16>, vector<22x256xbf16>, vector<128x256xf32> -> vector<128x256xf32>
    %11 = arith.addf %4, %10 : vector<128x256xf32>
    %12 = vector.extract_strided_slice %3 {offsets = [0, 0, 1, 0], sizes = [2, 8, 8, 22], strides = [1, 1, 1, 1]} : vector<2x10x10x22xf32> to vector<2x8x8x22xf32>
    %13 = vector.shape_cast %12 : vector<2x8x8x22xf32> to vector<128x22xf32>
    %14 = arith.truncf %13 : vector<128x22xf32> to vector<128x22xbf16>
    %c1 = arith.constant 1 : index
    %c0_8 = arith.constant 0 : index
    %c0_9 = arith.constant 0 : index
    %15 = vector.load %arg2[%c1, %c0_8, %c0_9] : memref<9x22x256xbf16, #tpu.memory_space<vmem>>, vector<1x22x256xbf16>
    %16 = vector.shape_cast %15 : vector<1x22x256xbf16> to vector<22x256xbf16>
    %cst_10 = arith.constant dense<0.000000e+00> : vector<128x256xf32>
    %17 = tpu.matmul %14, %16, %cst_10 {dimension_numbers = #tpu.dot_dimension_numbers<[1], [0], [0], [1], [0, 0, 1, 1], [], []>} : vector<128x22xbf16>, vector<22x256xbf16>, vector<128x256xf32> -> vector<128x256xf32>
    %18 = arith.addf %11, %17 : vector<128x256xf32>
    %19 = vector.extract_strided_slice %3 {offsets = [0, 0, 2, 0], sizes = [2, 8, 8, 22], strides = [1, 1, 1, 1]} : vector<2x10x10x22xf32> to vector<2x8x8x22xf32>
    %20 = vector.shape_cast %19 : vector<2x8x8x22xf32> to vector<128x22xf32>
    %21 = arith.truncf %20 : vector<128x22xf32> to vector<128x22xbf16>
    %c2 = arith.constant 2 : index
    %c0_11 = arith.constant 0 : index
    %c0_12 = arith.constant 0 : index
    %22 = vector.load %arg2[%c2, %c0_11, %c0_12] : memref<9x22x256xbf16, #tpu.memory_space<vmem>>, vector<1x22x256xbf16>
    %23 = vector.shape_cast %22 : vector<1x22x256xbf16> to vector<22x256xbf16>
    %cst_13 = arith.constant dense<0.000000e+00> : vector<128x256xf32>
    %24 = tpu.matmul %21, %23, %cst_13 {dimension_numbers = #tpu.dot_dimension_numbers<[1], [0], [0], [1], [0, 0, 1, 1], [], []>} : vector<128x22xbf16>, vector<22x256xbf16>, vector<128x256xf32> -> vector<128x256xf32>
    %25 = arith.addf %18, %24 : vector<128x256xf32>
    %26 = vector.extract_strided_slice %3 {offsets = [0, 1, 0, 0], sizes = [2, 8, 8, 22], strides = [1, 1, 1, 1]} : vector<2x10x10x22xf32> to vector<2x8x8x22xf32>
    %27 = vector.shape_cast %26 : vector<2x8x8x22xf32> to vector<128x22xf32>
    %28 = arith.truncf %27 : vector<128x22xf32> to vector<128x22xbf16>
    %c3 = arith.constant 3 : index
    %c0_14 = arith.constant 0 : index
    %c0_15 = arith.constant 0 : index
    %29 = vector.load %arg2[%c3, %c0_14, %c0_15] : memref<9x22x256xbf16, #tpu.memory_space<vmem>>, vector<1x22x256xbf16>
    %30 = vector.shape_cast %29 : vector<1x22x256xbf16> to vector<22x256xbf16>
    %cst_16 = arith.constant dense<0.000000e+00> : vector<128x256xf32>
    %31 = tpu.matmul %28, %30, %cst_16 {dimension_numbers = #tpu.dot_dimension_numbers<[1], [0], [0], [1], [0, 0, 1, 1], [], []>} : vector<128x22xbf16>, vector<22x256xbf16>, vector<128x256xf32> -> vector<128x256xf32>
    %32 = arith.addf %25, %31 : vector<128x256xf32>
    %33 = vector.extract_strided_slice %3 {offsets = [0, 1, 1, 0], sizes = [2, 8, 8, 22], strides = [1, 1, 1, 1]} : vector<2x10x10x22xf32> to vector<2x8x8x22xf32>
    %34 = vector.shape_cast %33 : vector<2x8x8x22xf32> to vector<128x22xf32>
    %35 = arith.truncf %34 : vector<128x22xf32> to vector<128x22xbf16>
    %c4 = arith.constant 4 : index
    %c0_17 = arith.constant 0 : index
    %c0_18 = arith.constant 0 : index
    %36 = vector.load %arg2[%c4, %c0_17, %c0_18] : memref<9x22x256xbf16, #tpu.memory_space<vmem>>, vector<1x22x256xbf16>
    %37 = vector.shape_cast %36 : vector<1x22x256xbf16> to vector<22x256xbf16>
    %cst_19 = arith.constant dense<0.000000e+00> : vector<128x256xf32>
    %38 = tpu.matmul %35, %37, %cst_19 {dimension_numbers = #tpu.dot_dimension_numbers<[1], [0], [0], [1], [0, 0, 1, 1], [], []>} : vector<128x22xbf16>, vector<22x256xbf16>, vector<128x256xf32> -> vector<128x256xf32>
    %39 = arith.addf %32, %38 : vector<128x256xf32>
    %40 = vector.extract_strided_slice %3 {offsets = [0, 1, 2, 0], sizes = [2, 8, 8, 22], strides = [1, 1, 1, 1]} : vector<2x10x10x22xf32> to vector<2x8x8x22xf32>
    %41 = vector.shape_cast %40 : vector<2x8x8x22xf32> to vector<128x22xf32>
    %42 = arith.truncf %41 : vector<128x22xf32> to vector<128x22xbf16>
    %c5 = arith.constant 5 : index
    %c0_20 = arith.constant 0 : index
    %c0_21 = arith.constant 0 : index
    %43 = vector.load %arg2[%c5, %c0_20, %c0_21] : memref<9x22x256xbf16, #tpu.memory_space<vmem>>, vector<1x22x256xbf16>
    %44 = vector.shape_cast %43 : vector<1x22x256xbf16> to vector<22x256xbf16>
    %cst_22 = arith.constant dense<0.000000e+00> : vector<128x256xf32>
    %45 = tpu.matmul %42, %44, %cst_22 {dimension_numbers = #tpu.dot_dimension_numbers<[1], [0], [0], [1], [0, 0, 1, 1], [], []>} : vector<128x22xbf16>, vector<22x256xbf16>, vector<128x256xf32> -> vector<128x256xf32>
    %46 = arith.addf %39, %45 : vector<128x256xf32>
    %47 = vector.extract_strided_slice %3 {offsets = [0, 2, 0, 0], sizes = [2, 8, 8, 22], strides = [1, 1, 1, 1]} : vector<2x10x10x22xf32> to vector<2x8x8x22xf32>
    %48 = vector.shape_cast %47 : vector<2x8x8x22xf32> to vector<128x22xf32>
    %49 = arith.truncf %48 : vector<128x22xf32> to vector<128x22xbf16>
    %c6 = arith.constant 6 : index
    %c0_23 = arith.constant 0 : index
    %c0_24 = arith.constant 0 : index
    %50 = vector.load %arg2[%c6, %c0_23, %c0_24] : memref<9x22x256xbf16, #tpu.memory_space<vmem>>, vector<1x22x256xbf16>
    %51 = vector.shape_cast %50 : vector<1x22x256xbf16> to vector<22x256xbf16>
    %cst_25 = arith.constant dense<0.000000e+00> : vector<128x256xf32>
    %52 = tpu.matmul %49, %51, %cst_25 {dimension_numbers = #tpu.dot_dimension_numbers<[1], [0], [0], [1], [0, 0, 1, 1], [], []>} : vector<128x22xbf16>, vector<22x256xbf16>, vector<128x256xf32> -> vector<128x256xf32>
    %53 = arith.addf %46, %52 : vector<128x256xf32>
    %54 = vector.extract_strided_slice %3 {offsets = [0, 2, 1, 0], sizes = [2, 8, 8, 22], strides = [1, 1, 1, 1]} : vector<2x10x10x22xf32> to vector<2x8x8x22xf32>
    %55 = vector.shape_cast %54 : vector<2x8x8x22xf32> to vector<128x22xf32>
    %56 = arith.truncf %55 : vector<128x22xf32> to vector<128x22xbf16>
    %c7 = arith.constant 7 : index
    %c0_26 = arith.constant 0 : index
    %c0_27 = arith.constant 0 : index
    %57 = vector.load %arg2[%c7, %c0_26, %c0_27] : memref<9x22x256xbf16, #tpu.memory_space<vmem>>, vector<1x22x256xbf16>
    %58 = vector.shape_cast %57 : vector<1x22x256xbf16> to vector<22x256xbf16>
    %cst_28 = arith.constant dense<0.000000e+00> : vector<128x256xf32>
    %59 = tpu.matmul %56, %58, %cst_28 {dimension_numbers = #tpu.dot_dimension_numbers<[1], [0], [0], [1], [0, 0, 1, 1], [], []>} : vector<128x22xbf16>, vector<22x256xbf16>, vector<128x256xf32> -> vector<128x256xf32>
    %60 = arith.addf %53, %59 : vector<128x256xf32>
    %61 = vector.extract_strided_slice %3 {offsets = [0, 2, 2, 0], sizes = [2, 8, 8, 22], strides = [1, 1, 1, 1]} : vector<2x10x10x22xf32> to vector<2x8x8x22xf32>
    %62 = vector.shape_cast %61 : vector<2x8x8x22xf32> to vector<128x22xf32>
    %63 = arith.truncf %62 : vector<128x22xf32> to vector<128x22xbf16>
    %c8 = arith.constant 8 : index
    %c0_29 = arith.constant 0 : index
    %c0_30 = arith.constant 0 : index
    %64 = vector.load %arg2[%c8, %c0_29, %c0_30] : memref<9x22x256xbf16, #tpu.memory_space<vmem>>, vector<1x22x256xbf16>
    %65 = vector.shape_cast %64 : vector<1x22x256xbf16> to vector<22x256xbf16>
    %cst_31 = arith.constant dense<0.000000e+00> : vector<128x256xf32>
    %66 = tpu.matmul %63, %65, %cst_31 {dimension_numbers = #tpu.dot_dimension_numbers<[1], [0], [0], [1], [0, 0, 1, 1], [], []>} : vector<128x22xbf16>, vector<22x256xbf16>, vector<128x256xf32> -> vector<128x256xf32>
    %67 = arith.addf %60, %66 : vector<128x256xf32>
    %c0_32 = arith.constant 0 : index
    %c0_33 = arith.constant 0 : index
    %68 = vector.load %arg3[%c0_32, %c0_33] : memref<1x256xf32, #tpu.memory_space<vmem>>, vector<1x256xf32>
    %cst_34 = arith.constant dense<0.000000e+00> : vector<256xf32>
    %69 = vector.multi_reduction <add>, %67, %cst_34 [0] : vector<128x256xf32> to vector<256xf32>
    %70 = vector.shape_cast %69 : vector<256xf32> to vector<1x256xf32>
    %71 = arith.addf %68, %70 : vector<1x256xf32>
    %c0_35 = arith.constant 0 : index
    %c0_36 = arith.constant 0 : index
    %72 = vector.load %arg3[%c0_35, %c0_36] : memref<1x256xf32, #tpu.memory_space<vmem>>, vector<1x256xf32>
    tpu.vector_store %arg3[%c0_35, %c0_36], %71 {strides = array<i32>} : memref<1x256xf32, #tpu.memory_space<vmem>>, vector<1x256xf32>,
    %c0_37 = arith.constant 0 : index
    %c0_38 = arith.constant 0 : index
    %73 = vector.load %arg4[%c0_37, %c0_38] : memref<1x256xf32, #tpu.memory_space<vmem>>, vector<1x256xf32>
    %74 = arith.mulf %67, %67 : vector<128x256xf32>
    %cst_39 = arith.constant dense<0.000000e+00> : vector<256xf32>
    %75 = vector.multi_reduction <add>, %74, %cst_39 [0] : vector<128x256xf32> to vector<256xf32>
    %76 = vector.shape_cast %75 : vector<256xf32> to vector<1x256xf32>
    %77 = arith.addf %73, %76 : vector<1x256xf32>
    %c0_40 = arith.constant 0 : index
    %c0_41 = arith.constant 0 : index
    %78 = vector.load %arg4[%c0_40, %c0_41] : memref<1x256xf32, #tpu.memory_space<vmem>>, vector<1x256xf32>
    tpu.vector_store %arg4[%c0_40, %c0_41], %77 {strides = array<i32>} : memref<1x256xf32, #tpu.memory_space<vmem>>, vector<1x256xf32>,
    return
  }
  func.func @transform_0(%arg0: i32) -> (i32, i32, i32, i32) {
    %c0_i32 = arith.constant 0 : i32
    %c0_i32_0 = arith.constant 0 : i32
    %c0_i32_1 = arith.constant 0 : i32
    %c0_i32_2 = arith.constant 0 : i32
    return %arg0, %c0_i32, %c0_i32_0, %c0_i32_1 : i32, i32, i32, i32
  }
  func.func @transform_1(%arg0: i32) -> (i32, i32, i32) {
    %c0_i32 = arith.constant 0 : i32
    %c0_i32_0 = arith.constant 0 : i32
    %c0_i32_1 = arith.constant 0 : i32
    %c0_i32_2 = arith.constant 0 : i32
    return %c0_i32, %c0_i32_0, %c0_i32_1 : i32, i32, i32
  }
  func.func @transform_2(%arg0: i32) -> (i32, i32) {
    %c0_i32 = arith.constant 0 : i32
    %c0_i32_0 = arith.constant 0 : i32
    %c0_i32_1 = arith.constant 0 : i32
    return %c0_i32, %c0_i32_0 : i32, i32
  }
  func.func @transform_3(%arg0: i32) -> (i32, i32) {
    %c0_i32 = arith.constant 0 : i32
    %c0_i32_0 = arith.constant 0 : i32
    %c0_i32_1 = arith.constant 0 : i32
    return %c0_i32, %c0_i32_0 : i32, i32
  }
}

module attributes {stable_mosaic.version = 11 : i64} {
  func.func @apply_kernel(%arg0: i32, %arg1: memref<2x10x10x22xf32, #tpu.memory_space<vmem>>, %arg2: memref<9x22x256xbf16, #tpu.memory_space<vmem>>, %arg3: memref<1x256xf32, #tpu.memory_space<vmem>>, %arg4: memref<1x256xf32, #tpu.memory_space<vmem>>, %arg5: memref<128x256xf32, #tpu.memory_space<vmem>>) attributes {dimension_semantics = [#tpu.dimension_semantics<parallel>], iteration_bounds = array<i64: 1>, scalar_prefetch = 0 : i64, scratch_operands = 0 : i64, tpu.core_type = #tpu.core_type<tc>, window_params = [{transform_indices = @transform_0, window_bounds = array<i64: 2, 10, 10, 22>}, {pipeline_mode = #tpu.pipeline_mode<synchronous>, transform_indices = @transform_1, window_bounds = array<i64: 9, 22, 256>}, {pipeline_mode = #tpu.pipeline_mode<synchronous>, transform_indices = @transform_2, window_bounds = array<i64: 1, 256>}, {pipeline_mode = #tpu.pipeline_mode<synchronous>, transform_indices = @transform_3, window_bounds = array<i64: 1, 256>}, {transform_indices = @transform_4, window_bounds = array<i64: 128, 256>}]} {
    %c0 = arith.constant 0 : index
    %c0_0 = arith.constant 0 : index
    %c0_1 = arith.constant 0 : index
    %c0_2 = arith.constant 0 : index
    %0 = vector.load %arg1[%c0, %c0_0, %c0_1, %c0_2] : memref<2x10x10x22xf32, #tpu.memory_space<vmem>>, vector<2x10x10x22xf32>
    %cst = arith.constant 0.000000e+00 : f32
    %1 = vector.broadcast %cst : f32 to vector<128x256xf32>
    %2 = vector.extract_strided_slice %0 {offsets = [0, 0, 0, 0], sizes = [2, 8, 8, 22], strides = [1, 1, 1, 1]} : vector<2x10x10x22xf32> to vector<2x8x8x22xf32>
    %3 = vector.shape_cast %2 : vector<2x8x8x22xf32> to vector<128x22xf32>
    %4 = arith.truncf %3 : vector<128x22xf32> to vector<128x22xbf16>
    %c0_3 = arith.constant 0 : index
    %c0_4 = arith.constant 0 : index
    %c0_5 = arith.constant 0 : index
    %5 = vector.load %arg2[%c0_3, %c0_4, %c0_5] : memref<9x22x256xbf16, #tpu.memory_space<vmem>>, vector<1x22x256xbf16>
    %6 = vector.shape_cast %5 : vector<1x22x256xbf16> to vector<22x256xbf16>
    %cst_6 = arith.constant dense<0.000000e+00> : vector<128x256xf32>
    %7 = tpu.matmul %4, %6, %cst_6 {dimension_numbers = #tpu.dot_dimension_numbers<[1], [0], [0], [1], [0, 0, 1, 1], [], []>} : vector<128x22xbf16>, vector<22x256xbf16>, vector<128x256xf32> -> vector<128x256xf32>
    %8 = arith.addf %1, %7 : vector<128x256xf32>
    %9 = vector.extract_strided_slice %0 {offsets = [0, 0, 1, 0], sizes = [2, 8, 8, 22], strides = [1, 1, 1, 1]} : vector<2x10x10x22xf32> to vector<2x8x8x22xf32>
    %10 = vector.shape_cast %9 : vector<2x8x8x22xf32> to vector<128x22xf32>
    %11 = arith.truncf %10 : vector<128x22xf32> to vector<128x22xbf16>
    %c1 = arith.constant 1 : index
    %c0_7 = arith.constant 0 : index
    %c0_8 = arith.constant 0 : index
    %12 = vector.load %arg2[%c1, %c0_7, %c0_8] : memref<9x22x256xbf16, #tpu.memory_space<vmem>>, vector<1x22x256xbf16>
    %13 = vector.shape_cast %12 : vector<1x22x256xbf16> to vector<22x256xbf16>
    %cst_9 = arith.constant dense<0.000000e+00> : vector<128x256xf32>
    %14 = tpu.matmul %11, %13, %cst_9 {dimension_numbers = #tpu.dot_dimension_numbers<[1], [0], [0], [1], [0, 0, 1, 1], [], []>} : vector<128x22xbf16>, vector<22x256xbf16>, vector<128x256xf32> -> vector<128x256xf32>
    %15 = arith.addf %8, %14 : vector<128x256xf32>
    %16 = vector.extract_strided_slice %0 {offsets = [0, 0, 2, 0], sizes = [2, 8, 8, 22], strides = [1, 1, 1, 1]} : vector<2x10x10x22xf32> to vector<2x8x8x22xf32>
    %17 = vector.shape_cast %16 : vector<2x8x8x22xf32> to vector<128x22xf32>
    %18 = arith.truncf %17 : vector<128x22xf32> to vector<128x22xbf16>
    %c2 = arith.constant 2 : index
    %c0_10 = arith.constant 0 : index
    %c0_11 = arith.constant 0 : index
    %19 = vector.load %arg2[%c2, %c0_10, %c0_11] : memref<9x22x256xbf16, #tpu.memory_space<vmem>>, vector<1x22x256xbf16>
    %20 = vector.shape_cast %19 : vector<1x22x256xbf16> to vector<22x256xbf16>
    %cst_12 = arith.constant dense<0.000000e+00> : vector<128x256xf32>
    %21 = tpu.matmul %18, %20, %cst_12 {dimension_numbers = #tpu.dot_dimension_numbers<[1], [0], [0], [1], [0, 0, 1, 1], [], []>} : vector<128x22xbf16>, vector<22x256xbf16>, vector<128x256xf32> -> vector<128x256xf32>
    %22 = arith.addf %15, %21 : vector<128x256xf32>
    %23 = vector.extract_strided_slice %0 {offsets = [0, 1, 0, 0], sizes = [2, 8, 8, 22], strides = [1, 1, 1, 1]} : vector<2x10x10x22xf32> to vector<2x8x8x22xf32>
    %24 = vector.shape_cast %23 : vector<2x8x8x22xf32> to vector<128x22xf32>
    %25 = arith.truncf %24 : vector<128x22xf32> to vector<128x22xbf16>
    %c3 = arith.constant 3 : index
    %c0_13 = arith.constant 0 : index
    %c0_14 = arith.constant 0 : index
    %26 = vector.load %arg2[%c3, %c0_13, %c0_14] : memref<9x22x256xbf16, #tpu.memory_space<vmem>>, vector<1x22x256xbf16>
    %27 = vector.shape_cast %26 : vector<1x22x256xbf16> to vector<22x256xbf16>
    %cst_15 = arith.constant dense<0.000000e+00> : vector<128x256xf32>
    %28 = tpu.matmul %25, %27, %cst_15 {dimension_numbers = #tpu.dot_dimension_numbers<[1], [0], [0], [1], [0, 0, 1, 1], [], []>} : vector<128x22xbf16>, vector<22x256xbf16>, vector<128x256xf32> -> vector<128x256xf32>
    %29 = arith.addf %22, %28 : vector<128x256xf32>
    %30 = vector.extract_strided_slice %0 {offsets = [0, 1, 1, 0], sizes = [2, 8, 8, 22], strides = [1, 1, 1, 1]} : vector<2x10x10x22xf32> to vector<2x8x8x22xf32>
    %31 = vector.shape_cast %30 : vector<2x8x8x22xf32> to vector<128x22xf32>
    %32 = arith.truncf %31 : vector<128x22xf32> to vector<128x22xbf16>
    %c4 = arith.constant 4 : index
    %c0_16 = arith.constant 0 : index
    %c0_17 = arith.constant 0 : index
    %33 = vector.load %arg2[%c4, %c0_16, %c0_17] : memref<9x22x256xbf16, #tpu.memory_space<vmem>>, vector<1x22x256xbf16>
    %34 = vector.shape_cast %33 : vector<1x22x256xbf16> to vector<22x256xbf16>
    %cst_18 = arith.constant dense<0.000000e+00> : vector<128x256xf32>
    %35 = tpu.matmul %32, %34, %cst_18 {dimension_numbers = #tpu.dot_dimension_numbers<[1], [0], [0], [1], [0, 0, 1, 1], [], []>} : vector<128x22xbf16>, vector<22x256xbf16>, vector<128x256xf32> -> vector<128x256xf32>
    %36 = arith.addf %29, %35 : vector<128x256xf32>
    %37 = vector.extract_strided_slice %0 {offsets = [0, 1, 2, 0], sizes = [2, 8, 8, 22], strides = [1, 1, 1, 1]} : vector<2x10x10x22xf32> to vector<2x8x8x22xf32>
    %38 = vector.shape_cast %37 : vector<2x8x8x22xf32> to vector<128x22xf32>
    %39 = arith.truncf %38 : vector<128x22xf32> to vector<128x22xbf16>
    %c5 = arith.constant 5 : index
    %c0_19 = arith.constant 0 : index
    %c0_20 = arith.constant 0 : index
    %40 = vector.load %arg2[%c5, %c0_19, %c0_20] : memref<9x22x256xbf16, #tpu.memory_space<vmem>>, vector<1x22x256xbf16>
    %41 = vector.shape_cast %40 : vector<1x22x256xbf16> to vector<22x256xbf16>
    %cst_21 = arith.constant dense<0.000000e+00> : vector<128x256xf32>
    %42 = tpu.matmul %39, %41, %cst_21 {dimension_numbers = #tpu.dot_dimension_numbers<[1], [0], [0], [1], [0, 0, 1, 1], [], []>} : vector<128x22xbf16>, vector<22x256xbf16>, vector<128x256xf32> -> vector<128x256xf32>
    %43 = arith.addf %36, %42 : vector<128x256xf32>
    %44 = vector.extract_strided_slice %0 {offsets = [0, 2, 0, 0], sizes = [2, 8, 8, 22], strides = [1, 1, 1, 1]} : vector<2x10x10x22xf32> to vector<2x8x8x22xf32>
    %45 = vector.shape_cast %44 : vector<2x8x8x22xf32> to vector<128x22xf32>
    %46 = arith.truncf %45 : vector<128x22xf32> to vector<128x22xbf16>
    %c6 = arith.constant 6 : index
    %c0_22 = arith.constant 0 : index
    %c0_23 = arith.constant 0 : index
    %47 = vector.load %arg2[%c6, %c0_22, %c0_23] : memref<9x22x256xbf16, #tpu.memory_space<vmem>>, vector<1x22x256xbf16>
    %48 = vector.shape_cast %47 : vector<1x22x256xbf16> to vector<22x256xbf16>
    %cst_24 = arith.constant dense<0.000000e+00> : vector<128x256xf32>
    %49 = tpu.matmul %46, %48, %cst_24 {dimension_numbers = #tpu.dot_dimension_numbers<[1], [0], [0], [1], [0, 0, 1, 1], [], []>} : vector<128x22xbf16>, vector<22x256xbf16>, vector<128x256xf32> -> vector<128x256xf32>
    %50 = arith.addf %43, %49 : vector<128x256xf32>
    %51 = vector.extract_strided_slice %0 {offsets = [0, 2, 1, 0], sizes = [2, 8, 8, 22], strides = [1, 1, 1, 1]} : vector<2x10x10x22xf32> to vector<2x8x8x22xf32>
    %52 = vector.shape_cast %51 : vector<2x8x8x22xf32> to vector<128x22xf32>
    %53 = arith.truncf %52 : vector<128x22xf32> to vector<128x22xbf16>
    %c7 = arith.constant 7 : index
    %c0_25 = arith.constant 0 : index
    %c0_26 = arith.constant 0 : index
    %54 = vector.load %arg2[%c7, %c0_25, %c0_26] : memref<9x22x256xbf16, #tpu.memory_space<vmem>>, vector<1x22x256xbf16>
    %55 = vector.shape_cast %54 : vector<1x22x256xbf16> to vector<22x256xbf16>
    %cst_27 = arith.constant dense<0.000000e+00> : vector<128x256xf32>
    %56 = tpu.matmul %53, %55, %cst_27 {dimension_numbers = #tpu.dot_dimension_numbers<[1], [0], [0], [1], [0, 0, 1, 1], [], []>} : vector<128x22xbf16>, vector<22x256xbf16>, vector<128x256xf32> -> vector<128x256xf32>
    %57 = arith.addf %50, %56 : vector<128x256xf32>
    %58 = vector.extract_strided_slice %0 {offsets = [0, 2, 2, 0], sizes = [2, 8, 8, 22], strides = [1, 1, 1, 1]} : vector<2x10x10x22xf32> to vector<2x8x8x22xf32>
    %59 = vector.shape_cast %58 : vector<2x8x8x22xf32> to vector<128x22xf32>
    %60 = arith.truncf %59 : vector<128x22xf32> to vector<128x22xbf16>
    %c8 = arith.constant 8 : index
    %c0_28 = arith.constant 0 : index
    %c0_29 = arith.constant 0 : index
    %61 = vector.load %arg2[%c8, %c0_28, %c0_29] : memref<9x22x256xbf16, #tpu.memory_space<vmem>>, vector<1x22x256xbf16>
    %62 = vector.shape_cast %61 : vector<1x22x256xbf16> to vector<22x256xbf16>
    %cst_30 = arith.constant dense<0.000000e+00> : vector<128x256xf32>
    %63 = tpu.matmul %60, %62, %cst_30 {dimension_numbers = #tpu.dot_dimension_numbers<[1], [0], [0], [1], [0, 0, 1, 1], [], []>} : vector<128x22xbf16>, vector<22x256xbf16>, vector<128x256xf32> -> vector<128x256xf32>
    %64 = arith.addf %57, %63 : vector<128x256xf32>
    %c0_31 = arith.constant 0 : index
    %c0_32 = arith.constant 0 : index
    %65 = vector.load %arg3[%c0_31, %c0_32] : memref<1x256xf32, #tpu.memory_space<vmem>>, vector<1x256xf32>
    %66 = vector.broadcast %65 : vector<1x256xf32> to vector<128x256xf32>
    %67 = arith.mulf %64, %66 : vector<128x256xf32>
    %c0_33 = arith.constant 0 : index
    %c0_34 = arith.constant 0 : index
    %68 = vector.load %arg4[%c0_33, %c0_34] : memref<1x256xf32, #tpu.memory_space<vmem>>, vector<1x256xf32>
    %69 = vector.broadcast %68 : vector<1x256xf32> to vector<128x256xf32>
    %70 = arith.addf %67, %69 : vector<128x256xf32>
    %cst_35 = arith.constant 0.000000e+00 : f32
    %71 = vector.broadcast %cst_35 : f32 to vector<128x256xf32>
    %72 = arith.maximumf %70, %71 : vector<128x256xf32>
    %c0_36 = arith.constant 0 : index
    %c0_37 = arith.constant 0 : index
    %73 = vector.load %arg5[%c0_36, %c0_37] : memref<128x256xf32, #tpu.memory_space<vmem>>, vector<128x256xf32>
    tpu.vector_store %arg5[%c0_36, %c0_37], %72 {strides = array<i32>} : memref<128x256xf32, #tpu.memory_space<vmem>>, vector<128x256xf32>,
    return
  }
  func.func @transform_0(%arg0: i32) -> (i32, i32, i32, i32) {
    %c0_i32 = arith.constant 0 : i32
    %c0_i32_0 = arith.constant 0 : i32
    %c0_i32_1 = arith.constant 0 : i32
    %c0_i32_2 = arith.constant 0 : i32
    return %arg0, %c0_i32, %c0_i32_0, %c0_i32_1 : i32, i32, i32, i32
  }
  func.func @transform_1(%arg0: i32) -> (i32, i32, i32) {
    %c0_i32 = arith.constant 0 : i32
    %c0_i32_0 = arith.constant 0 : i32
    %c0_i32_1 = arith.constant 0 : i32
    %c0_i32_2 = arith.constant 0 : i32
    return %c0_i32, %c0_i32_0, %c0_i32_1 : i32, i32, i32
  }
  func.func @transform_2(%arg0: i32) -> (i32, i32) {
    %c0_i32 = arith.constant 0 : i32
    %c0_i32_0 = arith.constant 0 : i32
    %c0_i32_1 = arith.constant 0 : i32
    return %c0_i32, %c0_i32_0 : i32, i32
  }
  func.func @transform_3(%arg0: i32) -> (i32, i32) {
    %c0_i32 = arith.constant 0 : i32
    %c0_i32_0 = arith.constant 0 : i32
    %c0_i32_1 = arith.constant 0 : i32
    return %c0_i32, %c0_i32_0 : i32, i32
  }
  func.func @transform_4(%arg0: i32) -> (i32, i32) {
    %c0_i32 = arith.constant 0 : i32
    %c0_i32_0 = arith.constant 0 : i32
    return %arg0, %c0_i32 : i32, i32
  }
}

</mosaic_0001>

<llo_original>
// kernel: conv_block_forward.3
$region0: #{conv_block_forward.3}
  #allocation0 [shape = 'u32[]', space=smem, size = 0x4, offset = 0x4, fixed_abs, tag = 'smem constant byte address 0x4 - core index']
  #allocation1 [shape = 'u32[144,128]{1,0:T(1,128)}', space=vmem, size = 0x12000, scoped, tag = 'internal scratch']
  %s0 = inlined_call_operand.vmem [shape: f32[2,10,10,22], index: 0, kind: input, shape index: {}]
  %s1 = inlined_call_operand.vmem [shape: bf16[9,22,256], index: 1, kind: input, shape index: {}]
  %s2 = inlined_call_operand.vmem [shape: f32[1,256], index: 2, kind: input, shape index: {}]
  %s3 = inlined_call_operand.vmem [shape: f32[1,256], index: 3, kind: input, shape index: {}]
  %s4 = inlined_call_operand.hbm [shape: f32[128,256], index: 4, kind: output, shape index: {}]
  %s5 = sld [smem:[#allocation0]]
  $region26: #{conv_block_forward.3} parent=0
    _
  %s7 = ssub.s32 1, %s5
  %s8 = scalar_select 0, %s7, %s5
  $region1: #{conv_block_forward.3} parent=0
    #allocation2 [shape = 'u8[131072]{0}', space=vmem, size = 0x20000, scoped, tag = 'output window, operand 0, single buffered']
    #allocation3 [shape = 's32[1]{0}', space=sflag, size = 0x4, scoped, tag = 'scoped memory for conv_block_forward.3']
    %9 = vsyncpa [#allocation3], 0
    // Predicated region
    $region2: #{conv_block_forward.3} parent=1 // pred_check
      _
    $region3: #{conv_block_forward.3} parent=1 // pred_check_branch
      %11 = sbr.rel (0) target = $region5
    $region4: #{conv_block_forward.3} parent=1 // pred_region
      _
    $region5: #{conv_block_forward.3} parent=1 // pred_fallthru
      _
    // Predicated region
    $region6: #{conv_block_forward.3} parent=1 // pred_check
      _
    $region7: #{conv_block_forward.3} parent=1 // pred_check_branch
      %13 = sbr.rel (0) target = $region9
    $region8: #{conv_block_forward.3} parent=1 // pred_region
      _
    $region9: #{conv_block_forward.3} parent=1 // pred_fallthru
      _
    // Predicated region
    $region10: #{conv_block_forward.3} parent=1 // pred_check
      _
    $region11: #{conv_block_forward.3} parent=1 // pred_check_branch
      %15 = sbr.rel (0) target = $region13
    $region12: #{conv_block_forward.3} parent=1 // pred_region
      _
    $region13: #{conv_block_forward.3} parent=1 // pred_fallthru
      _
    // Predicated region
    $region14: #{conv_block_forward.3} parent=1 // pred_check
      _
    $region15: #{conv_block_forward.3} parent=1 // pred_check_branch
      %17 = sbr.rel (0) target = $region17
    $region16: #{conv_block_forward.3} parent=1 // pred_region
      _
    $region17: #{conv_block_forward.3} parent=1 // pred_fallthru
      _
    %v19 = vld [vmem:[%s0] sm:$0xff]
    %v20 = vld [vmem:[%s0 + $0x8] sm:$0x3]
    %v21 = vld [vmem:[%s0 + $0x10] sm:$0xff]
    %v22 = vld [vmem:[%s0 + $0x18] sm:$0x3]
    %v23 = vld [vmem:[%s0 + $0x20] sm:$0xff]
    %v24 = vld [vmem:[%s0 + $0x28] sm:$0x3]
    %v25 = vld [vmem:[%s0 + $0x30] sm:$0xff]
    %v26 = vld [vmem:[%s0 + $0x38] sm:$0x3]
    %v27 = vld [vmem:[%s0 + $0x40] sm:$0xff]
    %v28 = vld [vmem:[%s0 + $0x48] sm:$0x3]
    %v29 = vld [vmem:[%s0 + $0x50] sm:$0xff]
    %v30 = vld [vmem:[%s0 + $0x58] sm:$0x3]
    %v31 = vld [vmem:[%s0 + $0x60] sm:$0xff]
    %v32 = vld [vmem:[%s0 + $0x68] sm:$0x3]
    %v33 = vld [vmem:[%s0 + $0x70] sm:$0xff]
    %v34 = vld [vmem:[%s0 + $0x78] sm:$0x3]
    %v35 = vld [vmem:[%s0 + $0x80] sm:$0xff]
    %v36 = vld [vmem:[%s0 + $0x88] sm:$0x3]
    %v37 = vld [vmem:[%s0 + $0x90] sm:$0xff]
    %v38 = vld [vmem:[%s0 + $0x98] sm:$0x3]
    %v39 = vld [vmem:[%s0 + $0xa0] sm:$0xff]
    %v40 = vld [vmem:[%s0 + $0xa8] sm:$0x3]
    %v41 = vld [vmem:[%s0 + $0xb0] sm:$0xff]
    %v42 = vld [vmem:[%s0 + $0xb8] sm:$0x3]
    %v43 = vld [vmem:[%s0 + $0xc0] sm:$0xff]
    %v44 = vld [vmem:[%s0 + $0xc8] sm:$0x3]
    %v45 = vld [vmem:[%s0 + $0xd0] sm:$0xff]
    %v46 = vld [vmem:[%s0 + $0xd8] sm:$0x3]
    %v47 = vld [vmem:[%s0 + $0xe0] sm:$0xff]
    %v48 = vld [vmem:[%s0 + $0xe8] sm:$0x3]
    %v49 = vld [vmem:[%s0 + $0xf0] sm:$0xff]
    %v50 = vld [vmem:[%s0 + $0xf8] sm:$0x3]
    %v51 = vld [vmem:[%s0 + $0x100] sm:$0xff]
    %v52 = vld [vmem:[%s0 + $0x108] sm:$0x3]
    %v53 = vld [vmem:[%s0 + $0x110] sm:$0xff]
    %v54 = vld [vmem:[%s0 + $0x118] sm:$0x3]
    %v55 = vld [vmem:[%s0 + $0x120] sm:$0xff]
    %v56 = vld [vmem:[%s0 + $0x128] sm:$0x3]
    %v57 = vld [vmem:[%s0 + $0x130] sm:$0xff]
    %v58 = vld [vmem:[%s0 + $0x138] sm:$0x3]
    %v59 = vpack.c.bf16 %v21, %v19
    %v60 = vpack.c.bf16 %v25, %v23
    %v61 = vpack.c.bf16 %v29, %v27
    %v62 = vpack.c.bf16 %v33, %v31
    %v63 = vpack.c.bf16 %v41, %v39
    %v64 = vpack.c.bf16 %v45, %v43
    %v65 = vpack.c.bf16 %v49, %v47
    %v66 = vpack.c.bf16 %v53, %v51
    %v67 = vld [vmem:[%s1] sm:$0xff]
    %v68 = vld [vmem:[%s1 + $0x8] sm:$0xff]
    %v69 = vld [vmem:[%s1 + $0x10] sm:$0x77]
    %vm102 = vcmask 1046528
    %v103 = vrot.slane %v19, 1
    %v104 = vrot.slane %v20, 1
    %v105 = vsel %vm102, %v103, %v104
    %v106 = vrot.slane %v21, 1
    %v107 = vrot.slane %v22, 1
    %v108 = vsel %vm102, %v106, %v107
    %v109 = vrot.slane %v23, 1
    %v110 = vrot.slane %v24, 1
    %v111 = vsel %vm102, %v109, %v110
    %v112 = vrot.slane %v25, 1
    %v113 = vrot.slane %v26, 1
    %v114 = vsel %vm102, %v112, %v113
    %v115 = vrot.slane %v27, 1
    %v116 = vrot.slane %v28, 1
    %v117 = vsel %vm102, %v115, %v116
    %v118 = vrot.slane %v29, 1
    %v119 = vrot.slane %v30, 1
    %v120 = vsel %vm102, %v118, %v119
    %v121 = vrot.slane %v31, 1
    %v122 = vrot.slane %v32, 1
    %v123 = vsel %vm102, %v121, %v122
    %v124 = vrot.slane %v33, 1
    %v125 = vrot.slane %v34, 1
    %v126 = vsel %vm102, %v124, %v125
    %v127 = vrot.slane %v39, 1
    %v128 = vrot.slane %v40, 1
    %v129 = vsel %vm102, %v127, %v128
    %v130 = vrot.slane %v41, 1
    %v131 = vrot.slane %v42, 1
    %v132 = vsel %vm102, %v130, %v131
    %v133 = vrot.slane %v43, 1
    %v134 = vrot.slane %v44, 1
    %v135 = vsel %vm102, %v133, %v134
    %v136 = vrot.slane %v45, 1
    %v137 = vrot.slane %v46, 1
    %v138 = vsel %vm102, %v136, %v137
    %v139 = vrot.slane %v47, 1
    %v140 = vrot.slane %v48, 1
    %v141 = vsel %vm102, %v139, %v140
    %v142 = vrot.slane %v49, 1
    %v143 = vrot.slane %v50, 1
    %v144 = vsel %vm102, %v142, %v143
    %v145 = vrot.slane %v51, 1
    %v146 = vrot.slane %v52, 1
    %v147 = vsel %vm102, %v145, %v146
    %v148 = vrot.slane %v53, 1
    %v149 = vrot.slane %v54, 1
    %v150 = vsel %vm102, %v148, %v149
    %v167 = vpack.c.bf16 %v108, %v105
    %v168 = vpack.c.bf16 %v114, %v111
    %v169 = vpack.c.bf16 %v120, %v117
    %v170 = vpack.c.bf16 %v126, %v123
    %v171 = vpack.c.bf16 %v132, %v129
    %v172 = vpack.c.bf16 %v138, %v135
    %v173 = vpack.c.bf16 %v144, %v141
    %v174 = vpack.c.bf16 %v150, %v147
    %s175 = scalar_lea.vmem %s1, 24
    %v176 = vld [vmem:[%s175] sm:$0xff]
    %v177 = vld [vmem:[%s175 + $0x8] sm:$0xff]
    %v178 = vld [vmem:[%s175 + $0x10] sm:$0x77]
    %v182 = vunpack.c.l.b16 %v176
    %v183 = vunpack.c.h.b16 %v176
    %v184 = vunpack.c.l.b16 %v177
    %v185 = vunpack.c.h.b16 %v177
    %v186 = vunpack.c.l.b16 %v178
    %v187 = vunpack.c.h.b16 %v178
    %v188 = vpack.c.b16 %v184, %v182
    %v189 = vpack.c.b16 %v185, %v183
    %v190 = vpack.c.b16 %v186, %v186
    %v191 = vpack.c.b16 %v187, %v187
    %vm194 = vcmask 179200
    %v196 = vsel %vm194, %v167, 0
    %v199 = vsel %vm194, %v168, 0
    %v202 = vsel %vm194, %v169, 0
    %v205 = vsel %vm194, %v170, 0
    %v208 = vsel %vm194, %v171, 0
    %v211 = vsel %vm194, %v172, 0
    %v214 = vsel %vm194, %v173, 0
    %v217 = vsel %vm194, %v174, 0
    %vm219 = vcmask 1042432
    %v221 = vsel %vm219, %v190, 0
    %v224 = vsel %vm219, %v191, 0
    %226 = vmatprep.subr.bf16.mxu0 0
    %227 = vmatpush1.bf16.msra.mxu0 0
    %228 = vmatprep.subr.bf16.mxu0 0
    %229 = vmatpush1.bf16.msra.mxu0 0
    %230 = vmatprep.subr.bf16.mxu0 0
    %231 = vmatpush1.bf16.msra.mxu0 0
    %232 = vmatprep.subr.bf16.mxu0 0
    %233 = vmatpush1.bf16.msra.mxu0 0
    %234 = vmatprep.subr.bf16.mxu0 0
    %235 = vmatpush1.bf16.msra.mxu0 0
    %236 = vmatprep.subr.bf16.mxu0 0
    %237 = vmatpush1.bf16.msra.mxu0 0
    %238 = vmatprep.subr.bf16.mxu0 %v224
    %239 = vmatpush1.bf16.msra.mxu0 %v221
    %240 = vmatprep.subr.bf16.mxu0 %v189
    %241 = vmatpush1.bf16.msra.mxu0 %v188
    %242 = vmatprep.subr.bf16.mxu0 0
    %243 = vmatpush2.bf16.msra.mxu0 0
    %244 = vmatprep.subr.bf16.mxu0 0
    %245 = vmatpush2.bf16.msra.mxu0 0
    %246 = vmatprep.subr.bf16.mxu0 0
    %247 = vmatpush2.bf16.msra.mxu0 0
    %248 = vmatprep.subr.bf16.mxu0 0
    %249 = vmatpush2.bf16.msra.mxu0 0
    %250 = vmatprep.subr.bf16.mxu0 0
    %251 = vmatpush2.bf16.msra.mxu0 0
    %252 = vmatprep.subr.bf16.mxu0 0
    %253 = vmatpush2.bf16.msra.mxu0 0
    %254 = vmatprep.subr.bf16.mxu0 0
    %255 = vmatpush2.bf16.msra.mxu0 0
    %256 = vmatprep.subr.bf16.mxu0 0
    %257 = vmatpush2.bf16.msra.mxu0 0
    %258 = vmatprep.mubr.bf16.mxu0 0
    %259 = vmatmul.mubr.bf16.gmra.mxu0 %v196
    %v260 = vpop.f32.mrf.mxu0
    %v261 = vadd.f32 0.0, %v260
    %v262 = vpop.f32.mrf.mxu0
    %v263 = vadd.f32 0.0, %v262
    %v264 = vpop.f32.mrf.mxu0
    %v265 = vadd.f32 0.0, %v264
    %v266 = vpop.f32.mrf.mxu0
    %v267 = vadd.f32 0.0, %v266
    %268 = vmatprep.mubr.bf16.mxu0 0
    %269 = vmatmul.mubr.bf16.gmra.mxu0 %v199
    %v270 = vpop.f32.mrf.mxu0
    %v271 = vadd.f32 0.0, %v270
    %v272 = vpop.f32.mrf.mxu0
    %v273 = vadd.f32 0.0, %v272
    %v274 = vpop.f32.mrf.mxu0
    %v275 = vadd.f32 0.0, %v274
    %v276 = vpop.f32.mrf.mxu0
    %v277 = vadd.f32 0.0, %v276
    %278 = vmatprep.mubr.bf16.mxu0 0
    %279 = vmatmul.mubr.bf16.gmra.mxu0 %v202
    %v280 = vpop.f32.mrf.mxu0
    %v281 = vadd.f32 0.0, %v280
    %v282 = vpop.f32.mrf.mxu0
    %v283 = vadd.f32 0.0, %v282
    %v284 = vpop.f32.mrf.mxu0
    %v285 = vadd.f32 0.0, %v284
    %v286 = vpop.f32.mrf.mxu0
    %v287 = vadd.f32 0.0, %v286
    %288 = vmatprep.mubr.bf16.mxu0 0
    %289 = vmatmul.mubr.bf16.gmra.mxu0 %v205
    %v290 = vpop.f32.mrf.mxu0
    %v291 = vadd.f32 0.0, %v290
    %v292 = vpop.f32.mrf.mxu0
    %v293 = vadd.f32 0.0, %v292
    %v294 = vpop.f32.mrf.mxu0
    %v295 = vadd.f32 0.0, %v294
    %v296 = vpop.f32.mrf.mxu0
    %v297 = vadd.f32 0.0, %v296
    %298 = vmatprep.mubr.bf16.mxu0 0
    %299 = vmatmul.mubr.bf16.gmra.mxu0 %v208
    %v300 = vpop.f32.mrf.mxu0
    %v301 = vadd.f32 0.0, %v300
    %v302 = vpop.f32.mrf.mxu0
    %v303 = vadd.f32 0.0, %v302
    %v304 = vpop.f32.mrf.mxu0
    %v305 = vadd.f32 0.0, %v304
    %v306 = vpop.f32.mrf.mxu0
    %v307 = vadd.f32 0.0, %v306
    %308 = vmatprep.mubr.bf16.mxu0 0
    %309 = vmatmul.mubr.bf16.gmra.mxu0 %v211
    %v310 = vpop.f32.mrf.mxu0
    %v311 = vadd.f32 0.0, %v310
    %v312 = vpop.f32.mrf.mxu0
    %v313 = vadd.f32 0.0, %v312
    %v314 = vpop.f32.mrf.mxu0
    %v315 = vadd.f32 0.0, %v314
    %v316 = vpop.f32.mrf.mxu0
    %v317 = vadd.f32 0.0, %v316
    %318 = vmatprep.mubr.bf16.mxu0 0
    %319 = vmatmul.mubr.bf16.gmra.mxu0 %v214
    %v320 = vpop.f32.mrf.mxu0
    %v321 = vadd.f32 0.0, %v320
    %v322 = vpop.f32.mrf.mxu0
    %v323 = vadd.f32 0.0, %v322
    %v324 = vpop.f32.mrf.mxu0
    %v325 = vadd.f32 0.0, %v324
    %v326 = vpop.f32.mrf.mxu0
    %v327 = vadd.f32 0.0, %v326
    %328 = vmatprep.mubr.bf16.mxu0 0
    %329 = vmatmul.mubr.bf16.gmra.mxu0 %v217
    %v330 = vpop.f32.mrf.mxu0
    %v331 = vadd.f32 0.0, %v330
    %v332 = vpop.f32.mrf.mxu0
    %v333 = vadd.f32 0.0, %v332
    %v334 = vpop.f32.mrf.mxu0
    %v335 = vadd.f32 0.0, %v334
    %v336 = vpop.f32.mrf.mxu0
    %v337 = vadd.f32 0.0, %v336
    %338 = vdwg.mxu0
    %v342 = vunpack.c.l.b16 %v67
    %v343 = vunpack.c.h.b16 %v67
    %v344 = vunpack.c.l.b16 %v68
    %v345 = vunpack.c.h.b16 %v68
    %v346 = vunpack.c.l.b16 %v69
    %v347 = vunpack.c.h.b16 %v69
    %v348 = vpack.c.b16 %v344, %v342
    %v349 = vpack.c.b16 %v345, %v343
    %v350 = vpack.c.b16 %v346, %v346
    %v351 = vpack.c.b16 %v347, %v347
    %v355 = vsel %vm194, %v59, 0
    %v358 = vsel %vm194, %v60, 0
    %v361 = vsel %vm194, %v61, 0
    %v364 = vsel %vm194, %v62, 0
    %v367 = vsel %vm194, %v63, 0
    %v370 = vsel %vm194, %v64, 0
    %v373 = vsel %vm194, %v65, 0
    %v376 = vsel %vm194, %v66, 0
    %v379 = vsel %vm219, %v350, 0
    %v382 = vsel %vm219, %v351, 0
    %384 = vmatprep.subr.bf16.mxu0 0
    %385 = vmatpush1.bf16.msra.mxu0 0
    %386 = vmatprep.subr.bf16.mxu0 0
    %387 = vmatpush1.bf16.msra.mxu0 0
    %388 = vmatprep.subr.bf16.mxu0 0
    %389 = vmatpush1.bf16.msra.mxu0 0
    %390 = vmatprep.subr.bf16.mxu0 0
    %391 = vmatpush1.bf16.msra.mxu0 0
    %392 = vmatprep.subr.bf16.mxu0 0
    %393 = vmatpush1.bf16.msra.mxu0 0
    %394 = vmatprep.subr.bf16.mxu0 0
    %395 = vmatpush1.bf16.msra.mxu0 0
    %396 = vmatprep.subr.bf16.mxu0 %v382
    %397 = vmatpush1.bf16.msra.mxu0 %v379
    %398 = vmatprep.subr.bf16.mxu0 %v349
    %399 = vmatpush1.bf16.msra.mxu0 %v348
    %400 = vmatprep.subr.bf16.mxu0 0
    %401 = vmatpush2.bf16.msra.mxu0 0
    %402 = vmatprep.subr.bf16.mxu0 0
    %403 = vmatpush2.bf16.msra.mxu0 0
    %404 = vmatprep.subr.bf16.mxu0 0
    %405 = vmatpush2.bf16.msra.mxu0 0
    %406 = vmatprep.subr.bf16.mxu0 0
    %407 = vmatpush2.bf16.msra.mxu0 0
    %408 = vmatprep.subr.bf16.mxu0 0
    %409 = vmatpush2.bf16.msra.mxu0 0
    %410 = vmatprep.subr.bf16.mxu0 0
    %411 = vmatpush2.bf16.msra.mxu0 0
    %412 = vmatprep.subr.bf16.mxu0 0
    %413 = vmatpush2.bf16.msra.mxu0 0
    %414 = vmatprep.subr.bf16.mxu0 0
    %415 = vmatpush2.bf16.msra.mxu0 0
    %416 = vmatprep.mubr.bf16.mxu0 0
    %417 = vmatmul.mubr.bf16.gmra.mxu0 %v355
    %v418 = vpop.f32.mrf.mxu0
    %v419 = vadd.f32 %v261, %v418
    %v420 = vpop.f32.mrf.mxu0
    %v421 = vadd.f32 %v263, %v420
    %v422 = vpop.f32.mrf.mxu0
    %v423 = vadd.f32 %v265, %v422
    %v424 = vpop.f32.mrf.mxu0
    %v425 = vadd.f32 %v267, %v424
    %426 = vmatprep.mubr.bf16.mxu0 0
    %427 = vmatmul.mubr.bf16.gmra.mxu0 %v358
    %v428 = vpop.f32.mrf.mxu0
    %v429 = vadd.f32 %v271, %v428
    %v430 = vpop.f32.mrf.mxu0
    %v431 = vadd.f32 %v273, %v430
    %v432 = vpop.f32.mrf.mxu0
    %v433 = vadd.f32 %v275, %v432
    %v434 = vpop.f32.mrf.mxu0
    %v435 = vadd.f32 %v277, %v434
    %436 = vmatprep.mubr.bf16.mxu0 0
    %437 = vmatmul.mubr.bf16.gmra.mxu0 %v361
    %v438 = vpop.f32.mrf.mxu0
    %v439 = vadd.f32 %v281, %v438
    %v440 = vpop.f32.mrf.mxu0
    %v441 = vadd.f32 %v283, %v440
    %v442 = vpop.f32.mrf.mxu0
    %v443 = vadd.f32 %v285, %v442
    %v444 = vpop.f32.mrf.mxu0
    %v445 = vadd.f32 %v287, %v444
    %446 = vmatprep.mubr.bf16.mxu0 0
    %447 = vmatmul.mubr.bf16.gmra.mxu0 %v364
    %v448 = vpop.f32.mrf.mxu0
    %v449 = vadd.f32 %v291, %v448
    %v450 = vpop.f32.mrf.mxu0
    %v451 = vadd.f32 %v293, %v450
    %v452 = vpop.f32.mrf.mxu0
    %v453 = vadd.f32 %v295, %v452
    %v454 = vpop.f32.mrf.mxu0
    %v455 = vadd.f32 %v297, %v454
    %456 = vmatprep.mubr.bf16.mxu0 0
    %457 = vmatmul.mubr.bf16.gmra.mxu0 %v367
    %v458 = vpop.f32.mrf.mxu0
    %v459 = vadd.f32 %v301, %v458
    %v460 = vpop.f32.mrf.mxu0
    %v461 = vadd.f32 %v303, %v460
    %v462 = vpop.f32.mrf.mxu0
    %v463 = vadd.f32 %v305, %v462
    %v464 = vpop.f32.mrf.mxu0
    %v465 = vadd.f32 %v307, %v464
    %466 = vmatprep.mubr.bf16.mxu0 0
    %467 = vmatmul.mubr.bf16.gmra.mxu0 %v370
    %v468 = vpop.f32.mrf.mxu0
    %v469 = vadd.f32 %v311, %v468
    %v470 = vpop.f32.mrf.mxu0
    %v471 = vadd.f32 %v313, %v470
    %v472 = vpop.f32.mrf.mxu0
    %v473 = vadd.f32 %v315, %v472
    %v474 = vpop.f32.mrf.mxu0
    %v475 = vadd.f32 %v317, %v474
    %476 = vmatprep.mubr.bf16.mxu0 0
    %477 = vmatmul.mubr.bf16.gmra.mxu0 %v373
    %v478 = vpop.f32.mrf.mxu0
    %v479 = vadd.f32 %v321, %v478
    %v480 = vpop.f32.mrf.mxu0
    %v481 = vadd.f32 %v323, %v480
    %v482 = vpop.f32.mrf.mxu0
    %v483 = vadd.f32 %v325, %v482
    %v484 = vpop.f32.mrf.mxu0
    %v485 = vadd.f32 %v327, %v484
    %486 = vmatprep.mubr.bf16.mxu0 0
    %487 = vmatmul.mubr.bf16.gmra.mxu0 %v376
    %v488 = vpop.f32.mrf.mxu0
    %v489 = vadd.f32 %v331, %v488
    %v490 = vpop.f32.mrf.mxu0
    %v491 = vadd.f32 %v333, %v490
    %v492 = vpop.f32.mrf.mxu0
    %v493 = vadd.f32 %v335, %v492
    %v494 = vpop.f32.mrf.mxu0
    %v495 = vadd.f32 %v337, %v494
    %496 = vdwg.mxu0
    %vm497 = vcmask 1045504
    %v498 = vrot.slane %v19, 2
    %v499 = vrot.slane %v20, 2
    %v500 = vsel %vm497, %v498, %v499
    %v501 = vrot.slane %v21, 2
    %v502 = vrot.slane %v22, 2
    %v503 = vsel %vm497, %v501, %v502
    %v504 = vrot.slane %v23, 2
    %v505 = vrot.slane %v24, 2
    %v506 = vsel %vm497, %v504, %v505
    %v507 = vrot.slane %v25, 2
    %v508 = vrot.slane %v26, 2
    %v509 = vsel %vm497, %v507, %v508
    %v510 = vrot.slane %v27, 2
    %v511 = vrot.slane %v28, 2
    %v512 = vsel %vm497, %v510, %v511
    %v513 = vrot.slane %v29, 2
    %v514 = vrot.slane %v30, 2
    %v515 = vsel %vm497, %v513, %v514
    %v516 = vrot.slane %v31, 2
    %v517 = vrot.slane %v32, 2
    %v518 = vsel %vm497, %v516, %v517
    %v519 = vrot.slane %v33, 2
    %v520 = vrot.slane %v34, 2
    %v521 = vsel %vm497, %v519, %v520
    %v522 = vrot.slane %v39, 2
    %v523 = vrot.slane %v40, 2
    %v524 = vsel %vm497, %v522, %v523
    %v525 = vrot.slane %v41, 2
    %v526 = vrot.slane %v42, 2
    %v527 = vsel %vm497, %v525, %v526
    %v528 = vrot.slane %v43, 2
    %v529 = vrot.slane %v44, 2
    %v530 = vsel %vm497, %v528, %v529
    %v531 = vrot.slane %v45, 2
    %v532 = vrot.slane %v46, 2
    %v533 = vsel %vm497, %v531, %v532
    %v534 = vrot.slane %v47, 2
    %v535 = vrot.slane %v48, 2
    %v536 = vsel %vm497, %v534, %v535
    %v537 = vrot.slane %v49, 2
    %v538 = vrot.slane %v50, 2
    %v539 = vsel %vm497, %v537, %v538
    %v540 = vrot.slane %v51, 2
    %v541 = vrot.slane %v52, 2
    %v542 = vsel %vm497, %v540, %v541
    %v543 = vrot.slane %v53, 2
    %v544 = vrot.slane %v54, 2
    %v545 = vsel %vm497, %v543, %v544
    %v562 = vpack.c.bf16 %v503, %v500
    %v563 = vpack.c.bf16 %v509, %v506
    %v564 = vpack.c.bf16 %v515, %v512
    %v565 = vpack.c.bf16 %v521, %v518
    %v566 = vpack.c.bf16 %v527, %v524
    %v567 = vpack.c.bf16 %v533, %v530
    %v568 = vpack.c.bf16 %v539, %v536
    %v569 = vpack.c.bf16 %v545, %v542
    %s570 = scalar_lea.vmem %s1, 48
    %v571 = vld [vmem:[%s570] sm:$0xff]
    %v572 = vld [vmem:[%s570 + $0x8] sm:$0xff]
    %v573 = vld [vmem:[%s570 + $0x10] sm:$0x77]
    %v577 = vunpack.c.l.b16 %v571
    %v578 = vunpack.c.h.b16 %v571
    %v579 = vunpack.c.l.b16 %v572
    %v580 = vunpack.c.h.b16 %v572
    %v581 = vunpack.c.l.b16 %v573
    %v582 = vunpack.c.h.b16 %v573
    %v583 = vpack.c.b16 %v579, %v577
    %v584 = vpack.c.b16 %v580, %v578
    %v585 = vpack.c.b16 %v581, %v581
    %v586 = vpack.c.b16 %v582, %v582
    %v590 = vsel %vm194, %v562, 0
    %v593 = vsel %vm194, %v563, 0
    %v596 = vsel %vm194, %v564, 0
    %v599 = vsel %vm194, %v565, 0
    %v602 = vsel %vm194, %v566, 0
    %v605 = vsel %vm194, %v567, 0
    %v608 = vsel %vm194, %v568, 0
    %v611 = vsel %vm194, %v569, 0
    %v614 = vsel %vm219, %v585, 0
    %v617 = vsel %vm219, %v586, 0
    %619 = vmatprep.subr.bf16.mxu0 0
    %620 = vmatpush1.bf16.msra.mxu0 0
    %621 = vmatprep.subr.bf16.mxu0 0
    %622 = vmatpush1.bf16.msra.mxu0 0
    %623 = vmatprep.subr.bf16.mxu0 0
    %624 = vmatpush1.bf16.msra.mxu0 0
    %625 = vmatprep.subr.bf16.mxu0 0
    %626 = vmatpush1.bf16.msra.mxu0 0
    %627 = vmatprep.subr.bf16.mxu0 0
    %628 = vmatpush1.bf16.msra.mxu0 0
    %629 = vmatprep.subr.bf16.mxu0 0
    %630 = vmatpush1.bf16.msra.mxu0 0
    %631 = vmatprep.subr.bf16.mxu0 %v617
    %632 = vmatpush1.bf16.msra.mxu0 %v614
    %633 = vmatprep.subr.bf16.mxu0 %v584
    %634 = vmatpush1.bf16.msra.mxu0 %v583
    %635 = vmatprep.subr.bf16.mxu0 0
    %636 = vmatpush2.bf16.msra.mxu0 0
    %637 = vmatprep.subr.bf16.mxu0 0
    %638 = vmatpush2.bf16.msra.mxu0 0
    %639 = vmatprep.subr.bf16.mxu0 0
    %640 = vmatpush2.bf16.msra.mxu0 0
    %641 = vmatprep.subr.bf16.mxu0 0
    %642 = vmatpush2.bf16.msra.mxu0 0
    %643 = vmatprep.subr.bf16.mxu0 0
    %644 = vmatpush2.bf16.msra.mxu0 0
    %645 = vmatprep.subr.bf16.mxu0 0
    %646 = vmatpush2.bf16.msra.mxu0 0
    %647 = vmatprep.subr.bf16.mxu0 0
    %648 = vmatpush2.bf16.msra.mxu0 0
    %649 = vmatprep.subr.bf16.mxu0 0
    %650 = vmatpush2.bf16.msra.mxu0 0
    %651 = vmatprep.mubr.bf16.mxu0 0
    %652 = vmatmul.mubr.bf16.gmra.mxu0 %v590
    %v653 = vpop.f32.mrf.mxu0
    %v654 = vadd.f32 0.0, %v653
    %v655 = vpop.f32.mrf.mxu0
    %v656 = vadd.f32 0.0, %v655
    %v657 = vpop.f32.mrf.mxu0
    %v658 = vadd.f32 0.0, %v657
    %v659 = vpop.f32.mrf.mxu0
    %v660 = vadd.f32 0.0, %v659
    %661 = vmatprep.mubr.bf16.mxu0 0
    %662 = vmatmul.mubr.bf16.gmra.mxu0 %v593
    %v663 = vpop.f32.mrf.mxu0
    %v664 = vadd.f32 0.0, %v663
    %v665 = vpop.f32.mrf.mxu0
    %v666 = vadd.f32 0.0, %v665
    %v667 = vpop.f32.mrf.mxu0
    %v668 = vadd.f32 0.0, %v667
    %v669 = vpop.f32.mrf.mxu0
    %v670 = vadd.f32 0.0, %v669
    %671 = vmatprep.mubr.bf16.mxu0 0
    %672 = vmatmul.mubr.bf16.gmra.mxu0 %v596
    %v673 = vpop.f32.mrf.mxu0
    %v674 = vadd.f32 0.0, %v673
    %v675 = vpop.f32.mrf.mxu0
    %v676 = vadd.f32 0.0, %v675
    %v677 = vpop.f32.mrf.mxu0
    %v678 = vadd.f32 0.0, %v677
    %v679 = vpop.f32.mrf.mxu0
    %v680 = vadd.f32 0.0, %v679
    %681 = vmatprep.mubr.bf16.mxu0 0
    %682 = vmatmul.mubr.bf16.gmra.mxu0 %v599
    %v683 = vpop.f32.mrf.mxu0
    %v684 = vadd.f32 0.0, %v683
    %v685 = vpop.f32.mrf.mxu0
    %v686 = vadd.f32 0.0, %v685
    %v687 = vpop.f32.mrf.mxu0
    %v688 = vadd.f32 0.0, %v687
    %v689 = vpop.f32.mrf.mxu0
    %v690 = vadd.f32 0.0, %v689
    %691 = vmatprep.mubr.bf16.mxu0 0
    %692 = vmatmul.mubr.bf16.gmra.mxu0 %v602
    %v693 = vpop.f32.mrf.mxu0
    %v694 = vadd.f32 0.0, %v693
    %v695 = vpop.f32.mrf.mxu0
    %v696 = vadd.f32 0.0, %v695
    %v697 = vpop.f32.mrf.mxu0
    %v698 = vadd.f32 0.0, %v697
    %v699 = vpop.f32.mrf.mxu0
    %v700 = vadd.f32 0.0, %v699
    %701 = vmatprep.mubr.bf16.mxu0 0
    %702 = vmatmul.mubr.bf16.gmra.mxu0 %v605
    %v703 = vpop.f32.mrf.mxu0
    %v704 = vadd.f32 0.0, %v703
    %v705 = vpop.f32.mrf.mxu0
    %v706 = vadd.f32 0.0, %v705
    %v707 = vpop.f32.mrf.mxu0
    %v708 = vadd.f32 0.0, %v707
    %v709 = vpop.f32.mrf.mxu0
    %v710 = vadd.f32 0.0, %v709
    %711 = vmatprep.mubr.bf16.mxu0 0
    %712 = vmatmul.mubr.bf16.gmra.mxu0 %v608
    %v713 = vpop.f32.mrf.mxu0
    %v714 = vadd.f32 0.0, %v713
    %v715 = vpop.f32.mrf.mxu0
    %v716 = vadd.f32 0.0, %v715
    %v717 = vpop.f32.mrf.mxu0
    %v718 = vadd.f32 0.0, %v717
    %v719 = vpop.f32.mrf.mxu0
    %v720 = vadd.f32 0.0, %v719
    %721 = vmatprep.mubr.bf16.mxu0 0
    %722 = vmatmul.mubr.bf16.gmra.mxu0 %v611
    %v723 = vpop.f32.mrf.mxu0
    %v724 = vadd.f32 0.0, %v723
    %v725 = vpop.f32.mrf.mxu0
    %v726 = vadd.f32 0.0, %v725
    %v727 = vpop.f32.mrf.mxu0
    %v728 = vadd.f32 0.0, %v727
    %v729 = vpop.f32.mrf.mxu0
    %v730 = vadd.f32 0.0, %v729
    %731 = vdwg.mxu0
    %v732 = vadd.f32 %v419, %v654
    %v733 = vadd.f32 %v421, %v656
    %v734 = vadd.f32 %v423, %v658
    %v735 = vadd.f32 %v425, %v660
    %v736 = vadd.f32 %v429, %v664
    %v737 = vadd.f32 %v431, %v666
    %v738 = vadd.f32 %v433, %v668
    %v739 = vadd.f32 %v435, %v670
    %v740 = vadd.f32 %v439, %v674
    %v741 = vadd.f32 %v441, %v676
    %v742 = vadd.f32 %v443, %v678
    %v743 = vadd.f32 %v445, %v680
    %v744 = vadd.f32 %v449, %v684
    %v745 = vadd.f32 %v451, %v686
    %v746 = vadd.f32 %v453, %v688
    %v747 = vadd.f32 %v455, %v690
    %v748 = vadd.f32 %v459, %v694
    %v749 = vadd.f32 %v461, %v696
    %v750 = vadd.f32 %v463, %v698
    %v751 = vadd.f32 %v465, %v700
    %v752 = vadd.f32 %v469, %v704
    %v753 = vadd.f32 %v471, %v706
    %v754 = vadd.f32 %v473, %v708
    %v755 = vadd.f32 %v475, %v710
    %v756 = vadd.f32 %v479, %v714
    %v757 = vadd.f32 %v481, %v716
    %v758 = vadd.f32 %v483, %v718
    %v759 = vadd.f32 %v485, %v720
    %v760 = vadd.f32 %v489, %v724
    %v761 = vadd.f32 %v491, %v726
    %v762 = vadd.f32 %v493, %v728
    %v763 = vadd.f32 %v495, %v730
    %v764 = vpack.c.bf16 %v23, %v21
    %v765 = vpack.c.bf16 %v27, %v25
    %v766 = vpack.c.bf16 %v31, %v29
    %v767 = vpack.c.bf16 %v35, %v33
    %v768 = vpack.c.bf16 %v43, %v41
    %v769 = vpack.c.bf16 %v47, %v45
    %v770 = vpack.c.bf16 %v51, %v49
    %v771 = vpack.c.bf16 %v55, %v53
    %s772 = scalar_lea.vmem %s1, 72
    %v773 = vld [vmem:[%s772] sm:$0xff]
    %v774 = vld [vmem:[%s772 + $0x8] sm:$0xff]
    %v775 = vld [vmem:[%s772 + $0x10] sm:$0x77]
    %v779 = vunpack.c.l.b16 %v773
    %v780 = vunpack.c.h.b16 %v773
    %v781 = vunpack.c.l.b16 %v774
    %v782 = vunpack.c.h.b16 %v774
    %v783 = vunpack.c.l.b16 %v775
    %v784 = vunpack.c.h.b16 %v775
    %v785 = vpack.c.b16 %v781, %v779
    %v786 = vpack.c.b16 %v782, %v780
    %v787 = vpack.c.b16 %v783, %v783
    %v788 = vpack.c.b16 %v784, %v784
    %v792 = vsel %vm194, %v764, 0
    %v795 = vsel %vm194, %v765, 0
    %v798 = vsel %vm194, %v766, 0
    %v801 = vsel %vm194, %v767, 0
    %v804 = vsel %vm194, %v768, 0
    %v807 = vsel %vm194, %v769, 0
    %v810 = vsel %vm194, %v770, 0
    %v813 = vsel %vm194, %v771, 0
    %v816 = vsel %vm219, %v787, 0
    %v819 = vsel %vm219, %v788, 0
    %821 = vmatprep.subr.bf16.mxu0 0
    %822 = vmatpush1.bf16.msra.mxu0 0
    %823 = vmatprep.subr.bf16.mxu0 0
    %824 = vmatpush1.bf16.msra.mxu0 0
    %825 = vmatprep.subr.bf16.mxu0 0
    %826 = vmatpush1.bf16.msra.mxu0 0
    %827 = vmatprep.subr.bf16.mxu0 0
    %828 = vmatpush1.bf16.msra.mxu0 0
    %829 = vmatprep.subr.bf16.mxu0 0
    %830 = vmatpush1.bf16.msra.mxu0 0
    %831 = vmatprep.subr.bf16.mxu0 0
    %832 = vmatpush1.bf16.msra.mxu0 0
    %833 = vmatprep.subr.bf16.mxu0 %v819
    %834 = vmatpush1.bf16.msra.mxu0 %v816
    %835 = vmatprep.subr.bf16.mxu0 %v786
    %836 = vmatpush1.bf16.msra.mxu0 %v785
    %837 = vmatprep.subr.bf16.mxu0 0
    %838 = vmatpush2.bf16.msra.mxu0 0
    %839 = vmatprep.subr.bf16.mxu0 0
    %840 = vmatpush2.bf16.msra.mxu0 0
    %841 = vmatprep.subr.bf16.mxu0 0
    %842 = vmatpush2.bf16.msra.mxu0 0
    %843 = vmatprep.subr.bf16.mxu0 0
    %844 = vmatpush2.bf16.msra.mxu0 0
    %845 = vmatprep.subr.bf16.mxu0 0
    %846 = vmatpush2.bf16.msra.mxu0 0
    %847 = vmatprep.subr.bf16.mxu0 0
    %848 = vmatpush2.bf16.msra.mxu0 0
    %849 = vmatprep.subr.bf16.mxu0 0
    %850 = vmatpush2.bf16.msra.mxu0 0
    %851 = vmatprep.subr.bf16.mxu0 0
    %852 = vmatpush2.bf16.msra.mxu0 0
    %853 = vmatprep.mubr.bf16.mxu0 0
    %854 = vmatmul.mubr.bf16.gmra.mxu0 %v792
    %v855 = vpop.f32.mrf.mxu0
    %v856 = vadd.f32 0.0, %v855
    %v857 = vpop.f32.mrf.mxu0
    %v858 = vadd.f32 0.0, %v857
    %v859 = vpop.f32.mrf.mxu0
    %v860 = vadd.f32 0.0, %v859
    %v861 = vpop.f32.mrf.mxu0
    %v862 = vadd.f32 0.0, %v861
    %863 = vmatprep.mubr.bf16.mxu0 0
    %864 = vmatmul.mubr.bf16.gmra.mxu0 %v795
    %v865 = vpop.f32.mrf.mxu0
    %v866 = vadd.f32 0.0, %v865
    %v867 = vpop.f32.mrf.mxu0
    %v868 = vadd.f32 0.0, %v867
    %v869 = vpop.f32.mrf.mxu0
    %v870 = vadd.f32 0.0, %v869
    %v871 = vpop.f32.mrf.mxu0
    %v872 = vadd.f32 0.0, %v871
    %873 = vmatprep.mubr.bf16.mxu0 0
    %874 = vmatmul.mubr.bf16.gmra.mxu0 %v798
    %v875 = vpop.f32.mrf.mxu0
    %v876 = vadd.f32 0.0, %v875
    %v877 = vpop.f32.mrf.mxu0
    %v878 = vadd.f32 0.0, %v877
    %v879 = vpop.f32.mrf.mxu0
    %v880 = vadd.f32 0.0, %v879
    %v881 = vpop.f32.mrf.mxu0
    %v882 = vadd.f32 0.0, %v881
    %883 = vmatprep.mubr.bf16.mxu0 0
    %884 = vmatmul.mubr.bf16.gmra.mxu0 %v801
    %v885 = vpop.f32.mrf.mxu0
    %v886 = vadd.f32 0.0, %v885
    %v887 = vpop.f32.mrf.mxu0
    %v888 = vadd.f32 0.0, %v887
    %v889 = vpop.f32.mrf.mxu0
    %v890 = vadd.f32 0.0, %v889
    %v891 = vpop.f32.mrf.mxu0
    %v892 = vadd.f32 0.0, %v891
    %893 = vmatprep.mubr.bf16.mxu0 0
    %894 = vmatmul.mubr.bf16.gmra.mxu0 %v804
    %v895 = vpop.f32.mrf.mxu0
    %v896 = vadd.f32 0.0, %v895
    %v897 = vpop.f32.mrf.mxu0
    %v898 = vadd.f32 0.0, %v897
    %v899 = vpop.f32.mrf.mxu0
    %v900 = vadd.f32 0.0, %v899
    %v901 = vpop.f32.mrf.mxu0
    %v902 = vadd.f32 0.0, %v901
    %903 = vmatprep.mubr.bf16.mxu0 0
    %904 = vmatmul.mubr.bf16.gmra.mxu0 %v807
    %v905 = vpop.f32.mrf.mxu0
    %v906 = vadd.f32 0.0, %v905
    %v907 = vpop.f32.mrf.mxu0
    %v908 = vadd.f32 0.0, %v907
    %v909 = vpop.f32.mrf.mxu0
    %v910 = vadd.f32 0.0, %v909
    %v911 = vpop.f32.mrf.mxu0
    %v912 = vadd.f32 0.0, %v911
    %913 = vmatprep.mubr.bf16.mxu0 0
    %914 = vmatmul.mubr.bf16.gmra.mxu0 %v810
    %v915 = vpop.f32.mrf.mxu0
    %v916 = vadd.f32 0.0, %v915
    %v917 = vpop.f32.mrf.mxu0
    %v918 = vadd.f32 0.0, %v917
    %v919 = vpop.f32.mrf.mxu0
    %v920 = vadd.f32 0.0, %v919
    %v921 = vpop.f32.mrf.mxu0
    %v922 = vadd.f32 0.0, %v921
    %923 = vmatprep.mubr.bf16.mxu0 0
    %924 = vmatmul.mubr.bf16.gmra.mxu0 %v813
    %v925 = vpop.f32.mrf.mxu0
    %v926 = vadd.f32 0.0, %v925
    %v927 = vpop.f32.mrf.mxu0
    %v928 = vadd.f32 0.0, %v927
    %v929 = vpop.f32.mrf.mxu0
    %v930 = vadd.f32 0.0, %v929
    %v931 = vpop.f32.mrf.mxu0
    %v932 = vadd.f32 0.0, %v931
    %933 = vdwg.mxu0
    %v934 = vadd.f32 %v732, %v856
    %v935 = vadd.f32 %v733, %v858
    %v936 = vadd.f32 %v734, %v860
    %v937 = vadd.f32 %v735, %v862
    %v938 = vadd.f32 %v736, %v866
    %v939 = vadd.f32 %v737, %v868
    %v940 = vadd.f32 %v738, %v870
    %v941 = vadd.f32 %v739, %v872
    %v942 = vadd.f32 %v740, %v876
    %v943 = vadd.f32 %v741, %v878
    %v944 = vadd.f32 %v742, %v880
    %v945 = vadd.f32 %v743, %v882
    %v946 = vadd.f32 %v744, %v886
    %v947 = vadd.f32 %v745, %v888
    %v948 = vadd.f32 %v746, %v890
    %v949 = vadd.f32 %v747, %v892
    %v950 = vadd.f32 %v748, %v896
    %v951 = vadd.f32 %v749, %v898
    %v952 = vadd.f32 %v750, %v900
    %v953 = vadd.f32 %v751, %v902
    %v954 = vadd.f32 %v752, %v906
    %v955 = vadd.f32 %v753, %v908
    %v956 = vadd.f32 %v754, %v910
    %v957 = vadd.f32 %v755, %v912
    %v958 = vadd.f32 %v756, %v916
    %v959 = vadd.f32 %v757, %v918
    %v960 = vadd.f32 %v758, %v920
    %v961 = vadd.f32 %v759, %v922
    %v962 = vadd.f32 %v760, %v926
    %v963 = vadd.f32 %v761, %v928
    %v964 = vadd.f32 %v762, %v930
    %v965 = vadd.f32 %v763, %v932
    %v970 = vrot.slane %v35, 1
    %v971 = vrot.slane %v36, 1
    %v972 = vsel %vm102, %v970, %v971
    %v973 = vrot.slane %v55, 1
    %v974 = vrot.slane %v56, 1
    %v975 = vsel %vm102, %v973, %v974
    %v978 = vpack.c.bf16 %v111, %v108
    %v979 = vpack.c.bf16 %v117, %v114
    %v980 = vpack.c.bf16 %v123, %v120
    %v981 = vpack.c.bf16 %v972, %v126
    %v982 = vpack.c.bf16 %v135, %v132
    %v983 = vpack.c.bf16 %v141, %v138
    %v984 = vpack.c.bf16 %v147, %v144
    %v985 = vpack.c.bf16 %v975, %v150
    %s986 = scalar_lea.vmem %s1, 96
    %v987 = vld [vmem:[%s986] sm:$0xff]
    %v988 = vld [vmem:[%s986 + $0x8] sm:$0xff]
    %v989 = vld [vmem:[%s986 + $0x10] sm:$0x77]
    %v993 = vunpack.c.l.b16 %v987
    %v994 = vunpack.c.h.b16 %v987
    %v995 = vunpack.c.l.b16 %v988
    %v996 = vunpack.c.h.b16 %v988
    %v997 = vunpack.c.l.b16 %v989
    %v998 = vunpack.c.h.b16 %v989
    %v999 = vpack.c.b16 %v995, %v993
    %v1000 = vpack.c.b16 %v996, %v994
    %v1001 = vpack.c.b16 %v997, %v997
    %v1002 = vpack.c.b16 %v998, %v998
    %v1006 = vsel %vm194, %v978, 0
    %v1009 = vsel %vm194, %v979, 0
    %v1012 = vsel %vm194, %v980, 0
    %v1015 = vsel %vm194, %v981, 0
    %v1018 = vsel %vm194, %v982, 0
    %v1021 = vsel %vm194, %v983, 0
    %v1024 = vsel %vm194, %v984, 0
    %v1027 = vsel %vm194, %v985, 0
    %v1030 = vsel %vm219, %v1001, 0
    %v1033 = vsel %vm219, %v1002, 0
    %1035 = vmatprep.subr.bf16.mxu0 0
    %1036 = vmatpush1.bf16.msra.mxu0 0
    %1037 = vmatprep.subr.bf16.mxu0 0
    %1038 = vmatpush1.bf16.msra.mxu0 0
    %1039 = vmatprep.subr.bf16.mxu0 0
    %1040 = vmatpush1.bf16.msra.mxu0 0
    %1041 = vmatprep.subr.bf16.mxu0 0
    %1042 = vmatpush1.bf16.msra.mxu0 0
    %1043 = vmatprep.subr.bf16.mxu0 0
    %1044 = vmatpush1.bf16.msra.mxu0 0
    %1045 = vmatprep.subr.bf16.mxu0 0
    %1046 = vmatpush1.bf16.msra.mxu0 0
    %1047 = vmatprep.subr.bf16.mxu0 %v1033
    %1048 = vmatpush1.bf16.msra.mxu0 %v1030
    %1049 = vmatprep.subr.bf16.mxu0 %v1000
    %1050 = vmatpush1.bf16.msra.mxu0 %v999
    %1051 = vmatprep.subr.bf16.mxu0 0
    %1052 = vmatpush2.bf16.msra.mxu0 0
    %1053 = vmatprep.subr.bf16.mxu0 0
    %1054 = vmatpush2.bf16.msra.mxu0 0
    %1055 = vmatprep.subr.bf16.mxu0 0
    %1056 = vmatpush2.bf16.msra.mxu0 0
    %1057 = vmatprep.subr.bf16.mxu0 0
    %1058 = vmatpush2.bf16.msra.mxu0 0
    %1059 = vmatprep.subr.bf16.mxu0 0
    %1060 = vmatpush2.bf16.msra.mxu0 0
    %1061 = vmatprep.subr.bf16.mxu0 0
    %1062 = vmatpush2.bf16.msra.mxu0 0
    %1063 = vmatprep.subr.bf16.mxu0 0
    %1064 = vmatpush2.bf16.msra.mxu0 0
    %1065 = vmatprep.subr.bf16.mxu0 0
    %1066 = vmatpush2.bf16.msra.mxu0 0
    %1067 = vmatprep.mubr.bf16.mxu0 0
    %1068 = vmatmul.mubr.bf16.gmra.mxu0 %v1006
    %v1069 = vpop.f32.mrf.mxu0
    %v1070 = vadd.f32 0.0, %v1069
    %v1071 = vpop.f32.mrf.mxu0
    %v1072 = vadd.f32 0.0, %v1071
    %v1073 = vpop.f32.mrf.mxu0
    %v1074 = vadd.f32 0.0, %v1073
    %v1075 = vpop.f32.mrf.mxu0
    %v1076 = vadd.f32 0.0, %v1075
    %1077 = vmatprep.mubr.bf16.mxu0 0
    %1078 = vmatmul.mubr.bf16.gmra.mxu0 %v1009
    %v1079 = vpop.f32.mrf.mxu0
    %v1080 = vadd.f32 0.0, %v1079
    %v1081 = vpop.f32.mrf.mxu0
    %v1082 = vadd.f32 0.0, %v1081
    %v1083 = vpop.f32.mrf.mxu0
    %v1084 = vadd.f32 0.0, %v1083
    %v1085 = vpop.f32.mrf.mxu0
    %v1086 = vadd.f32 0.0, %v1085
    %1087 = vmatprep.mubr.bf16.mxu0 0
    %1088 = vmatmul.mubr.bf16.gmra.mxu0 %v1012
    %v1089 = vpop.f32.mrf.mxu0
    %v1090 = vadd.f32 0.0, %v1089
    %v1091 = vpop.f32.mrf.mxu0
    %v1092 = vadd.f32 0.0, %v1091
    %v1093 = vpop.f32.mrf.mxu0
    %v1094 = vadd.f32 0.0, %v1093
    %v1095 = vpop.f32.mrf.mxu0
    %v1096 = vadd.f32 0.0, %v1095
    %1097 = vmatprep.mubr.bf16.mxu0 0
    %1098 = vmatmul.mubr.bf16.gmra.mxu0 %v1015
    %v1099 = vpop.f32.mrf.mxu0
    %v1100 = vadd.f32 0.0, %v1099
    %v1101 = vpop.f32.mrf.mxu0
    %v1102 = vadd.f32 0.0, %v1101
    %v1103 = vpop.f32.mrf.mxu0
    %v1104 = vadd.f32 0.0, %v1103
    %v1105 = vpop.f32.mrf.mxu0
    %v1106 = vadd.f32 0.0, %v1105
    %1107 = vmatprep.mubr.bf16.mxu0 0
    %1108 = vmatmul.mubr.bf16.gmra.mxu0 %v1018
    %v1109 = vpop.f32.mrf.mxu0
    %v1110 = vadd.f32 0.0, %v1109
    %v1111 = vpop.f32.mrf.mxu0
    %v1112 = vadd.f32 0.0, %v1111
    %v1113 = vpop.f32.mrf.mxu0
    %v1114 = vadd.f32 0.0, %v1113
    %v1115 = vpop.f32.mrf.mxu0
    %v1116 = vadd.f32 0.0, %v1115
    %1117 = vmatprep.mubr.bf16.mxu0 0
    %1118 = vmatmul.mubr.bf16.gmra.mxu0 %v1021
    %v1119 = vpop.f32.mrf.mxu0
    %v1120 = vadd.f32 0.0, %v1119
    %v1121 = vpop.f32.mrf.mxu0
    %v1122 = vadd.f32 0.0, %v1121
    %v1123 = vpop.f32.mrf.mxu0
    %v1124 = vadd.f32 0.0, %v1123
    %v1125 = vpop.f32.mrf.mxu0
    %v1126 = vadd.f32 0.0, %v1125
    %1127 = vmatprep.mubr.bf16.mxu0 0
    %1128 = vmatmul.mubr.bf16.gmra.mxu0 %v1024
    %v1129 = vpop.f32.mrf.mxu0
    %v1130 = vadd.f32 0.0, %v1129
    %v1131 = vpop.f32.mrf.mxu0
    %v1132 = vadd.f32 0.0, %v1131
    %v1133 = vpop.f32.mrf.mxu0
    %v1134 = vadd.f32 0.0, %v1133
    %v1135 = vpop.f32.mrf.mxu0
    %v1136 = vadd.f32 0.0, %v1135
    %1137 = vmatprep.mubr.bf16.mxu0 0
    %1138 = vmatmul.mubr.bf16.gmra.mxu0 %v1027
    %v1139 = vpop.f32.mrf.mxu0
    %v1140 = vadd.f32 0.0, %v1139
    %v1141 = vpop.f32.mrf.mxu0
    %v1142 = vadd.f32 0.0, %v1141
    %v1143 = vpop.f32.mrf.mxu0
    %v1144 = vadd.f32 0.0, %v1143
    %v1145 = vpop.f32.mrf.mxu0
    %v1146 = vadd.f32 0.0, %v1145
    %1147 = vdwg.mxu0
    %v1148 = vadd.f32 %v934, %v1070
    %v1149 = vadd.f32 %v935, %v1072
    %v1150 = vadd.f32 %v936, %v1074
    %v1151 = vadd.f32 %v937, %v1076
    %v1152 = vadd.f32 %v938, %v1080
    %v1153 = vadd.f32 %v939, %v1082
    %v1154 = vadd.f32 %v940, %v1084
    %v1155 = vadd.f32 %v941, %v1086
    %v1156 = vadd.f32 %v942, %v1090
    %v1157 = vadd.f32 %v943, %v1092
    %v1158 = vadd.f32 %v944, %v1094
    %v1159 = vadd.f32 %v945, %v1096
    %v1160 = vadd.f32 %v946, %v1100
    %v1161 = vadd.f32 %v947, %v1102
    %v1162 = vadd.f32 %v948, %v1104
    %v1163 = vadd.f32 %v949, %v1106
    %v1164 = vadd.f32 %v950, %v1110
    %v1165 = vadd.f32 %v951, %v1112
    %v1166 = vadd.f32 %v952, %v1114
    %v1167 = vadd.f32 %v953, %v1116
    %v1168 = vadd.f32 %v954, %v1120
    %v1169 = vadd.f32 %v955, %v1122
    %v1170 = vadd.f32 %v956, %v1124
    %v1171 = vadd.f32 %v957, %v1126
    %v1172 = vadd.f32 %v958, %v1130
    %v1173 = vadd.f32 %v959, %v1132
    %v1174 = vadd.f32 %v960, %v1134
    %v1175 = vadd.f32 %v961, %v1136
    %v1176 = vadd.f32 %v962, %v1140
    %v1177 = vadd.f32 %v963, %v1142
    %v1178 = vadd.f32 %v964, %v1144
    %v1179 = vadd.f32 %v965, %v1146
    %v1180 = vrot.slane %v35, 2
    %v1181 = vrot.slane %v36, 2
    %v1182 = vsel %vm497, %v1180, %v1181
    %v1183 = vrot.slane %v55, 2
    %v1184 = vrot.slane %v56, 2
    %v1185 = vsel %vm497, %v1183, %v1184
    %v1188 = vpack.c.bf16 %v506, %v503
    %v1189 = vpack.c.bf16 %v512, %v509
    %v1190 = vpack.c.bf16 %v518, %v515
    %v1191 = vpack.c.bf16 %v1182, %v521
    %v1192 = vpack.c.bf16 %v530, %v527
    %v1193 = vpack.c.bf16 %v536, %v533
    %v1194 = vpack.c.bf16 %v542, %v539
    %v1195 = vpack.c.bf16 %v1185, %v545
    %s1196 = scalar_lea.vmem %s1, 120
    %v1197 = vld [vmem:[%s1196] sm:$0xff]
    %v1198 = vld [vmem:[%s1196 + $0x8] sm:$0xff]
    %v1199 = vld [vmem:[%s1196 + $0x10] sm:$0x77]
    %v1203 = vunpack.c.l.b16 %v1197
    %v1204 = vunpack.c.h.b16 %v1197
    %v1205 = vunpack.c.l.b16 %v1198
    %v1206 = vunpack.c.h.b16 %v1198
    %v1207 = vunpack.c.l.b16 %v1199
    %v1208 = vunpack.c.h.b16 %v1199
    %v1209 = vpack.c.b16 %v1205, %v1203
    %v1210 = vpack.c.b16 %v1206, %v1204
    %v1211 = vpack.c.b16 %v1207, %v1207
    %v1212 = vpack.c.b16 %v1208, %v1208
    %v1216 = vsel %vm194, %v1188, 0
    %v1219 = vsel %vm194, %v1189, 0
    %v1222 = vsel %vm194, %v1190, 0
    %v1225 = vsel %vm194, %v1191, 0
    %v1228 = vsel %vm194, %v1192, 0
    %v1231 = vsel %vm194, %v1193, 0
    %v1234 = vsel %vm194, %v1194, 0
    %v1237 = vsel %vm194, %v1195, 0
    %v1240 = vsel %vm219, %v1211, 0
    %v1243 = vsel %vm219, %v1212, 0
    %1245 = vmatprep.subr.bf16.mxu0 0
    %1246 = vmatpush1.bf16.msra.mxu0 0
    %1247 = vmatprep.subr.bf16.mxu0 0
    %1248 = vmatpush1.bf16.msra.mxu0 0
    %1249 = vmatprep.subr.bf16.mxu0 0
    %1250 = vmatpush1.bf16.msra.mxu0 0
    %1251 = vmatprep.subr.bf16.mxu0 0
    %1252 = vmatpush1.bf16.msra.mxu0 0
    %1253 = vmatprep.subr.bf16.mxu0 0
    %1254 = vmatpush1.bf16.msra.mxu0 0
    %1255 = vmatprep.subr.bf16.mxu0 0
    %1256 = vmatpush1.bf16.msra.mxu0 0
    %1257 = vmatprep.subr.bf16.mxu0 %v1243
    %1258 = vmatpush1.bf16.msra.mxu0 %v1240
    %1259 = vmatprep.subr.bf16.mxu0 %v1210
    %1260 = vmatpush1.bf16.msra.mxu0 %v1209
    %1261 = vmatprep.subr.bf16.mxu0 0
    %1262 = vmatpush2.bf16.msra.mxu0 0
    %1263 = vmatprep.subr.bf16.mxu0 0
    %1264 = vmatpush2.bf16.msra.mxu0 0
    %1265 = vmatprep.subr.bf16.mxu0 0
    %1266 = vmatpush2.bf16.msra.mxu0 0
    %1267 = vmatprep.subr.bf16.mxu0 0
    %1268 = vmatpush2.bf16.msra.mxu0 0
    %1269 = vmatprep.subr.bf16.mxu0 0
    %1270 = vmatpush2.bf16.msra.mxu0 0
    %1271 = vmatprep.subr.bf16.mxu0 0
    %1272 = vmatpush2.bf16.msra.mxu0 0
    %1273 = vmatprep.subr.bf16.mxu0 0
    %1274 = vmatpush2.bf16.msra.mxu0 0
    %1275 = vmatprep.subr.bf16.mxu0 0
    %1276 = vmatpush2.bf16.msra.mxu0 0
    %1277 = vmatprep.mubr.bf16.mxu0 0
    %1278 = vmatmul.mubr.bf16.gmra.mxu0 %v1216
    %v1279 = vpop.f32.mrf.mxu0
    %v1280 = vadd.f32 0.0, %v1279
    %v1281 = vpop.f32.mrf.mxu0
    %v1282 = vadd.f32 0.0, %v1281
    %v1283 = vpop.f32.mrf.mxu0
    %v1284 = vadd.f32 0.0, %v1283
    %v1285 = vpop.f32.mrf.mxu0
    %v1286 = vadd.f32 0.0, %v1285
    %1287 = vmatprep.mubr.bf16.mxu0 0
    %1288 = vmatmul.mubr.bf16.gmra.mxu0 %v1219
    %v1289 = vpop.f32.mrf.mxu0
    %v1290 = vadd.f32 0.0, %v1289
    %v1291 = vpop.f32.mrf.mxu0
    %v1292 = vadd.f32 0.0, %v1291
    %v1293 = vpop.f32.mrf.mxu0
    %v1294 = vadd.f32 0.0, %v1293
    %v1295 = vpop.f32.mrf.mxu0
    %v1296 = vadd.f32 0.0, %v1295
    %1297 = vmatprep.mubr.bf16.mxu0 0
    %1298 = vmatmul.mubr.bf16.gmra.mxu0 %v1222
    %v1299 = vpop.f32.mrf.mxu0
    %v1300 = vadd.f32 0.0, %v1299
    %v1301 = vpop.f32.mrf.mxu0
    %v1302 = vadd.f32 0.0, %v1301
    %v1303 = vpop.f32.mrf.mxu0
    %v1304 = vadd.f32 0.0, %v1303
    %v1305 = vpop.f32.mrf.mxu0
    %v1306 = vadd.f32 0.0, %v1305
    %1307 = vmatprep.mubr.bf16.mxu0 0
    %1308 = vmatmul.mubr.bf16.gmra.mxu0 %v1225
    %v1309 = vpop.f32.mrf.mxu0
    %v1310 = vadd.f32 0.0, %v1309
    %v1311 = vpop.f32.mrf.mxu0
    %v1312 = vadd.f32 0.0, %v1311
    %v1313 = vpop.f32.mrf.mxu0
    %v1314 = vadd.f32 0.0, %v1313
    %v1315 = vpop.f32.mrf.mxu0
    %v1316 = vadd.f32 0.0, %v1315
    %1317 = vmatprep.mubr.bf16.mxu0 0
    %1318 = vmatmul.mubr.bf16.gmra.mxu0 %v1228
    %v1319 = vpop.f32.mrf.mxu0
    %v1320 = vadd.f32 0.0, %v1319
    %v1321 = vpop.f32.mrf.mxu0
    %v1322 = vadd.f32 0.0, %v1321
    %v1323 = vpop.f32.mrf.mxu0
    %v1324 = vadd.f32 0.0, %v1323
    %v1325 = vpop.f32.mrf.mxu0
    %v1326 = vadd.f32 0.0, %v1325
    %1327 = vmatprep.mubr.bf16.mxu0 0
    %1328 = vmatmul.mubr.bf16.gmra.mxu0 %v1231
    %v1329 = vpop.f32.mrf.mxu0
    %v1330 = vadd.f32 0.0, %v1329
    %v1331 = vpop.f32.mrf.mxu0
    %v1332 = vadd.f32 0.0, %v1331
    %v1333 = vpop.f32.mrf.mxu0
    %v1334 = vadd.f32 0.0, %v1333
    %v1335 = vpop.f32.mrf.mxu0
    %v1336 = vadd.f32 0.0, %v1335
    %1337 = vmatprep.mubr.bf16.mxu0 0
    %1338 = vmatmul.mubr.bf16.gmra.mxu0 %v1234
    %v1339 = vpop.f32.mrf.mxu0
    %v1340 = vadd.f32 0.0, %v1339
    %v1341 = vpop.f32.mrf.mxu0
    %v1342 = vadd.f32 0.0, %v1341
    %v1343 = vpop.f32.mrf.mxu0
    %v1344 = vadd.f32 0.0, %v1343
    %v1345 = vpop.f32.mrf.mxu0
    %v1346 = vadd.f32 0.0, %v1345
    %1347 = vmatprep.mubr.bf16.mxu0 0
    %1348 = vmatmul.mubr.bf16.gmra.mxu0 %v1237
    %v1349 = vpop.f32.mrf.mxu0
    %v1350 = vadd.f32 0.0, %v1349
    %v1351 = vpop.f32.mrf.mxu0
    %v1352 = vadd.f32 0.0, %v1351
    %v1353 = vpop.f32.mrf.mxu0
    %v1354 = vadd.f32 0.0, %v1353
    %v1355 = vpop.f32.mrf.mxu0
    %v1356 = vadd.f32 0.0, %v1355
    %1357 = vdwg.mxu0
    %v1358 = vadd.f32 %v1148, %v1280
    %v1359 = vadd.f32 %v1149, %v1282
    %v1360 = vadd.f32 %v1150, %v1284
    %v1361 = vadd.f32 %v1151, %v1286
    %v1362 = vadd.f32 %v1152, %v1290
    %v1363 = vadd.f32 %v1153, %v1292
    %v1364 = vadd.f32 %v1154, %v1294
    %v1365 = vadd.f32 %v1155, %v1296
    %v1366 = vadd.f32 %v1156, %v1300
    %v1367 = vadd.f32 %v1157, %v1302
    %v1368 = vadd.f32 %v1158, %v1304
    %v1369 = vadd.f32 %v1159, %v1306
    %v1370 = vadd.f32 %v1160, %v1310
    %v1371 = vadd.f32 %v1161, %v1312
    %v1372 = vadd.f32 %v1162, %v1314
    %v1373 = vadd.f32 %v1163, %v1316
    %v1374 = vadd.f32 %v1164, %v1320
    %v1375 = vadd.f32 %v1165, %v1322
    %v1376 = vadd.f32 %v1166, %v1324
    %v1377 = vadd.f32 %v1167, %v1326
    %v1378 = vadd.f32 %v1168, %v1330
    %v1379 = vadd.f32 %v1169, %v1332
    %v1380 = vadd.f32 %v1170, %v1334
    %v1381 = vadd.f32 %v1171, %v1336
    %v1382 = vadd.f32 %v1172, %v1340
    %v1383 = vadd.f32 %v1173, %v1342
    %v1384 = vadd.f32 %v1174, %v1344
    %v1385 = vadd.f32 %v1175, %v1346
    %v1386 = vadd.f32 %v1176, %v1350
    %v1387 = vadd.f32 %v1177, %v1352
    %v1388 = vadd.f32 %v1178, %v1354
    %v1389 = vadd.f32 %v1179, %v1356
    %v1390 = vpack.c.bf16 %v37, %v35
    %v1391 = vpack.c.bf16 %v57, %v55
    %s1392 = scalar_lea.vmem %s1, 144
    %v1393 = vld [vmem:[%s1392] sm:$0xff]
    %v1394 = vld [vmem:[%s1392 + $0x8] sm:$0xff]
    %v1395 = vld [vmem:[%s1392 + $0x10] sm:$0x77]
    %v1399 = vunpack.c.l.b16 %v1393
    %v1400 = vunpack.c.h.b16 %v1393
    %v1401 = vunpack.c.l.b16 %v1394
    %v1402 = vunpack.c.h.b16 %v1394
    %v1403 = vunpack.c.l.b16 %v1395
    %v1404 = vunpack.c.h.b16 %v1395
    %v1405 = vpack.c.b16 %v1401, %v1399
    %v1406 = vpack.c.b16 %v1402, %v1400
    %v1407 = vpack.c.b16 %v1403, %v1403
    %v1408 = vpack.c.b16 %v1404, %v1404
    %v1412 = vsel %vm194, %v1390, 0
    %v1415 = vsel %vm194, %v1391, 0
    %v1418 = vsel %vm219, %v1407, 0
    %v1421 = vsel %vm219, %v1408, 0
    %1423 = vmatprep.subr.bf16.mxu0 0
    %1424 = vmatpush1.bf16.msra.mxu0 0
    %1425 = vmatprep.subr.bf16.mxu0 0
    %1426 = vmatpush1.bf16.msra.mxu0 0
    %1427 = vmatprep.subr.bf16.mxu0 0
    %1428 = vmatpush1.bf16.msra.mxu0 0
    %1429 = vmatprep.subr.bf16.mxu0 0
    %1430 = vmatpush1.bf16.msra.mxu0 0
    %1431 = vmatprep.subr.bf16.mxu0 0
    %1432 = vmatpush1.bf16.msra.mxu0 0
    %1433 = vmatprep.subr.bf16.mxu0 0
    %1434 = vmatpush1.bf16.msra.mxu0 0
    %1435 = vmatprep.subr.bf16.mxu0 %v1421
    %1436 = vmatpush1.bf16.msra.mxu0 %v1418
    %1437 = vmatprep.subr.bf16.mxu0 %v1406
    %1438 = vmatpush1.bf16.msra.mxu0 %v1405
    %1439 = vmatprep.subr.bf16.mxu0 0
    %1440 = vmatpush2.bf16.msra.mxu0 0
    %1441 = vmatprep.subr.bf16.mxu0 0
    %1442 = vmatpush2.bf16.msra.mxu0 0
    %1443 = vmatprep.subr.bf16.mxu0 0
    %1444 = vmatpush2.bf16.msra.mxu0 0
    %1445 = vmatprep.subr.bf16.mxu0 0
    %1446 = vmatpush2.bf16.msra.mxu0 0
    %1447 = vmatprep.subr.bf16.mxu0 0
    %1448 = vmatpush2.bf16.msra.mxu0 0
    %1449 = vmatprep.subr.bf16.mxu0 0
    %1450 = vmatpush2.bf16.msra.mxu0 0
    %1451 = vmatprep.subr.bf16.mxu0 0
    %1452 = vmatpush2.bf16.msra.mxu0 0
    %1453 = vmatprep.subr.bf16.mxu0 0
    %1454 = vmatpush2.bf16.msra.mxu0 0
    %1455 = vmatprep.mubr.bf16.mxu0 0
    %1456 = vmatmul.mubr.bf16.gmra.mxu0 %v358
    %v1457 = vpop.f32.mrf.mxu0
    %v1458 = vadd.f32 0.0, %v1457
    %v1459 = vpop.f32.mrf.mxu0
    %v1460 = vadd.f32 0.0, %v1459
    %v1461 = vpop.f32.mrf.mxu0
    %v1462 = vadd.f32 0.0, %v1461
    %v1463 = vpop.f32.mrf.mxu0
    %v1464 = vadd.f32 0.0, %v1463
    %1465 = vmatprep.mubr.bf16.mxu0 0
    %1466 = vmatmul.mubr.bf16.gmra.mxu0 %v361
    %v1467 = vpop.f32.mrf.mxu0
    %v1468 = vadd.f32 0.0, %v1467
    %v1469 = vpop.f32.mrf.mxu0
    %v1470 = vadd.f32 0.0, %v1469
    %v1471 = vpop.f32.mrf.mxu0
    %v1472 = vadd.f32 0.0, %v1471
    %v1473 = vpop.f32.mrf.mxu0
    %v1474 = vadd.f32 0.0, %v1473
    %1475 = vmatprep.mubr.bf16.mxu0 0
    %1476 = vmatmul.mubr.bf16.gmra.mxu0 %v364
    %v1477 = vpop.f32.mrf.mxu0
    %v1478 = vadd.f32 0.0, %v1477
    %v1479 = vpop.f32.mrf.mxu0
    %v1480 = vadd.f32 0.0, %v1479
    %v1481 = vpop.f32.mrf.mxu0
    %v1482 = vadd.f32 0.0, %v1481
    %v1483 = vpop.f32.mrf.mxu0
    %v1484 = vadd.f32 0.0, %v1483
    %1485 = vmatprep.mubr.bf16.mxu0 0
    %1486 = vmatmul.mubr.bf16.gmra.mxu0 %v1412
    %v1487 = vpop.f32.mrf.mxu0
    %v1488 = vadd.f32 0.0, %v1487
    %v1489 = vpop.f32.mrf.mxu0
    %v1490 = vadd.f32 0.0, %v1489
    %v1491 = vpop.f32.mrf.mxu0
    %v1492 = vadd.f32 0.0, %v1491
    %v1493 = vpop.f32.mrf.mxu0
    %v1494 = vadd.f32 0.0, %v1493
    %1495 = vmatprep.mubr.bf16.mxu0 0
    %1496 = vmatmul.mubr.bf16.gmra.mxu0 %v370
    %v1497 = vpop.f32.mrf.mxu0
    %v1498 = vadd.f32 0.0, %v1497
    %v1499 = vpop.f32.mrf.mxu0
    %v1500 = vadd.f32 0.0, %v1499
    %v1501 = vpop.f32.mrf.mxu0
    %v1502 = vadd.f32 0.0, %v1501
    %v1503 = vpop.f32.mrf.mxu0
    %v1504 = vadd.f32 0.0, %v1503
    %1505 = vmatprep.mubr.bf16.mxu0 0
    %1506 = vmatmul.mubr.bf16.gmra.mxu0 %v373
    %v1507 = vpop.f32.mrf.mxu0
    %v1508 = vadd.f32 0.0, %v1507
    %v1509 = vpop.f32.mrf.mxu0
    %v1510 = vadd.f32 0.0, %v1509
    %v1511 = vpop.f32.mrf.mxu0
    %v1512 = vadd.f32 0.0, %v1511
    %v1513 = vpop.f32.mrf.mxu0
    %v1514 = vadd.f32 0.0, %v1513
    %1515 = vmatprep.mubr.bf16.mxu0 0
    %1516 = vmatmul.mubr.bf16.gmra.mxu0 %v376
    %v1517 = vpop.f32.mrf.mxu0
    %v1518 = vadd.f32 0.0, %v1517
    %v1519 = vpop.f32.mrf.mxu0
    %v1520 = vadd.f32 0.0, %v1519
    %v1521 = vpop.f32.mrf.mxu0
    %v1522 = vadd.f32 0.0, %v1521
    %v1523 = vpop.f32.mrf.mxu0
    %v1524 = vadd.f32 0.0, %v1523
    %1525 = vmatprep.mubr.bf16.mxu0 0
    %1526 = vmatmul.mubr.bf16.gmra.mxu0 %v1415
    %v1527 = vpop.f32.mrf.mxu0
    %v1528 = vadd.f32 0.0, %v1527
    %v1529 = vpop.f32.mrf.mxu0
    %v1530 = vadd.f32 0.0, %v1529
    %v1531 = vpop.f32.mrf.mxu0
    %v1532 = vadd.f32 0.0, %v1531
    %v1533 = vpop.f32.mrf.mxu0
    %v1534 = vadd.f32 0.0, %v1533
    %1535 = vdwg.mxu0
    %v1536 = vadd.f32 %v1358, %v1458
    %v1537 = vadd.f32 %v1359, %v1460
    %v1538 = vadd.f32 %v1360, %v1462
    %v1539 = vadd.f32 %v1361, %v1464
    %v1540 = vadd.f32 %v1362, %v1468
    %v1541 = vadd.f32 %v1363, %v1470
    %v1542 = vadd.f32 %v1364, %v1472
    %v1543 = vadd.f32 %v1365, %v1474
    %v1544 = vadd.f32 %v1366, %v1478
    %v1545 = vadd.f32 %v1367, %v1480
    %v1546 = vadd.f32 %v1368, %v1482
    %v1547 = vadd.f32 %v1369, %v1484
    %v1548 = vadd.f32 %v1370, %v1488
    %v1549 = vadd.f32 %v1371, %v1490
    %v1550 = vadd.f32 %v1372, %v1492
    %v1551 = vadd.f32 %v1373, %v1494
    %v1552 = vadd.f32 %v1374, %v1498
    %v1553 = vadd.f32 %v1375, %v1500
    %v1554 = vadd.f32 %v1376, %v1502
    %v1555 = vadd.f32 %v1377, %v1504
    %v1556 = vadd.f32 %v1378, %v1508
    %v1557 = vadd.f32 %v1379, %v1510
    %v1558 = vadd.f32 %v1380, %v1512
    %v1559 = vadd.f32 %v1381, %v1514
    %v1560 = vadd.f32 %v1382, %v1518
    %v1561 = vadd.f32 %v1383, %v1520
    %v1562 = vadd.f32 %v1384, %v1522
    %v1563 = vadd.f32 %v1385, %v1524
    %v1564 = vadd.f32 %v1386, %v1528
    %v1565 = vadd.f32 %v1387, %v1530
    %v1566 = vadd.f32 %v1388, %v1532
    %v1567 = vadd.f32 %v1389, %v1534
    %v1572 = vrot.slane %v37, 1
    %v1573 = vrot.slane %v38, 1
    %v1574 = vsel %vm102, %v1572, %v1573
    %v1575 = vrot.slane %v57, 1
    %v1576 = vrot.slane %v58, 1
    %v1577 = vsel %vm102, %v1575, %v1576
    %v1580 = vpack.c.bf16 %v1574, %v972
    %v1581 = vpack.c.bf16 %v1577, %v975
    %s1582 = scalar_lea.vmem %s1, 168
    %v1583 = vld [vmem:[%s1582] sm:$0xff]
    %v1584 = vld [vmem:[%s1582 + $0x8] sm:$0xff]
    %v1585 = vld [vmem:[%s1582 + $0x10] sm:$0x77]
    %v1589 = vunpack.c.l.b16 %v1583
    %v1590 = vunpack.c.h.b16 %v1583
    %v1591 = vunpack.c.l.b16 %v1584
    %v1592 = vunpack.c.h.b16 %v1584
    %v1593 = vunpack.c.l.b16 %v1585
    %v1594 = vunpack.c.h.b16 %v1585
    %v1595 = vpack.c.b16 %v1591, %v1589
    %v1596 = vpack.c.b16 %v1592, %v1590
    %v1597 = vpack.c.b16 %v1593, %v1593
    %v1598 = vpack.c.b16 %v1594, %v1594
    %v1602 = vsel %vm194, %v1580, 0
    %v1605 = vsel %vm194, %v1581, 0
    %v1608 = vsel %vm219, %v1597, 0
    %v1611 = vsel %vm219, %v1598, 0
    %1613 = vmatprep.subr.bf16.mxu0 0
    %1614 = vmatpush1.bf16.msra.mxu0 0
    %1615 = vmatprep.subr.bf16.mxu0 0
    %1616 = vmatpush1.bf16.msra.mxu0 0
    %1617 = vmatprep.subr.bf16.mxu0 0
    %1618 = vmatpush1.bf16.msra.mxu0 0
    %1619 = vmatprep.subr.bf16.mxu0 0
    %1620 = vmatpush1.bf16.msra.mxu0 0
    %1621 = vmatprep.subr.bf16.mxu0 0
    %1622 = vmatpush1.bf16.msra.mxu0 0
    %1623 = vmatprep.subr.bf16.mxu0 0
    %1624 = vmatpush1.bf16.msra.mxu0 0
    %1625 = vmatprep.subr.bf16.mxu0 %v1611
    %1626 = vmatpush1.bf16.msra.mxu0 %v1608
    %1627 = vmatprep.subr.bf16.mxu0 %v1596
    %1628 = vmatpush1.bf16.msra.mxu0 %v1595
    %1629 = vmatprep.subr.bf16.mxu0 0
    %1630 = vmatpush2.bf16.msra.mxu0 0
    %1631 = vmatprep.subr.bf16.mxu0 0
    %1632 = vmatpush2.bf16.msra.mxu0 0
    %1633 = vmatprep.subr.bf16.mxu0 0
    %1634 = vmatpush2.bf16.msra.mxu0 0
    %1635 = vmatprep.subr.bf16.mxu0 0
    %1636 = vmatpush2.bf16.msra.mxu0 0
    %1637 = vmatprep.subr.bf16.mxu0 0
    %1638 = vmatpush2.bf16.msra.mxu0 0
    %1639 = vmatprep.subr.bf16.mxu0 0
    %1640 = vmatpush2.bf16.msra.mxu0 0
    %1641 = vmatprep.subr.bf16.mxu0 0
    %1642 = vmatpush2.bf16.msra.mxu0 0
    %1643 = vmatprep.subr.bf16.mxu0 0
    %1644 = vmatpush2.bf16.msra.mxu0 0
    %1645 = vmatprep.mubr.bf16.mxu0 0
    %1646 = vmatmul.mubr.bf16.gmra.mxu0 %v199
    %v1647 = vpop.f32.mrf.mxu0
    %v1648 = vadd.f32 0.0, %v1647
    %v1649 = vpop.f32.mrf.mxu0
    %v1650 = vadd.f32 0.0, %v1649
    %v1651 = vpop.f32.mrf.mxu0
    %v1652 = vadd.f32 0.0, %v1651
    %v1653 = vpop.f32.mrf.mxu0
    %v1654 = vadd.f32 0.0, %v1653
    %1655 = vmatprep.mubr.bf16.mxu0 0
    %1656 = vmatmul.mubr.bf16.gmra.mxu0 %v202
    %v1657 = vpop.f32.mrf.mxu0
    %v1658 = vadd.f32 0.0, %v1657
    %v1659 = vpop.f32.mrf.mxu0
    %v1660 = vadd.f32 0.0, %v1659
    %v1661 = vpop.f32.mrf.mxu0
    %v1662 = vadd.f32 0.0, %v1661
    %v1663 = vpop.f32.mrf.mxu0
    %v1664 = vadd.f32 0.0, %v1663
    %1665 = vmatprep.mubr.bf16.mxu0 0
    %1666 = vmatmul.mubr.bf16.gmra.mxu0 %v205
    %v1667 = vpop.f32.mrf.mxu0
    %v1668 = vadd.f32 0.0, %v1667
    %v1669 = vpop.f32.mrf.mxu0
    %v1670 = vadd.f32 0.0, %v1669
    %v1671 = vpop.f32.mrf.mxu0
    %v1672 = vadd.f32 0.0, %v1671
    %v1673 = vpop.f32.mrf.mxu0
    %v1674 = vadd.f32 0.0, %v1673
    %1675 = vmatprep.mubr.bf16.mxu0 0
    %1676 = vmatmul.mubr.bf16.gmra.mxu0 %v1602
    %v1677 = vpop.f32.mrf.mxu0
    %v1678 = vadd.f32 0.0, %v1677
    %v1679 = vpop.f32.mrf.mxu0
    %v1680 = vadd.f32 0.0, %v1679
    %v1681 = vpop.f32.mrf.mxu0
    %v1682 = vadd.f32 0.0, %v1681
    %v1683 = vpop.f32.mrf.mxu0
    %v1684 = vadd.f32 0.0, %v1683
    %1685 = vmatprep.mubr.bf16.mxu0 0
    %1686 = vmatmul.mubr.bf16.gmra.mxu0 %v211
    %v1687 = vpop.f32.mrf.mxu0
    %v1688 = vadd.f32 0.0, %v1687
    %v1689 = vpop.f32.mrf.mxu0
    %v1690 = vadd.f32 0.0, %v1689
    %v1691 = vpop.f32.mrf.mxu0
    %v1692 = vadd.f32 0.0, %v1691
    %v1693 = vpop.f32.mrf.mxu0
    %v1694 = vadd.f32 0.0, %v1693
    %1695 = vmatprep.mubr.bf16.mxu0 0
    %1696 = vmatmul.mubr.bf16.gmra.mxu0 %v214
    %v1697 = vpop.f32.mrf.mxu0
    %v1698 = vadd.f32 0.0, %v1697
    %v1699 = vpop.f32.mrf.mxu0
    %v1700 = vadd.f32 0.0, %v1699
    %v1701 = vpop.f32.mrf.mxu0
    %v1702 = vadd.f32 0.0, %v1701
    %v1703 = vpop.f32.mrf.mxu0
    %v1704 = vadd.f32 0.0, %v1703
    %1705 = vmatprep.mubr.bf16.mxu0 0
    %1706 = vmatmul.mubr.bf16.gmra.mxu0 %v217
    %v1707 = vpop.f32.mrf.mxu0
    %v1708 = vadd.f32 0.0, %v1707
    %v1709 = vpop.f32.mrf.mxu0
    %v1710 = vadd.f32 0.0, %v1709
    %v1711 = vpop.f32.mrf.mxu0
    %v1712 = vadd.f32 0.0, %v1711
    %v1713 = vpop.f32.mrf.mxu0
    %v1714 = vadd.f32 0.0, %v1713
    %1715 = vmatprep.mubr.bf16.mxu0 0
    %1716 = vmatmul.mubr.bf16.gmra.mxu0 %v1605
    %v1717 = vpop.f32.mrf.mxu0
    %v1718 = vadd.f32 0.0, %v1717
    %v1719 = vpop.f32.mrf.mxu0
    %v1720 = vadd.f32 0.0, %v1719
    %v1721 = vpop.f32.mrf.mxu0
    %v1722 = vadd.f32 0.0, %v1721
    %v1723 = vpop.f32.mrf.mxu0
    %v1724 = vadd.f32 0.0, %v1723
    %1725 = vdwg.mxu0
    %v1726 = vadd.f32 %v1536, %v1648
    %v1727 = vadd.f32 %v1537, %v1650
    %v1728 = vadd.f32 %v1538, %v1652
    %v1729 = vadd.f32 %v1539, %v1654
    %v1730 = vadd.f32 %v1540, %v1658
    %v1731 = vadd.f32 %v1541, %v1660
    %v1732 = vadd.f32 %v1542, %v1662
    %v1733 = vadd.f32 %v1543, %v1664
    %v1734 = vadd.f32 %v1544, %v1668
    %v1735 = vadd.f32 %v1545, %v1670
    %v1736 = vadd.f32 %v1546, %v1672
    %v1737 = vadd.f32 %v1547, %v1674
    %v1738 = vadd.f32 %v1548, %v1678
    %v1739 = vadd.f32 %v1549, %v1680
    %v1740 = vadd.f32 %v1550, %v1682
    %v1741 = vadd.f32 %v1551, %v1684
    %v1742 = vadd.f32 %v1552, %v1688
    %v1743 = vadd.f32 %v1553, %v1690
    %v1744 = vadd.f32 %v1554, %v1692
    %v1745 = vadd.f32 %v1555, %v1694
    %v1746 = vadd.f32 %v1556, %v1698
    %v1747 = vadd.f32 %v1557, %v1700
    %v1748 = vadd.f32 %v1558, %v1702
    %v1749 = vadd.f32 %v1559, %v1704
    %v1750 = vadd.f32 %v1560, %v1708
    %v1751 = vadd.f32 %v1561, %v1710
    %v1752 = vadd.f32 %v1562, %v1712
    %v1753 = vadd.f32 %v1563, %v1714
    %v1754 = vadd.f32 %v1564, %v1718
    %v1755 = vadd.f32 %v1565, %v1720
    %v1756 = vadd.f32 %v1566, %v1722
    %v1757 = vadd.f32 %v1567, %v1724
    %v1758 = vrot.slane %v37, 2
    %v1759 = vrot.slane %v38, 2
    %v1760 = vsel %vm497, %v1758, %v1759
    %v1761 = vrot.slane %v57, 2
    %v1762 = vrot.slane %v58, 2
    %v1763 = vsel %vm497, %v1761, %v1762
    %v1766 = vpack.c.bf16 %v1760, %v1182
    %v1767 = vpack.c.bf16 %v1763, %v1185
    %s1768 = scalar_lea.vmem %s1, 192
    %v1769 = vld [vmem:[%s1768] sm:$0xff]
    %v1770 = vld [vmem:[%s1768 + $0x8] sm:$0xff]
    %v1771 = vld [vmem:[%s1768 + $0x10] sm:$0x77]
    %v1775 = vunpack.c.l.b16 %v1769
    %v1776 = vunpack.c.h.b16 %v1769
    %v1777 = vunpack.c.l.b16 %v1770
    %v1778 = vunpack.c.h.b16 %v1770
    %v1779 = vunpack.c.l.b16 %v1771
    %v1780 = vunpack.c.h.b16 %v1771
    %v1781 = vpack.c.b16 %v1777, %v1775
    %v1782 = vpack.c.b16 %v1778, %v1776
    %v1783 = vpack.c.b16 %v1779, %v1779
    %v1784 = vpack.c.b16 %v1780, %v1780
    %v1788 = vsel %vm194, %v1766, 0
    %v1791 = vsel %vm194, %v1767, 0
    %v1794 = vsel %vm219, %v1783, 0
    %v1797 = vsel %vm219, %v1784, 0
    %1799 = vmatprep.subr.bf16.mxu0 0
    %1800 = vmatpush1.bf16.msra.mxu0 0
    %1801 = vmatprep.subr.bf16.mxu0 0
    %1802 = vmatpush1.bf16.msra.mxu0 0
    %1803 = vmatprep.subr.bf16.mxu0 0
    %1804 = vmatpush1.bf16.msra.mxu0 0
    %1805 = vmatprep.subr.bf16.mxu0 0
    %1806 = vmatpush1.bf16.msra.mxu0 0
    %1807 = vmatprep.subr.bf16.mxu0 0
    %1808 = vmatpush1.bf16.msra.mxu0 0
    %1809 = vmatprep.subr.bf16.mxu0 0
    %1810 = vmatpush1.bf16.msra.mxu0 0
    %1811 = vmatprep.subr.bf16.mxu0 %v1797
    %1812 = vmatpush1.bf16.msra.mxu0 %v1794
    %1813 = vmatprep.subr.bf16.mxu0 %v1782
    %1814 = vmatpush1.bf16.msra.mxu0 %v1781
    %1815 = vmatprep.subr.bf16.mxu0 0
    %1816 = vmatpush2.bf16.msra.mxu0 0
    %1817 = vmatprep.subr.bf16.mxu0 0
    %1818 = vmatpush2.bf16.msra.mxu0 0
    %1819 = vmatprep.subr.bf16.mxu0 0
    %1820 = vmatpush2.bf16.msra.mxu0 0
    %1821 = vmatprep.subr.bf16.mxu0 0
    %1822 = vmatpush2.bf16.msra.mxu0 0
    %1823 = vmatprep.subr.bf16.mxu0 0
    %1824 = vmatpush2.bf16.msra.mxu0 0
    %1825 = vmatprep.subr.bf16.mxu0 0
    %1826 = vmatpush2.bf16.msra.mxu0 0
    %1827 = vmatprep.subr.bf16.mxu0 0
    %1828 = vmatpush2.bf16.msra.mxu0 0
    %1829 = vmatprep.subr.bf16.mxu0 0
    %1830 = vmatpush2.bf16.msra.mxu0 0
    %1831 = vmatprep.mubr.bf16.mxu0 0
    %1832 = vmatmul.mubr.bf16.gmra.mxu0 %v593
    %v1833 = vpop.f32.mrf.mxu0
    %v1834 = vadd.f32 0.0, %v1833
    %v1835 = vpop.f32.mrf.mxu0
    %v1836 = vadd.f32 0.0, %v1835
    %v1837 = vpop.f32.mrf.mxu0
    %v1838 = vadd.f32 0.0, %v1837
    %v1839 = vpop.f32.mrf.mxu0
    %v1840 = vadd.f32 0.0, %v1839
    %1841 = vmatprep.mubr.bf16.mxu0 0
    %1842 = vmatmul.mubr.bf16.gmra.mxu0 %v596
    %v1843 = vpop.f32.mrf.mxu0
    %v1844 = vadd.f32 0.0, %v1843
    %v1845 = vpop.f32.mrf.mxu0
    %v1846 = vadd.f32 0.0, %v1845
    %v1847 = vpop.f32.mrf.mxu0
    %v1848 = vadd.f32 0.0, %v1847
    %v1849 = vpop.f32.mrf.mxu0
    %v1850 = vadd.f32 0.0, %v1849
    %1851 = vmatprep.mubr.bf16.mxu0 0
    %1852 = vmatmul.mubr.bf16.gmra.mxu0 %v599
    %v1853 = vpop.f32.mrf.mxu0
    %v1854 = vadd.f32 0.0, %v1853
    %v1855 = vpop.f32.mrf.mxu0
    %v1856 = vadd.f32 0.0, %v1855
    %v1857 = vpop.f32.mrf.mxu0
    %v1858 = vadd.f32 0.0, %v1857
    %v1859 = vpop.f32.mrf.mxu0
    %v1860 = vadd.f32 0.0, %v1859
    %1861 = vmatprep.mubr.bf16.mxu0 0
    %1862 = vmatmul.mubr.bf16.gmra.mxu0 %v1788
    %v1863 = vpop.f32.mrf.mxu0
    %v1864 = vadd.f32 0.0, %v1863
    %v1865 = vpop.f32.mrf.mxu0
    %v1866 = vadd.f32 0.0, %v1865
    %v1867 = vpop.f32.mrf.mxu0
    %v1868 = vadd.f32 0.0, %v1867
    %v1869 = vpop.f32.mrf.mxu0
    %v1870 = vadd.f32 0.0, %v1869
    %1871 = vmatprep.mubr.bf16.mxu0 0
    %1872 = vmatmul.mubr.bf16.gmra.mxu0 %v605
    %v1873 = vpop.f32.mrf.mxu0
    %v1874 = vadd.f32 0.0, %v1873
    %v1875 = vpop.f32.mrf.mxu0
    %v1876 = vadd.f32 0.0, %v1875
    %v1877 = vpop.f32.mrf.mxu0
    %v1878 = vadd.f32 0.0, %v1877
    %v1879 = vpop.f32.mrf.mxu0
    %v1880 = vadd.f32 0.0, %v1879
    %1881 = vmatprep.mubr.bf16.mxu0 0
    %1882 = vmatmul.mubr.bf16.gmra.mxu0 %v608
    %v1883 = vpop.f32.mrf.mxu0
    %v1884 = vadd.f32 0.0, %v1883
    %v1885 = vpop.f32.mrf.mxu0
    %v1886 = vadd.f32 0.0, %v1885
    %v1887 = vpop.f32.mrf.mxu0
    %v1888 = vadd.f32 0.0, %v1887
    %v1889 = vpop.f32.mrf.mxu0
    %v1890 = vadd.f32 0.0, %v1889
    %1891 = vmatprep.mubr.bf16.mxu0 0
    %1892 = vmatmul.mubr.bf16.gmra.mxu0 %v611
    %v1893 = vpop.f32.mrf.mxu0
    %v1894 = vadd.f32 0.0, %v1893
    %v1895 = vpop.f32.mrf.mxu0
    %v1896 = vadd.f32 0.0, %v1895
    %v1897 = vpop.f32.mrf.mxu0
    %v1898 = vadd.f32 0.0, %v1897
    %v1899 = vpop.f32.mrf.mxu0
    %v1900 = vadd.f32 0.0, %v1899
    %1901 = vmatprep.mubr.bf16.mxu0 0
    %1902 = vmatmul.mubr.bf16.gmra.mxu0 %v1791
    %v1903 = vpop.f32.mrf.mxu0
    %v1904 = vadd.f32 0.0, %v1903
    %v1905 = vpop.f32.mrf.mxu0
    %v1906 = vadd.f32 0.0, %v1905
    %v1907 = vpop.f32.mrf.mxu0
    %v1908 = vadd.f32 0.0, %v1907
    %v1909 = vpop.f32.mrf.mxu0
    %v1910 = vadd.f32 0.0, %v1909
    %1911 = vdwg.mxu0
    %v1912 = vadd.f32 %v1726, %v1834
    %v1913 = vadd.f32 %v1727, %v1836
    %v1914 = vadd.f32 %v1728, %v1838
    %v1915 = vadd.f32 %v1729, %v1840
    %v1916 = vadd.f32 %v1730, %v1844
    %v1917 = vadd.f32 %v1731, %v1846
    %v1918 = vadd.f32 %v1732, %v1848
    %v1919 = vadd.f32 %v1733, %v1850
    %v1920 = vadd.f32 %v1734, %v1854
    %v1921 = vadd.f32 %v1735, %v1856
    %v1922 = vadd.f32 %v1736, %v1858
    %v1923 = vadd.f32 %v1737, %v1860
    %v1924 = vadd.f32 %v1738, %v1864
    %v1925 = vadd.f32 %v1739, %v1866
    %v1926 = vadd.f32 %v1740, %v1868
    %v1927 = vadd.f32 %v1741, %v1870
    %v1928 = vadd.f32 %v1742, %v1874
    %v1929 = vadd.f32 %v1743, %v1876
    %v1930 = vadd.f32 %v1744, %v1878
    %v1931 = vadd.f32 %v1745, %v1880
    %v1932 = vadd.f32 %v1746, %v1884
    %v1933 = vadd.f32 %v1747, %v1886
    %v1934 = vadd.f32 %v1748, %v1888
    %v1935 = vadd.f32 %v1749, %v1890
    %v1936 = vadd.f32 %v1750, %v1894
    %v1937 = vadd.f32 %v1751, %v1896
    %v1938 = vadd.f32 %v1752, %v1898
    %v1939 = vadd.f32 %v1753, %v1900
    %v1940 = vadd.f32 %v1754, %v1904
    %v1941 = vadd.f32 %v1755, %v1906
    %v1942 = vadd.f32 %v1756, %v1908
    %v1943 = vadd.f32 %v1757, %v1910
    %v1944 = vld [vmem:[%s2] sm:$0x3]
    %v1946 = vlaneseq
    %v1947 = vshrl.u32 %v1946, 7
    %v1948 = vsub.s32 0, %v1947
    %v1949 = vrot.slane %v1944, %v1948
    %v1950 = vlaneseq
    %v1951 = vshrl.u32 %v1950, 7
    %v1952 = vsub.s32 1, %v1951
    %v1953 = vrot.slane %v1944, %v1952
    %v1956 = vmul.f32 %v1912, %v1949
    %v1957 = vmul.f32 %v1913, %v1953
    %v1958 = vmul.f32 %v1914, %v1949
    %v1959 = vmul.f32 %v1915, %v1953
    %v1960 = vmul.f32 %v1916, %v1949
    %v1961 = vmul.f32 %v1917, %v1953
    %v1962 = vmul.f32 %v1918, %v1949
    %v1963 = vmul.f32 %v1919, %v1953
    %v1964 = vmul.f32 %v1920, %v1949
    %v1965 = vmul.f32 %v1921, %v1953
    %v1966 = vmul.f32 %v1922, %v1949
    %v1967 = vmul.f32 %v1923, %v1953
    %v1968 = vmul.f32 %v1924, %v1949
    %v1969 = vmul.f32 %v1925, %v1953
    %v1970 = vmul.f32 %v1926, %v1949
    %v1971 = vmul.f32 %v1927, %v1953
    %v1972 = vmul.f32 %v1928, %v1949
    %v1973 = vmul.f32 %v1929, %v1953
    %v1974 = vmul.f32 %v1930, %v1949
    %v1975 = vmul.f32 %v1931, %v1953
    %v1976 = vmul.f32 %v1932, %v1949
    %v1977 = vmul.f32 %v1933, %v1953
    %v1978 = vmul.f32 %v1934, %v1949
    %v1979 = vmul.f32 %v1935, %v1953
    %v1980 = vmul.f32 %v1936, %v1949
    %v1981 = vmul.f32 %v1937, %v1953
    %v1982 = vmul.f32 %v1938, %v1949
    %v1983 = vmul.f32 %v1939, %v1953
    %v1984 = vmul.f32 %v1940, %v1949
    %v1985 = vmul.f32 %v1941, %v1953
    %v1986 = vmul.f32 %v1942, %v1949
    %v1987 = vmul.f32 %v1943, %v1953
    %v1988 = vld [vmem:[%s3] sm:$0x3]
    %v1990 = vlaneseq
    %v1991 = vshrl.u32 %v1990, 7
    %v1992 = vsub.s32 0, %v1991
    %v1993 = vrot.slane %v1988, %v1992
    %v1994 = vlaneseq
    %v1995 = vshrl.u32 %v1994, 7
    %v1996 = vsub.s32 1, %v1995
    %v1997 = vrot.slane %v1988, %v1996
    %v2000 = vadd.f32 %v1956, %v1993
    %v2001 = vadd.f32 %v1957, %v1997
    %v2002 = vadd.f32 %v1958, %v1993
    %v2003 = vadd.f32 %v1959, %v1997
    %v2004 = vadd.f32 %v1960, %v1993
    %v2005 = vadd.f32 %v1961, %v1997
    %v2006 = vadd.f32 %v1962, %v1993
    %v2007 = vadd.f32 %v1963, %v1997
    %v2008 = vadd.f32 %v1964, %v1993
    %v2009 = vadd.f32 %v1965, %v1997
    %v2010 = vadd.f32 %v1966, %v1993
    %v2011 = vadd.f32 %v1967, %v1997
    %v2012 = vadd.f32 %v1968, %v1993
    %v2013 = vadd.f32 %v1969, %v1997
    %v2014 = vadd.f32 %v1970, %v1993
    %v2015 = vadd.f32 %v1971, %v1997
    %v2016 = vadd.f32 %v1972, %v1993
    %v2017 = vadd.f32 %v1973, %v1997
    %v2018 = vadd.f32 %v1974, %v1993
    %v2019 = vadd.f32 %v1975, %v1997
    %v2020 = vadd.f32 %v1976, %v1993
    %v2021 = vadd.f32 %v1977, %v1997
    %v2022 = vadd.f32 %v1978, %v1993
    %v2023 = vadd.f32 %v1979, %v1997
    %v2024 = vadd.f32 %v1980, %v1993
    %v2025 = vadd.f32 %v1981, %v1997
    %v2026 = vadd.f32 %v1982, %v1993
    %v2027 = vadd.f32 %v1983, %v1997
    %v2028 = vadd.f32 %v1984, %v1993
    %v2029 = vadd.f32 %v1985, %v1997
    %v2030 = vadd.f32 %v1986, %v1993
    %v2031 = vadd.f32 %v1987, %v1997
    %v2032 = vmax.f32 %v2000, 0.0
    %v2033 = vmax.f32 %v2001, 0.0
    %v2034 = vmax.f32 %v2002, 0.0
    %v2035 = vmax.f32 %v2003, 0.0
    %v2036 = vmax.f32 %v2004, 0.0
    %v2037 = vmax.f32 %v2005, 0.0
    %v2038 = vmax.f32 %v2006, 0.0
    %v2039 = vmax.f32 %v2007, 0.0
    %v2040 = vmax.f32 %v2008, 0.0
    %v2041 = vmax.f32 %v2009, 0.0
    %v2042 = vmax.f32 %v2010, 0.0
    %v2043 = vmax.f32 %v2011, 0.0
    %v2044 = vmax.f32 %v2012, 0.0
    %v2045 = vmax.f32 %v2013, 0.0
    %v2046 = vmax.f32 %v2014, 0.0
    %v2047 = vmax.f32 %v2015, 0.0
    %v2048 = vmax.f32 %v2016, 0.0
    %v2049 = vmax.f32 %v2017, 0.0
    %v2050 = vmax.f32 %v2018, 0.0
    %v2051 = vmax.f32 %v2019, 0.0
    %v2052 = vmax.f32 %v2020, 0.0
    %v2053 = vmax.f32 %v2021, 0.0
    %v2054 = vmax.f32 %v2022, 0.0
    %v2055 = vmax.f32 %v2023, 0.0
    %v2056 = vmax.f32 %v2024, 0.0
    %v2057 = vmax.f32 %v2025, 0.0
    %v2058 = vmax.f32 %v2026, 0.0
    %v2059 = vmax.f32 %v2027, 0.0
    %v2060 = vmax.f32 %v2028, 0.0
    %v2061 = vmax.f32 %v2029, 0.0
    %v2062 = vmax.f32 %v2030, 0.0
    %v2063 = vmax.f32 %v2031, 0.0
    %2064 = vst [vmem:[#allocation2] sm:$0xff] %v2032
    %2065 = vst [vmem:[#allocation2 + $0x8] sm:$0xff] %v2033
    %2066 = vst [vmem:[#allocation2 + $0x10] sm:$0xff] %v2034
    %2067 = vst [vmem:[#allocation2 + $0x18] sm:$0xff] %v2035
    %2068 = vst [vmem:[#allocation2 + $0x20] sm:$0xff] %v2036
    %2069 = vst [vmem:[#allocation2 + $0x28] sm:$0xff] %v2037
    %2070 = vst [vmem:[#allocation2 + $0x30] sm:$0xff] %v2038
    %2071 = vst [vmem:[#allocation2 + $0x38] sm:$0xff] %v2039
    %2072 = vst [vmem:[#allocation2 + $0x40] sm:$0xff] %v2040
    %2073 = vst [vmem:[#allocation2 + $0x48] sm:$0xff] %v2041
    %2074 = vst [vmem:[#allocation2 + $0x50] sm:$0xff] %v2042
    %2075 = vst [vmem:[#allocation2 + $0x58] sm:$0xff] %v2043
    %2076 = vst [vmem:[#allocation2 + $0x60] sm:$0xff] %v2044
    %2077 = vst [vmem:[#allocation2 + $0x68] sm:$0xff] %v2045
    %2078 = vst [vmem:[#allocation2 + $0x70] sm:$0xff] %v2046
    %2079 = vst [vmem:[#allocation2 + $0x78] sm:$0xff] %v2047
    %2080 = vst [vmem:[#allocation2 + $0x80] sm:$0xff] %v2048
    %2081 = vst [vmem:[#allocation2 + $0x88] sm:$0xff] %v2049
    %2082 = vst [vmem:[#allocation2 + $0x90] sm:$0xff] %v2050
    %2083 = vst [vmem:[#allocation2 + $0x98] sm:$0xff] %v2051
    %2084 = vst [vmem:[#allocation2 + $0xa0] sm:$0xff] %v2052
    %2085 = vst [vmem:[#allocation2 + $0xa8] sm:$0xff] %v2053
    %2086 = vst [vmem:[#allocation2 + $0xb0] sm:$0xff] %v2054
    %2087 = vst [vmem:[#allocation2 + $0xb8] sm:$0xff] %v2055
    %2088 = vst [vmem:[#allocation2 + $0xc0] sm:$0xff] %v2056
    %2089 = vst [vmem:[#allocation2 + $0xc8] sm:$0xff] %v2057
    %2090 = vst [vmem:[#allocation2 + $0xd0] sm:$0xff] %v2058
    %2091 = vst [vmem:[#allocation2 + $0xd8] sm:$0xff] %v2059
    %2092 = vst [vmem:[#allocation2 + $0xe0] sm:$0xff] %v2060
    %2093 = vst [vmem:[#allocation2 + $0xe8] sm:$0xff] %v2061
    %2094 = vst [vmem:[#allocation2 + $0xf0] sm:$0xff] %v2062
    %2095 = vst [vmem:[#allocation2 + $0xf8] sm:$0xff] %v2063
    // Predicated region
    $region18: #{conv_block_forward.3} parent=1 // pred_check
      _
    $region19: #{conv_block_forward.3} parent=1 // pred_check_branch
      %2097 = sbr.rel (0) target = $region21
    $region20: #{conv_block_forward.3} parent=1 // pred_region
      %s2099 = ssub.s32 4096, 4096
      %2100 = vsyncadd [#allocation3], %s2099
      %s2101 = sshll.u32 [#allocation2], 4
      %s2102 = int_to_ptr.vmem [resolvable:$true] %s2101
      %2107 = dma.vmem_to_hbm [thread:$0]  %s2102, 4096, %s4, [#allocation3], 256, 256, 16
    $region21: #{conv_block_forward.3} parent=1 // pred_fallthru
      _
    // Predicated region
    $region22: #{conv_block_forward.3} parent=1 // pred_check
      _
    $region23: #{conv_block_forward.3} parent=1 // pred_check_branch
      %2109 = sbr.rel (0) target = $region25
    $region24: #{conv_block_forward.3} parent=1 // pred_region
      %2110 = dma.done [#allocation3], 4096
    $region25: #{conv_block_forward.3} parent=1 // pred_fallthru
      _
    %2111 = vsyncpa [#allocation3], 1

// kernel: conv_block_forward.2
$region0: #{conv_block_forward.2}
  #allocation0 [shape = 'u32[]', space=smem, size = 0x4, offset = 0x4, fixed_abs, tag = 'smem constant byte address 0x4 - core index']
  #allocation1 [shape = 'u32[144,128]{1,0:T(1,128)}', space=vmem, size = 0x12000, scoped, tag = 'internal scratch']
  %s0 = inlined_call_operand.vmem [shape: f32[2,10,10,22], index: 0, kind: input, shape index: {}]
  %s1 = inlined_call_operand.vmem [shape: bf16[9,22,256], index: 1, kind: input, shape index: {}]
  %s2 = inlined_call_operand.vmem [shape: f32[1,256], index: 2, kind: output, shape index: {0}]
  %s3 = inlined_call_operand.vmem [shape: f32[1,256], index: 3, kind: output, shape index: {1}]
  %4 = xla_tuple %s2, %s3
  %s5 = sld [smem:[#allocation0]]
  $region30: #{conv_block_forward.2} parent=0
    _
  %s7 = ssub.s32 1, %s5
  %s8 = scalar_select 0, %s7, %s5
  // Predicated region
  $region2: #{conv_block_forward.2} parent=0 // pred_check
    _
  $region3: #{conv_block_forward.2} parent=0 // pred_check_branch
    %10 = sbr.rel (0) target = $region5
  $region4: #{conv_block_forward.2} parent=0 // pred_region
    _
  $region5: #{conv_block_forward.2} parent=0 // pred_fallthru
    _
  // Predicated region
  $region6: #{conv_block_forward.2} parent=0 // pred_check
    _
  $region7: #{conv_block_forward.2} parent=0 // pred_check_branch
    %12 = sbr.rel (0) target = $region9
  $region8: #{conv_block_forward.2} parent=0 // pred_region
    _
  $region9: #{conv_block_forward.2} parent=0 // pred_fallthru
    _
  %p14 = scmp.eq.s32.totalorder 0, 0
  // Predicated region
  $region10: #{conv_block_forward.2} parent=0 // pred_check
    %p15 = pneg %p14
  $region11: #{conv_block_forward.2} parent=0 // pred_check_branch
    %17 = sbr.rel (%p15) target = $region13
  $region12: #{conv_block_forward.2} parent=0 // pred_region
    %v18 = vlaneseq
    %vm19 = vcmp.ge.s32.totalorder %v18, 0
    %vm20 = vcmp.lt.s32.totalorder %v18, 256
    %vm21 = vmand %vm19, %vm20
    %22 = vst.msk [vmem:[%s2] sm:$0x3] %vm21, 0.0
    %23 = vst.msk [vmem:[%s3] sm:$0x3] %vm21, 0.0
  $region13: #{conv_block_forward.2} parent=0 // pred_fallthru
    _
  %v24 = vld [vmem:[%s0] sm:$0xff]
  %v25 = vld [vmem:[%s0 + $0x8] sm:$0x3]
  %v26 = vld [vmem:[%s0 + $0x10] sm:$0xff]
  %v27 = vld [vmem:[%s0 + $0x18] sm:$0x3]
  %v28 = vld [vmem:[%s0 + $0x20] sm:$0xff]
  %v29 = vld [vmem:[%s0 + $0x28] sm:$0x3]
  %v30 = vld [vmem:[%s0 + $0x30] sm:$0xff]
  %v31 = vld [vmem:[%s0 + $0x38] sm:$0x3]
  %v32 = vld [vmem:[%s0 + $0x40] sm:$0xff]
  %v33 = vld [vmem:[%s0 + $0x48] sm:$0x3]
  %v34 = vld [vmem:[%s0 + $0x50] sm:$0xff]
  %v35 = vld [vmem:[%s0 + $0x58] sm:$0x3]
  %v36 = vld [vmem:[%s0 + $0x60] sm:$0xff]
  %v37 = vld [vmem:[%s0 + $0x68] sm:$0x3]
  %v38 = vld [vmem:[%s0 + $0x70] sm:$0xff]
  %v39 = vld [vmem:[%s0 + $0x78] sm:$0x3]
  %v40 = vld [vmem:[%s0 + $0x80] sm:$0xff]
  %v41 = vld [vmem:[%s0 + $0x88] sm:$0x3]
  %v42 = vld [vmem:[%s0 + $0x90] sm:$0xff]
  %v43 = vld [vmem:[%s0 + $0x98] sm:$0x3]
  %v44 = vld [vmem:[%s0 + $0xa0] sm:$0xff]
  %v45 = vld [vmem:[%s0 + $0xa8] sm:$0x3]
  %v46 = vld [vmem:[%s0 + $0xb0] sm:$0xff]
  %v47 = vld [vmem:[%s0 + $0xb8] sm:$0x3]
  %v48 = vld [vmem:[%s0 + $0xc0] sm:$0xff]
  %v49 = vld [vmem:[%s0 + $0xc8] sm:$0x3]
  %v50 = vld [vmem:[%s0 + $0xd0] sm:$0xff]
  %v51 = vld [vmem:[%s0 + $0xd8] sm:$0x3]
  %v52 = vld [vmem:[%s0 + $0xe0] sm:$0xff]
  %v53 = vld [vmem:[%s0 + $0xe8] sm:$0x3]
  %v54 = vld [vmem:[%s0 + $0xf0] sm:$0xff]
  %v55 = vld [vmem:[%s0 + $0xf8] sm:$0x3]
  %v56 = vld [vmem:[%s0 + $0x100] sm:$0xff]
  %v57 = vld [vmem:[%s0 + $0x108] sm:$0x3]
  %v58 = vld [vmem:[%s0 + $0x110] sm:$0xff]
  %v59 = vld [vmem:[%s0 + $0x118] sm:$0x3]
  %v60 = vld [vmem:[%s0 + $0x120] sm:$0xff]
  %v61 = vld [vmem:[%s0 + $0x128] sm:$0x3]
  %v62 = vld [vmem:[%s0 + $0x130] sm:$0xff]
  %v63 = vld [vmem:[%s0 + $0x138] sm:$0x3]
  %v64 = vpack.c.bf16 %v26, %v24
  %v65 = vpack.c.bf16 %v30, %v28
  %v66 = vpack.c.bf16 %v34, %v32
  %v67 = vpack.c.bf16 %v38, %v36
  %v68 = vpack.c.bf16 %v46, %v44
  %v69 = vpack.c.bf16 %v50, %v48
  %v70 = vpack.c.bf16 %v54, %v52
  %v71 = vpack.c.bf16 %v58, %v56
  %v72 = vld [vmem:[%s1] sm:$0xff]
  %v73 = vld [vmem:[%s1 + $0x8] sm:$0xff]
  %v74 = vld [vmem:[%s1 + $0x10] sm:$0x77]
  %vm107 = vcmask 1046528
  %v108 = vrot.slane %v24, 1
  %v109 = vrot.slane %v25, 1
  %v110 = vsel %vm107, %v108, %v109
  %v111 = vrot.slane %v26, 1
  %v112 = vrot.slane %v27, 1
  %v113 = vsel %vm107, %v111, %v112
  %v114 = vrot.slane %v28, 1
  %v115 = vrot.slane %v29, 1
  %v116 = vsel %vm107, %v114, %v115
  %v117 = vrot.slane %v30, 1
  %v118 = vrot.slane %v31, 1
  %v119 = vsel %vm107, %v117, %v118
  %v120 = vrot.slane %v32, 1
  %v121 = vrot.slane %v33, 1
  %v122 = vsel %vm107, %v120, %v121
  %v123 = vrot.slane %v34, 1
  %v124 = vrot.slane %v35, 1
  %v125 = vsel %vm107, %v123, %v124
  %v126 = vrot.slane %v36, 1
  %v127 = vrot.slane %v37, 1
  %v128 = vsel %vm107, %v126, %v127
  %v129 = vrot.slane %v38, 1
  %v130 = vrot.slane %v39, 1
  %v131 = vsel %vm107, %v129, %v130
  %v132 = vrot.slane %v44, 1
  %v133 = vrot.slane %v45, 1
  %v134 = vsel %vm107, %v132, %v133
  %v135 = vrot.slane %v46, 1
  %v136 = vrot.slane %v47, 1
  %v137 = vsel %vm107, %v135, %v136
  %v138 = vrot.slane %v48, 1
  %v139 = vrot.slane %v49, 1
  %v140 = vsel %vm107, %v138, %v139
  %v141 = vrot.slane %v50, 1
  %v142 = vrot.slane %v51, 1
  %v143 = vsel %vm107, %v141, %v142
  %v144 = vrot.slane %v52, 1
  %v145 = vrot.slane %v53, 1
  %v146 = vsel %vm107, %v144, %v145
  %v147 = vrot.slane %v54, 1
  %v148 = vrot.slane %v55, 1
  %v149 = vsel %vm107, %v147, %v148
  %v150 = vrot.slane %v56, 1
  %v151 = vrot.slane %v57, 1
  %v152 = vsel %vm107, %v150, %v151
  %v153 = vrot.slane %v58, 1
  %v154 = vrot.slane %v59, 1
  %v155 = vsel %vm107, %v153, %v154
  %v172 = vpack.c.bf16 %v113, %v110
  %v173 = vpack.c.bf16 %v119, %v116
  %v174 = vpack.c.bf16 %v125, %v122
  %v175 = vpack.c.bf16 %v131, %v128
  %v176 = vpack.c.bf16 %v137, %v134
  %v177 = vpack.c.bf16 %v143, %v140
  %v178 = vpack.c.bf16 %v149, %v146
  %v179 = vpack.c.bf16 %v155, %v152
  %s180 = scalar_lea.vmem %s1, 24
  %v181 = vld [vmem:[%s180] sm:$0xff]
  %v182 = vld [vmem:[%s180 + $0x8] sm:$0xff]
  %v183 = vld [vmem:[%s180 + $0x10] sm:$0x77]
  %v187 = vunpack.c.l.b16 %v181
  %v188 = vunpack.c.h.b16 %v181
  %v189 = vunpack.c.l.b16 %v182
  %v190 = vunpack.c.h.b16 %v182
  %v191 = vunpack.c.l.b16 %v183
  %v192 = vunpack.c.h.b16 %v183
  %v193 = vpack.c.b16 %v189, %v187
  %v194 = vpack.c.b16 %v190, %v188
  %v195 = vpack.c.b16 %v191, %v191
  %v196 = vpack.c.b16 %v192, %v192
  %vm199 = vcmask 179200
  %v201 = vsel %vm199, %v172, 0
  %v204 = vsel %vm199, %v173, 0
  %v207 = vsel %vm199, %v174, 0
  %v210 = vsel %vm199, %v175, 0
  %v213 = vsel %vm199, %v176, 0
  %v216 = vsel %vm199, %v177, 0
  %v219 = vsel %vm199, %v178, 0
  %v222 = vsel %vm199, %v179, 0
  %vm224 = vcmask 1042432
  %v226 = vsel %vm224, %v195, 0
  %v229 = vsel %vm224, %v196, 0
  %231 = vmatprep.subr.bf16.mxu0 0
  %232 = vmatpush1.bf16.msra.mxu0 0
  %233 = vmatprep.subr.bf16.mxu0 0
  %234 = vmatpush1.bf16.msra.mxu0 0
  %235 = vmatprep.subr.bf16.mxu0 0
  %236 = vmatpush1.bf16.msra.mxu0 0
  %237 = vmatprep.subr.bf16.mxu0 0
  %238 = vmatpush1.bf16.msra.mxu0 0
  %239 = vmatprep.subr.bf16.mxu0 0
  %240 = vmatpush1.bf16.msra.mxu0 0
  %241 = vmatprep.subr.bf16.mxu0 0
  %242 = vmatpush1.bf16.msra.mxu0 0
  %243 = vmatprep.subr.bf16.mxu0 %v229
  %244 = vmatpush1.bf16.msra.mxu0 %v226
  %245 = vmatprep.subr.bf16.mxu0 %v194
  %246 = vmatpush1.bf16.msra.mxu0 %v193
  %247 = vmatprep.subr.bf16.mxu0 0
  %248 = vmatpush2.bf16.msra.mxu0 0
  %249 = vmatprep.subr.bf16.mxu0 0
  %250 = vmatpush2.bf16.msra.mxu0 0
  %251 = vmatprep.subr.bf16.mxu0 0
  %252 = vmatpush2.bf16.msra.mxu0 0
  %253 = vmatprep.subr.bf16.mxu0 0
  %254 = vmatpush2.bf16.msra.mxu0 0
  %255 = vmatprep.subr.bf16.mxu0 0
  %256 = vmatpush2.bf16.msra.mxu0 0
  %257 = vmatprep.subr.bf16.mxu0 0
  %258 = vmatpush2.bf16.msra.mxu0 0
  %259 = vmatprep.subr.bf16.mxu0 0
  %260 = vmatpush2.bf16.msra.mxu0 0
  %261 = vmatprep.subr.bf16.mxu0 0
  %262 = vmatpush2.bf16.msra.mxu0 0
  %263 = vmatprep.mubr.bf16.mxu0 0
  %264 = vmatmul.mubr.bf16.gmra.mxu0 %v201
  %v265 = vpop.f32.mrf.mxu0
  %v266 = vadd.f32 0.0, %v265
  %v267 = vpop.f32.mrf.mxu0
  %v268 = vadd.f32 0.0, %v267
  %v269 = vpop.f32.mrf.mxu0
  %v270 = vadd.f32 0.0, %v269
  %v271 = vpop.f32.mrf.mxu0
  %v272 = vadd.f32 0.0, %v271
  %273 = vmatprep.mubr.bf16.mxu0 0
  %274 = vmatmul.mubr.bf16.gmra.mxu0 %v204
  %v275 = vpop.f32.mrf.mxu0
  %v276 = vadd.f32 0.0, %v275
  %v277 = vpop.f32.mrf.mxu0
  %v278 = vadd.f32 0.0, %v277
  %v279 = vpop.f32.mrf.mxu0
  %v280 = vadd.f32 0.0, %v279
  %v281 = vpop.f32.mrf.mxu0
  %v282 = vadd.f32 0.0, %v281
  %283 = vmatprep.mubr.bf16.mxu0 0
  %284 = vmatmul.mubr.bf16.gmra.mxu0 %v207
  %v285 = vpop.f32.mrf.mxu0
  %v286 = vadd.f32 0.0, %v285
  %v287 = vpop.f32.mrf.mxu0
  %v288 = vadd.f32 0.0, %v287
  %v289 = vpop.f32.mrf.mxu0
  %v290 = vadd.f32 0.0, %v289
  %v291 = vpop.f32.mrf.mxu0
  %v292 = vadd.f32 0.0, %v291
  %293 = vmatprep.mubr.bf16.mxu0 0
  %294 = vmatmul.mubr.bf16.gmra.mxu0 %v210
  %v295 = vpop.f32.mrf.mxu0
  %v296 = vadd.f32 0.0, %v295
  %v297 = vpop.f32.mrf.mxu0
  %v298 = vadd.f32 0.0, %v297
  %v299 = vpop.f32.mrf.mxu0
  %v300 = vadd.f32 0.0, %v299
  %v301 = vpop.f32.mrf.mxu0
  %v302 = vadd.f32 0.0, %v301
  %303 = vmatprep.mubr.bf16.mxu0 0
  %304 = vmatmul.mubr.bf16.gmra.mxu0 %v213
  %v305 = vpop.f32.mrf.mxu0
  %v306 = vadd.f32 0.0, %v305
  %v307 = vpop.f32.mrf.mxu0
  %v308 = vadd.f32 0.0, %v307
  %v309 = vpop.f32.mrf.mxu0
  %v310 = vadd.f32 0.0, %v309
  %v311 = vpop.f32.mrf.mxu0
  %v312 = vadd.f32 0.0, %v311
  %313 = vmatprep.mubr.bf16.mxu0 0
  %314 = vmatmul.mubr.bf16.gmra.mxu0 %v216
  %v315 = vpop.f32.mrf.mxu0
  %v316 = vadd.f32 0.0, %v315
  %v317 = vpop.f32.mrf.mxu0
  %v318 = vadd.f32 0.0, %v317
  %v319 = vpop.f32.mrf.mxu0
  %v320 = vadd.f32 0.0, %v319
  %v321 = vpop.f32.mrf.mxu0
  %v322 = vadd.f32 0.0, %v321
  %323 = vmatprep.mubr.bf16.mxu0 0
  %324 = vmatmul.mubr.bf16.gmra.mxu0 %v219
  %v325 = vpop.f32.mrf.mxu0
  %v326 = vadd.f32 0.0, %v325
  %v327 = vpop.f32.mrf.mxu0
  %v328 = vadd.f32 0.0, %v327
  %v329 = vpop.f32.mrf.mxu0
  %v330 = vadd.f32 0.0, %v329
  %v331 = vpop.f32.mrf.mxu0
  %v332 = vadd.f32 0.0, %v331
  %333 = vmatprep.mubr.bf16.mxu0 0
  %334 = vmatmul.mubr.bf16.gmra.mxu0 %v222
  %v335 = vpop.f32.mrf.mxu0
  %v336 = vadd.f32 0.0, %v335
  %v337 = vpop.f32.mrf.mxu0
  %v338 = vadd.f32 0.0, %v337
  %v339 = vpop.f32.mrf.mxu0
  %v340 = vadd.f32 0.0, %v339
  %v341 = vpop.f32.mrf.mxu0
  %v342 = vadd.f32 0.0, %v341
  %343 = vdwg.mxu0
  %v347 = vunpack.c.l.b16 %v72
  %v348 = vunpack.c.h.b16 %v72
  %v349 = vunpack.c.l.b16 %v73
  %v350 = vunpack.c.h.b16 %v73
  %v351 = vunpack.c.l.b16 %v74
  %v352 = vunpack.c.h.b16 %v74
  %v353 = vpack.c.b16 %v349, %v347
  %v354 = vpack.c.b16 %v350, %v348
  %v355 = vpack.c.b16 %v351, %v351
  %v356 = vpack.c.b16 %v352, %v352
  %v360 = vsel %vm199, %v64, 0
  %v363 = vsel %vm199, %v65, 0
  %v366 = vsel %vm199, %v66, 0
  %v369 = vsel %vm199, %v67, 0
  %v372 = vsel %vm199, %v68, 0
  %v375 = vsel %vm199, %v69, 0
  %v378 = vsel %vm199, %v70, 0
  %v381 = vsel %vm199, %v71, 0
  %v384 = vsel %vm224, %v355, 0
  %v387 = vsel %vm224, %v356, 0
  %389 = vmatprep.subr.bf16.mxu0 0
  %390 = vmatpush1.bf16.msra.mxu0 0
  %391 = vmatprep.subr.bf16.mxu0 0
  %392 = vmatpush1.bf16.msra.mxu0 0
  %393 = vmatprep.subr.bf16.mxu0 0
  %394 = vmatpush1.bf16.msra.mxu0 0
  %395 = vmatprep.subr.bf16.mxu0 0
  %396 = vmatpush1.bf16.msra.mxu0 0
  %397 = vmatprep.subr.bf16.mxu0 0
  %398 = vmatpush1.bf16.msra.mxu0 0
  %399 = vmatprep.subr.bf16.mxu0 0
  %400 = vmatpush1.bf16.msra.mxu0 0
  %401 = vmatprep.subr.bf16.mxu0 %v387
  %402 = vmatpush1.bf16.msra.mxu0 %v384
  %403 = vmatprep.subr.bf16.mxu0 %v354
  %404 = vmatpush1.bf16.msra.mxu0 %v353
  %405 = vmatprep.subr.bf16.mxu0 0
  %406 = vmatpush2.bf16.msra.mxu0 0
  %407 = vmatprep.subr.bf16.mxu0 0
  %408 = vmatpush2.bf16.msra.mxu0 0
  %409 = vmatprep.subr.bf16.mxu0 0
  %410 = vmatpush2.bf16.msra.mxu0 0
  %411 = vmatprep.subr.bf16.mxu0 0
  %412 = vmatpush2.bf16.msra.mxu0 0
  %413 = vmatprep.subr.bf16.mxu0 0
  %414 = vmatpush2.bf16.msra.mxu0 0
  %415 = vmatprep.subr.bf16.mxu0 0
  %416 = vmatpush2.bf16.msra.mxu0 0
  %417 = vmatprep.subr.bf16.mxu0 0
  %418 = vmatpush2.bf16.msra.mxu0 0
  %419 = vmatprep.subr.bf16.mxu0 0
  %420 = vmatpush2.bf16.msra.mxu0 0
  %421 = vmatprep.mubr.bf16.mxu0 0
  %422 = vmatmul.mubr.bf16.gmra.mxu0 %v360
  %v423 = vpop.f32.mrf.mxu0
  %v424 = vadd.f32 %v266, %v423
  %v425 = vpop.f32.mrf.mxu0
  %v426 = vadd.f32 %v268, %v425
  %v427 = vpop.f32.mrf.mxu0
  %v428 = vadd.f32 %v270, %v427
  %v429 = vpop.f32.mrf.mxu0
  %v430 = vadd.f32 %v272, %v429
  %431 = vmatprep.mubr.bf16.mxu0 0
  %432 = vmatmul.mubr.bf16.gmra.mxu0 %v363
  %v433 = vpop.f32.mrf.mxu0
  %v434 = vadd.f32 %v276, %v433
  %v435 = vpop.f32.mrf.mxu0
  %v436 = vadd.f32 %v278, %v435
  %v437 = vpop.f32.mrf.mxu0
  %v438 = vadd.f32 %v280, %v437
  %v439 = vpop.f32.mrf.mxu0
  %v440 = vadd.f32 %v282, %v439
  %441 = vmatprep.mubr.bf16.mxu0 0
  %442 = vmatmul.mubr.bf16.gmra.mxu0 %v366
  %v443 = vpop.f32.mrf.mxu0
  %v444 = vadd.f32 %v286, %v443
  %v445 = vpop.f32.mrf.mxu0
  %v446 = vadd.f32 %v288, %v445
  %v447 = vpop.f32.mrf.mxu0
  %v448 = vadd.f32 %v290, %v447
  %v449 = vpop.f32.mrf.mxu0
  %v450 = vadd.f32 %v292, %v449
  %451 = vmatprep.mubr.bf16.mxu0 0
  %452 = vmatmul.mubr.bf16.gmra.mxu0 %v369
  %v453 = vpop.f32.mrf.mxu0
  %v454 = vadd.f32 %v296, %v453
  %v455 = vpop.f32.mrf.mxu0
  %v456 = vadd.f32 %v298, %v455
  %v457 = vpop.f32.mrf.mxu0
  %v458 = vadd.f32 %v300, %v457
  %v459 = vpop.f32.mrf.mxu0
  %v460 = vadd.f32 %v302, %v459
  %461 = vmatprep.mubr.bf16.mxu0 0
  %462 = vmatmul.mubr.bf16.gmra.mxu0 %v372
  %v463 = vpop.f32.mrf.mxu0
  %v464 = vadd.f32 %v306, %v463
  %v465 = vpop.f32.mrf.mxu0
  %v466 = vadd.f32 %v308, %v465
  %v467 = vpop.f32.mrf.mxu0
  %v468 = vadd.f32 %v310, %v467
  %v469 = vpop.f32.mrf.mxu0
  %v470 = vadd.f32 %v312, %v469
  %471 = vmatprep.mubr.bf16.mxu0 0
  %472 = vmatmul.mubr.bf16.gmra.mxu0 %v375
  %v473 = vpop.f32.mrf.mxu0
  %v474 = vadd.f32 %v316, %v473
  %v475 = vpop.f32.mrf.mxu0
  %v476 = vadd.f32 %v318, %v475
  %v477 = vpop.f32.mrf.mxu0
  %v478 = vadd.f32 %v320, %v477
  %v479 = vpop.f32.mrf.mxu0
  %v480 = vadd.f32 %v322, %v479
  %481 = vmatprep.mubr.bf16.mxu0 0
  %482 = vmatmul.mubr.bf16.gmra.mxu0 %v378
  %v483 = vpop.f32.mrf.mxu0
  %v484 = vadd.f32 %v326, %v483
  %v485 = vpop.f32.mrf.mxu0
  %v486 = vadd.f32 %v328, %v485
  %v487 = vpop.f32.mrf.mxu0
  %v488 = vadd.f32 %v330, %v487
  %v489 = vpop.f32.mrf.mxu0
  %v490 = vadd.f32 %v332, %v489
  %491 = vmatprep.mubr.bf16.mxu0 0
  %492 = vmatmul.mubr.bf16.gmra.mxu0 %v381
  %v493 = vpop.f32.mrf.mxu0
  %v494 = vadd.f32 %v336, %v493
  %v495 = vpop.f32.mrf.mxu0
  %v496 = vadd.f32 %v338, %v495
  %v497 = vpop.f32.mrf.mxu0
  %v498 = vadd.f32 %v340, %v497
  %v499 = vpop.f32.mrf.mxu0
  %v500 = vadd.f32 %v342, %v499
  %501 = vdwg.mxu0
  %vm502 = vcmask 1045504
  %v503 = vrot.slane %v24, 2
  %v504 = vrot.slane %v25, 2
  %v505 = vsel %vm502, %v503, %v504
  %v506 = vrot.slane %v26, 2
  %v507 = vrot.slane %v27, 2
  %v508 = vsel %vm502, %v506, %v507
  %v509 = vrot.slane %v28, 2
  %v510 = vrot.slane %v29, 2
  %v511 = vsel %vm502, %v509, %v510
  %v512 = vrot.slane %v30, 2
  %v513 = vrot.slane %v31, 2
  %v514 = vsel %vm502, %v512, %v513
  %v515 = vrot.slane %v32, 2
  %v516 = vrot.slane %v33, 2
  %v517 = vsel %vm502, %v515, %v516
  %v518 = vrot.slane %v34, 2
  %v519 = vrot.slane %v35, 2
  %v520 = vsel %vm502, %v518, %v519
  %v521 = vrot.slane %v36, 2
  %v522 = vrot.slane %v37, 2
  %v523 = vsel %vm502, %v521, %v522
  %v524 = vrot.slane %v38, 2
  %v525 = vrot.slane %v39, 2
  %v526 = vsel %vm502, %v524, %v525
  %v527 = vrot.slane %v44, 2
  %v528 = vrot.slane %v45, 2
  %v529 = vsel %vm502, %v527, %v528
  %v530 = vrot.slane %v46, 2
  %v531 = vrot.slane %v47, 2
  %v532 = vsel %vm502, %v530, %v531
  %v533 = vrot.slane %v48, 2
  %v534 = vrot.slane %v49, 2
  %v535 = vsel %vm502, %v533, %v534
  %v536 = vrot.slane %v50, 2
  %v537 = vrot.slane %v51, 2
  %v538 = vsel %vm502, %v536, %v537
  %v539 = vrot.slane %v52, 2
  %v540 = vrot.slane %v53, 2
  %v541 = vsel %vm502, %v539, %v540
  %v542 = vrot.slane %v54, 2
  %v543 = vrot.slane %v55, 2
  %v544 = vsel %vm502, %v542, %v543
  %v545 = vrot.slane %v56, 2
  %v546 = vrot.slane %v57, 2
  %v547 = vsel %vm502, %v545, %v546
  %v548 = vrot.slane %v58, 2
  %v549 = vrot.slane %v59, 2
  %v550 = vsel %vm502, %v548, %v549
  %v567 = vpack.c.bf16 %v508, %v505
  %v568 = vpack.c.bf16 %v514, %v511
  %v569 = vpack.c.bf16 %v520, %v517
  %v570 = vpack.c.bf16 %v526, %v523
  %v571 = vpack.c.bf16 %v532, %v529
  %v572 = vpack.c.bf16 %v538, %v535
  %v573 = vpack.c.bf16 %v544, %v541
  %v574 = vpack.c.bf16 %v550, %v547
  %s575 = scalar_lea.vmem %s1, 48
  %v576 = vld [vmem:[%s575] sm:$0xff]
  %v577 = vld [vmem:[%s575 + $0x8] sm:$0xff]
  %v578 = vld [vmem:[%s575 + $0x10] sm:$0x77]
  %v582 = vunpack.c.l.b16 %v576
  %v583 = vunpack.c.h.b16 %v576
  %v584 = vunpack.c.l.b16 %v577
  %v585 = vunpack.c.h.b16 %v577
  %v586 = vunpack.c.l.b16 %v578
  %v587 = vunpack.c.h.b16 %v578
  %v588 = vpack.c.b16 %v584, %v582
  %v589 = vpack.c.b16 %v585, %v583
  %v590 = vpack.c.b16 %v586, %v586
  %v591 = vpack.c.b16 %v587, %v587
  %v595 = vsel %vm199, %v567, 0
  %v598 = vsel %vm199, %v568, 0
  %v601 = vsel %vm199, %v569, 0
  %v604 = vsel %vm199, %v570, 0
  %v607 = vsel %vm199, %v571, 0
  %v610 = vsel %vm199, %v572, 0
  %v613 = vsel %vm199, %v573, 0
  %v616 = vsel %vm199, %v574, 0
  %v619 = vsel %vm224, %v590, 0
  %v622 = vsel %vm224, %v591, 0
  %624 = vmatprep.subr.bf16.mxu0 0
  %625 = vmatpush1.bf16.msra.mxu0 0
  %626 = vmatprep.subr.bf16.mxu0 0
  %627 = vmatpush1.bf16.msra.mxu0 0
  %628 = vmatprep.subr.bf16.mxu0 0
  %629 = vmatpush1.bf16.msra.mxu0 0
  %630 = vmatprep.subr.bf16.mxu0 0
  %631 = vmatpush1.bf16.msra.mxu0 0
  %632 = vmatprep.subr.bf16.mxu0 0
  %633 = vmatpush1.bf16.msra.mxu0 0
  %634 = vmatprep.subr.bf16.mxu0 0
  %635 = vmatpush1.bf16.msra.mxu0 0
  %636 = vmatprep.subr.bf16.mxu0 %v622
  %637 = vmatpush1.bf16.msra.mxu0 %v619
  %638 = vmatprep.subr.bf16.mxu0 %v589
  %639 = vmatpush1.bf16.msra.mxu0 %v588
  %640 = vmatprep.subr.bf16.mxu0 0
  %641 = vmatpush2.bf16.msra.mxu0 0
  %642 = vmatprep.subr.bf16.mxu0 0
  %643 = vmatpush2.bf16.msra.mxu0 0
  %644 = vmatprep.subr.bf16.mxu0 0
  %645 = vmatpush2.bf16.msra.mxu0 0
  %646 = vmatprep.subr.bf16.mxu0 0
  %647 = vmatpush2.bf16.msra.mxu0 0
  %648 = vmatprep.subr.bf16.mxu0 0
  %649 = vmatpush2.bf16.msra.mxu0 0
  %650 = vmatprep.subr.bf16.mxu0 0
  %651 = vmatpush2.bf16.msra.mxu0 0
  %652 = vmatprep.subr.bf16.mxu0 0
  %653 = vmatpush2.bf16.msra.mxu0 0
  %654 = vmatprep.subr.bf16.mxu0 0
  %655 = vmatpush2.bf16.msra.mxu0 0
  %656 = vmatprep.mubr.bf16.mxu0 0
  %657 = vmatmul.mubr.bf16.gmra.mxu0 %v595
  %v658 = vpop.f32.mrf.mxu0
  %v659 = vadd.f32 0.0, %v658
  %v660 = vpop.f32.mrf.mxu0
  %v661 = vadd.f32 0.0, %v660
  %v662 = vpop.f32.mrf.mxu0
  %v663 = vadd.f32 0.0, %v662
  %v664 = vpop.f32.mrf.mxu0
  %v665 = vadd.f32 0.0, %v664
  %666 = vmatprep.mubr.bf16.mxu0 0
  %667 = vmatmul.mubr.bf16.gmra.mxu0 %v598
  %v668 = vpop.f32.mrf.mxu0
  %v669 = vadd.f32 0.0, %v668
  %v670 = vpop.f32.mrf.mxu0
  %v671 = vadd.f32 0.0, %v670
  %v672 = vpop.f32.mrf.mxu0
  %v673 = vadd.f32 0.0, %v672
  %v674 = vpop.f32.mrf.mxu0
  %v675 = vadd.f32 0.0, %v674
  %676 = vmatprep.mubr.bf16.mxu0 0
  %677 = vmatmul.mubr.bf16.gmra.mxu0 %v601
  %v678 = vpop.f32.mrf.mxu0
  %v679 = vadd.f32 0.0, %v678
  %v680 = vpop.f32.mrf.mxu0
  %v681 = vadd.f32 0.0, %v680
  %v682 = vpop.f32.mrf.mxu0
  %v683 = vadd.f32 0.0, %v682
  %v684 = vpop.f32.mrf.mxu0
  %v685 = vadd.f32 0.0, %v684
  %686 = vmatprep.mubr.bf16.mxu0 0
  %687 = vmatmul.mubr.bf16.gmra.mxu0 %v604
  %v688 = vpop.f32.mrf.mxu0
  %v689 = vadd.f32 0.0, %v688
  %v690 = vpop.f32.mrf.mxu0
  %v691 = vadd.f32 0.0, %v690
  %v692 = vpop.f32.mrf.mxu0
  %v693 = vadd.f32 0.0, %v692
  %v694 = vpop.f32.mrf.mxu0
  %v695 = vadd.f32 0.0, %v694
  %696 = vmatprep.mubr.bf16.mxu0 0
  %697 = vmatmul.mubr.bf16.gmra.mxu0 %v607
  %v698 = vpop.f32.mrf.mxu0
  %v699 = vadd.f32 0.0, %v698
  %v700 = vpop.f32.mrf.mxu0
  %v701 = vadd.f32 0.0, %v700
  %v702 = vpop.f32.mrf.mxu0
  %v703 = vadd.f32 0.0, %v702
  %v704 = vpop.f32.mrf.mxu0
  %v705 = vadd.f32 0.0, %v704
  %706 = vmatprep.mubr.bf16.mxu0 0
  %707 = vmatmul.mubr.bf16.gmra.mxu0 %v610
  %v708 = vpop.f32.mrf.mxu0
  %v709 = vadd.f32 0.0, %v708
  %v710 = vpop.f32.mrf.mxu0
  %v711 = vadd.f32 0.0, %v710
  %v712 = vpop.f32.mrf.mxu0
  %v713 = vadd.f32 0.0, %v712
  %v714 = vpop.f32.mrf.mxu0
  %v715 = vadd.f32 0.0, %v714
  %716 = vmatprep.mubr.bf16.mxu0 0
  %717 = vmatmul.mubr.bf16.gmra.mxu0 %v613
  %v718 = vpop.f32.mrf.mxu0
  %v719 = vadd.f32 0.0, %v718
  %v720 = vpop.f32.mrf.mxu0
  %v721 = vadd.f32 0.0, %v720
  %v722 = vpop.f32.mrf.mxu0
  %v723 = vadd.f32 0.0, %v722
  %v724 = vpop.f32.mrf.mxu0
  %v725 = vadd.f32 0.0, %v724
  %726 = vmatprep.mubr.bf16.mxu0 0
  %727 = vmatmul.mubr.bf16.gmra.mxu0 %v616
  %v728 = vpop.f32.mrf.mxu0
  %v729 = vadd.f32 0.0, %v728
  %v730 = vpop.f32.mrf.mxu0
  %v731 = vadd.f32 0.0, %v730
  %v732 = vpop.f32.mrf.mxu0
  %v733 = vadd.f32 0.0, %v732
  %v734 = vpop.f32.mrf.mxu0
  %v735 = vadd.f32 0.0, %v734
  %736 = vdwg.mxu0
  %v737 = vadd.f32 %v424, %v659
  %v738 = vadd.f32 %v426, %v661
  %v739 = vadd.f32 %v428, %v663
  %v740 = vadd.f32 %v430, %v665
  %v741 = vadd.f32 %v434, %v669
  %v742 = vadd.f32 %v436, %v671
  %v743 = vadd.f32 %v438, %v673
  %v744 = vadd.f32 %v440, %v675
  %v745 = vadd.f32 %v444, %v679
  %v746 = vadd.f32 %v446, %v681
  %v747 = vadd.f32 %v448, %v683
  %v748 = vadd.f32 %v450, %v685
  %v749 = vadd.f32 %v454, %v689
  %v750 = vadd.f32 %v456, %v691
  %v751 = vadd.f32 %v458, %v693
  %v752 = vadd.f32 %v460, %v695
  %v753 = vadd.f32 %v464, %v699
  %v754 = vadd.f32 %v466, %v701
  %v755 = vadd.f32 %v468, %v703
  %v756 = vadd.f32 %v470, %v705
  %v757 = vadd.f32 %v474, %v709
  %v758 = vadd.f32 %v476, %v711
  %v759 = vadd.f32 %v478, %v713
  %v760 = vadd.f32 %v480, %v715
  %v761 = vadd.f32 %v484, %v719
  %v762 = vadd.f32 %v486, %v721
  %v763 = vadd.f32 %v488, %v723
  %v764 = vadd.f32 %v490, %v725
  %v765 = vadd.f32 %v494, %v729
  %v766 = vadd.f32 %v496, %v731
  %v767 = vadd.f32 %v498, %v733
  %v768 = vadd.f32 %v500, %v735
  %v769 = vpack.c.bf16 %v28, %v26
  %v770 = vpack.c.bf16 %v32, %v30
  %v771 = vpack.c.bf16 %v36, %v34
  %v772 = vpack.c.bf16 %v40, %v38
  %v773 = vpack.c.bf16 %v48, %v46
  %v774 = vpack.c.bf16 %v52, %v50
  %v775 = vpack.c.bf16 %v56, %v54
  %v776 = vpack.c.bf16 %v60, %v58
  %s777 = scalar_lea.vmem %s1, 72
  %v778 = vld [vmem:[%s777] sm:$0xff]
  %v779 = vld [vmem:[%s777 + $0x8] sm:$0xff]
  %v780 = vld [vmem:[%s777 + $0x10] sm:$0x77]
  %v784 = vunpack.c.l.b16 %v778
  %v785 = vunpack.c.h.b16 %v778
  %v786 = vunpack.c.l.b16 %v779
  %v787 = vunpack.c.h.b16 %v779
  %v788 = vunpack.c.l.b16 %v780
  %v789 = vunpack.c.h.b16 %v780
  %v790 = vpack.c.b16 %v786, %v784
  %v791 = vpack.c.b16 %v787, %v785
  %v792 = vpack.c.b16 %v788, %v788
  %v793 = vpack.c.b16 %v789, %v789
  %v797 = vsel %vm199, %v769, 0
  %v800 = vsel %vm199, %v770, 0
  %v803 = vsel %vm199, %v771, 0
  %v806 = vsel %vm199, %v772, 0
  %v809 = vsel %vm199, %v773, 0
  %v812 = vsel %vm199, %v774, 0
  %v815 = vsel %vm199, %v775, 0
  %v818 = vsel %vm199, %v776, 0
  %v821 = vsel %vm224, %v792, 0
  %v824 = vsel %vm224, %v793, 0
  %826 = vmatprep.subr.bf16.mxu0 0
  %827 = vmatpush1.bf16.msra.mxu0 0
  %828 = vmatprep.subr.bf16.mxu0 0
  %829 = vmatpush1.bf16.msra.mxu0 0
  %830 = vmatprep.subr.bf16.mxu0 0
  %831 = vmatpush1.bf16.msra.mxu0 0
  %832 = vmatprep.subr.bf16.mxu0 0
  %833 = vmatpush1.bf16.msra.mxu0 0
  %834 = vmatprep.subr.bf16.mxu0 0
  %835 = vmatpush1.bf16.msra.mxu0 0
  %836 = vmatprep.subr.bf16.mxu0 0
  %837 = vmatpush1.bf16.msra.mxu0 0
  %838 = vmatprep.subr.bf16.mxu0 %v824
  %839 = vmatpush1.bf16.msra.mxu0 %v821
  %840 = vmatprep.subr.bf16.mxu0 %v791
  %841 = vmatpush1.bf16.msra.mxu0 %v790
  %842 = vmatprep.subr.bf16.mxu0 0
  %843 = vmatpush2.bf16.msra.mxu0 0
  %844 = vmatprep.subr.bf16.mxu0 0
  %845 = vmatpush2.bf16.msra.mxu0 0
  %846 = vmatprep.subr.bf16.mxu0 0
  %847 = vmatpush2.bf16.msra.mxu0 0
  %848 = vmatprep.subr.bf16.mxu0 0
  %849 = vmatpush2.bf16.msra.mxu0 0
  %850 = vmatprep.subr.bf16.mxu0 0
  %851 = vmatpush2.bf16.msra.mxu0 0
  %852 = vmatprep.subr.bf16.mxu0 0
  %853 = vmatpush2.bf16.msra.mxu0 0
  %854 = vmatprep.subr.bf16.mxu0 0
  %855 = vmatpush2.bf16.msra.mxu0 0
  %856 = vmatprep.subr.bf16.mxu0 0
  %857 = vmatpush2.bf16.msra.mxu0 0
  %858 = vmatprep.mubr.bf16.mxu0 0
  %859 = vmatmul.mubr.bf16.gmra.mxu0 %v797
  %v860 = vpop.f32.mrf.mxu0
  %v861 = vadd.f32 0.0, %v860
  %v862 = vpop.f32.mrf.mxu0
  %v863 = vadd.f32 0.0, %v862
  %v864 = vpop.f32.mrf.mxu0
  %v865 = vadd.f32 0.0, %v864
  %v866 = vpop.f32.mrf.mxu0
  %v867 = vadd.f32 0.0, %v866
  %868 = vmatprep.mubr.bf16.mxu0 0
  %869 = vmatmul.mubr.bf16.gmra.mxu0 %v800
  %v870 = vpop.f32.mrf.mxu0
  %v871 = vadd.f32 0.0, %v870
  %v872 = vpop.f32.mrf.mxu0
  %v873 = vadd.f32 0.0, %v872
  %v874 = vpop.f32.mrf.mxu0
  %v875 = vadd.f32 0.0, %v874
  %v876 = vpop.f32.mrf.mxu0
  %v877 = vadd.f32 0.0, %v876
  %878 = vmatprep.mubr.bf16.mxu0 0
  %879 = vmatmul.mubr.bf16.gmra.mxu0 %v803
  %v880 = vpop.f32.mrf.mxu0
  %v881 = vadd.f32 0.0, %v880
  %v882 = vpop.f32.mrf.mxu0
  %v883 = vadd.f32 0.0, %v882
  %v884 = vpop.f32.mrf.mxu0
  %v885 = vadd.f32 0.0, %v884
  %v886 = vpop.f32.mrf.mxu0
  %v887 = vadd.f32 0.0, %v886
  %888 = vmatprep.mubr.bf16.mxu0 0
  %889 = vmatmul.mubr.bf16.gmra.mxu0 %v806
  %v890 = vpop.f32.mrf.mxu0
  %v891 = vadd.f32 0.0, %v890
  %v892 = vpop.f32.mrf.mxu0
  %v893 = vadd.f32 0.0, %v892
  %v894 = vpop.f32.mrf.mxu0
  %v895 = vadd.f32 0.0, %v894
  %v896 = vpop.f32.mrf.mxu0
  %v897 = vadd.f32 0.0, %v896
  %898 = vmatprep.mubr.bf16.mxu0 0
  %899 = vmatmul.mubr.bf16.gmra.mxu0 %v809
  %v900 = vpop.f32.mrf.mxu0
  %v901 = vadd.f32 0.0, %v900
  %v902 = vpop.f32.mrf.mxu0
  %v903 = vadd.f32 0.0, %v902
  %v904 = vpop.f32.mrf.mxu0
  %v905 = vadd.f32 0.0, %v904
  %v906 = vpop.f32.mrf.mxu0
  %v907 = vadd.f32 0.0, %v906
  %908 = vmatprep.mubr.bf16.mxu0 0
  %909 = vmatmul.mubr.bf16.gmra.mxu0 %v812
  %v910 = vpop.f32.mrf.mxu0
  %v911 = vadd.f32 0.0, %v910
  %v912 = vpop.f32.mrf.mxu0
  %v913 = vadd.f32 0.0, %v912
  %v914 = vpop.f32.mrf.mxu0
  %v915 = vadd.f32 0.0, %v914
  %v916 = vpop.f32.mrf.mxu0
  %v917 = vadd.f32 0.0, %v916
  %918 = vmatprep.mubr.bf16.mxu0 0
  %919 = vmatmul.mubr.bf16.gmra.mxu0 %v815
  %v920 = vpop.f32.mrf.mxu0
  %v921 = vadd.f32 0.0, %v920
  %v922 = vpop.f32.mrf.mxu0
  %v923 = vadd.f32 0.0, %v922
  %v924 = vpop.f32.mrf.mxu0
  %v925 = vadd.f32 0.0, %v924
  %v926 = vpop.f32.mrf.mxu0
  %v927 = vadd.f32 0.0, %v926
  %928 = vmatprep.mubr.bf16.mxu0 0
  %929 = vmatmul.mubr.bf16.gmra.mxu0 %v818
  %v930 = vpop.f32.mrf.mxu0
  %v931 = vadd.f32 0.0, %v930
  %v932 = vpop.f32.mrf.mxu0
  %v933 = vadd.f32 0.0, %v932
  %v934 = vpop.f32.mrf.mxu0
  %v935 = vadd.f32 0.0, %v934
  %v936 = vpop.f32.mrf.mxu0
  %v937 = vadd.f32 0.0, %v936
  %938 = vdwg.mxu0
  %v939 = vadd.f32 %v737, %v861
  %v940 = vadd.f32 %v738, %v863
  %v941 = vadd.f32 %v739, %v865
  %v942 = vadd.f32 %v740, %v867
  %v943 = vadd.f32 %v741, %v871
  %v944 = vadd.f32 %v742, %v873
  %v945 = vadd.f32 %v743, %v875
  %v946 = vadd.f32 %v744, %v877
  %v947 = vadd.f32 %v745, %v881
  %v948 = vadd.f32 %v746, %v883
  %v949 = vadd.f32 %v747, %v885
  %v950 = vadd.f32 %v748, %v887
  %v951 = vadd.f32 %v749, %v891
  %v952 = vadd.f32 %v750, %v893
  %v953 = vadd.f32 %v751, %v895
  %v954 = vadd.f32 %v752, %v897
  %v955 = vadd.f32 %v753, %v901
  %v956 = vadd.f32 %v754, %v903
  %v957 = vadd.f32 %v755, %v905
  %v958 = vadd.f32 %v756, %v907
  %v959 = vadd.f32 %v757, %v911
  %v960 = vadd.f32 %v758, %v913
  %v961 = vadd.f32 %v759, %v915
  %v962 = vadd.f32 %v760, %v917
  %v963 = vadd.f32 %v761, %v921
  %v964 = vadd.f32 %v762, %v923
  %v965 = vadd.f32 %v763, %v925
  %v966 = vadd.f32 %v764, %v927
  %v967 = vadd.f32 %v765, %v931
  %v968 = vadd.f32 %v766, %v933
  %v969 = vadd.f32 %v767, %v935
  %v970 = vadd.f32 %v768, %v937
  %v975 = vrot.slane %v40, 1
  %v976 = vrot.slane %v41, 1
  %v977 = vsel %vm107, %v975, %v976
  %v978 = vrot.slane %v60, 1
  %v979 = vrot.slane %v61, 1
  %v980 = vsel %vm107, %v978, %v979
  %v983 = vpack.c.bf16 %v116, %v113
  %v984 = vpack.c.bf16 %v122, %v119
  %v985 = vpack.c.bf16 %v128, %v125
  %v986 = vpack.c.bf16 %v977, %v131
  %v987 = vpack.c.bf16 %v140, %v137
  %v988 = vpack.c.bf16 %v146, %v143
  %v989 = vpack.c.bf16 %v152, %v149
  %v990 = vpack.c.bf16 %v980, %v155
  %s991 = scalar_lea.vmem %s1, 96
  %v992 = vld [vmem:[%s991] sm:$0xff]
  %v993 = vld [vmem:[%s991 + $0x8] sm:$0xff]
  %v994 = vld [vmem:[%s991 + $0x10] sm:$0x77]
  %v998 = vunpack.c.l.b16 %v992
  %v999 = vunpack.c.h.b16 %v992
  %v1000 = vunpack.c.l.b16 %v993
  %v1001 = vunpack.c.h.b16 %v993
  %v1002 = vunpack.c.l.b16 %v994
  %v1003 = vunpack.c.h.b16 %v994
  %v1004 = vpack.c.b16 %v1000, %v998
  %v1005 = vpack.c.b16 %v1001, %v999
  %v1006 = vpack.c.b16 %v1002, %v1002
  %v1007 = vpack.c.b16 %v1003, %v1003
  %v1011 = vsel %vm199, %v983, 0
  %v1014 = vsel %vm199, %v984, 0
  %v1017 = vsel %vm199, %v985, 0
  %v1020 = vsel %vm199, %v986, 0
  %v1023 = vsel %vm199, %v987, 0
  %v1026 = vsel %vm199, %v988, 0
  %v1029 = vsel %vm199, %v989, 0
  %v1032 = vsel %vm199, %v990, 0
  %v1035 = vsel %vm224, %v1006, 0
  %v1038 = vsel %vm224, %v1007, 0
  %1040 = vmatprep.subr.bf16.mxu0 0
  %1041 = vmatpush1.bf16.msra.mxu0 0
  %1042 = vmatprep.subr.bf16.mxu0 0
  %1043 = vmatpush1.bf16.msra.mxu0 0
  %1044 = vmatprep.subr.bf16.mxu0 0
  %1045 = vmatpush1.bf16.msra.mxu0 0
  %1046 = vmatprep.subr.bf16.mxu0 0
  %1047 = vmatpush1.bf16.msra.mxu0 0
  %1048 = vmatprep.subr.bf16.mxu0 0
  %1049 = vmatpush1.bf16.msra.mxu0 0
  %1050 = vmatprep.subr.bf16.mxu0 0
  %1051 = vmatpush1.bf16.msra.mxu0 0
  %1052 = vmatprep.subr.bf16.mxu0 %v1038
  %1053 = vmatpush1.bf16.msra.mxu0 %v1035
  %1054 = vmatprep.subr.bf16.mxu0 %v1005
  %1055 = vmatpush1.bf16.msra.mxu0 %v1004
  %1056 = vmatprep.subr.bf16.mxu0 0
  %1057 = vmatpush2.bf16.msra.mxu0 0
  %1058 = vmatprep.subr.bf16.mxu0 0
  %1059 = vmatpush2.bf16.msra.mxu0 0
  %1060 = vmatprep.subr.bf16.mxu0 0
  %1061 = vmatpush2.bf16.msra.mxu0 0
  %1062 = vmatprep.subr.bf16.mxu0 0
  %1063 = vmatpush2.bf16.msra.mxu0 0
  %1064 = vmatprep.subr.bf16.mxu0 0
  %1065 = vmatpush2.bf16.msra.mxu0 0
  %1066 = vmatprep.subr.bf16.mxu0 0
  %1067 = vmatpush2.bf16.msra.mxu0 0
  %1068 = vmatprep.subr.bf16.mxu0 0
  %1069 = vmatpush2.bf16.msra.mxu0 0
  %1070 = vmatprep.subr.bf16.mxu0 0
  %1071 = vmatpush2.bf16.msra.mxu0 0
  %1072 = vmatprep.mubr.bf16.mxu0 0
  %1073 = vmatmul.mubr.bf16.gmra.mxu0 %v1011
  %v1074 = vpop.f32.mrf.mxu0
  %v1075 = vadd.f32 0.0, %v1074
  %v1076 = vpop.f32.mrf.mxu0
  %v1077 = vadd.f32 0.0, %v1076
  %v1078 = vpop.f32.mrf.mxu0
  %v1079 = vadd.f32 0.0, %v1078
  %v1080 = vpop.f32.mrf.mxu0
  %v1081 = vadd.f32 0.0, %v1080
  %1082 = vmatprep.mubr.bf16.mxu0 0
  %1083 = vmatmul.mubr.bf16.gmra.mxu0 %v1014
  %v1084 = vpop.f32.mrf.mxu0
  %v1085 = vadd.f32 0.0, %v1084
  %v1086 = vpop.f32.mrf.mxu0
  %v1087 = vadd.f32 0.0, %v1086
  %v1088 = vpop.f32.mrf.mxu0
  %v1089 = vadd.f32 0.0, %v1088
  %v1090 = vpop.f32.mrf.mxu0
  %v1091 = vadd.f32 0.0, %v1090
  %1092 = vmatprep.mubr.bf16.mxu0 0
  %1093 = vmatmul.mubr.bf16.gmra.mxu0 %v1017
  %v1094 = vpop.f32.mrf.mxu0
  %v1095 = vadd.f32 0.0, %v1094
  %v1096 = vpop.f32.mrf.mxu0
  %v1097 = vadd.f32 0.0, %v1096
  %v1098 = vpop.f32.mrf.mxu0
  %v1099 = vadd.f32 0.0, %v1098
  %v1100 = vpop.f32.mrf.mxu0
  %v1101 = vadd.f32 0.0, %v1100
  %1102 = vmatprep.mubr.bf16.mxu0 0
  %1103 = vmatmul.mubr.bf16.gmra.mxu0 %v1020
  %v1104 = vpop.f32.mrf.mxu0
  %v1105 = vadd.f32 0.0, %v1104
  %v1106 = vpop.f32.mrf.mxu0
  %v1107 = vadd.f32 0.0, %v1106
  %v1108 = vpop.f32.mrf.mxu0
  %v1109 = vadd.f32 0.0, %v1108
  %v1110 = vpop.f32.mrf.mxu0
  %v1111 = vadd.f32 0.0, %v1110
  %1112 = vmatprep.mubr.bf16.mxu0 0
  %1113 = vmatmul.mubr.bf16.gmra.mxu0 %v1023
  %v1114 = vpop.f32.mrf.mxu0
  %v1115 = vadd.f32 0.0, %v1114
  %v1116 = vpop.f32.mrf.mxu0
  %v1117 = vadd.f32 0.0, %v1116
  %v1118 = vpop.f32.mrf.mxu0
  %v1119 = vadd.f32 0.0, %v1118
  %v1120 = vpop.f32.mrf.mxu0
  %v1121 = vadd.f32 0.0, %v1120
  %1122 = vmatprep.mubr.bf16.mxu0 0
  %1123 = vmatmul.mubr.bf16.gmra.mxu0 %v1026
  %v1124 = vpop.f32.mrf.mxu0
  %v1125 = vadd.f32 0.0, %v1124
  %v1126 = vpop.f32.mrf.mxu0
  %v1127 = vadd.f32 0.0, %v1126
  %v1128 = vpop.f32.mrf.mxu0
  %v1129 = vadd.f32 0.0, %v1128
  %v1130 = vpop.f32.mrf.mxu0
  %v1131 = vadd.f32 0.0, %v1130
  %1132 = vmatprep.mubr.bf16.mxu0 0
  %1133 = vmatmul.mubr.bf16.gmra.mxu0 %v1029
  %v1134 = vpop.f32.mrf.mxu0
  %v1135 = vadd.f32 0.0, %v1134
  %v1136 = vpop.f32.mrf.mxu0
  %v1137 = vadd.f32 0.0, %v1136
  %v1138 = vpop.f32.mrf.mxu0
  %v1139 = vadd.f32 0.0, %v1138
  %v1140 = vpop.f32.mrf.mxu0
  %v1141 = vadd.f32 0.0, %v1140
  %1142 = vmatprep.mubr.bf16.mxu0 0
  %1143 = vmatmul.mubr.bf16.gmra.mxu0 %v1032
  %v1144 = vpop.f32.mrf.mxu0
  %v1145 = vadd.f32 0.0, %v1144
  %v1146 = vpop.f32.mrf.mxu0
  %v1147 = vadd.f32 0.0, %v1146
  %v1148 = vpop.f32.mrf.mxu0
  %v1149 = vadd.f32 0.0, %v1148
  %v1150 = vpop.f32.mrf.mxu0
  %v1151 = vadd.f32 0.0, %v1150
  %1152 = vdwg.mxu0
  %v1153 = vadd.f32 %v939, %v1075
  %v1154 = vadd.f32 %v940, %v1077
  %v1155 = vadd.f32 %v941, %v1079
  %v1156 = vadd.f32 %v942, %v1081
  %v1157 = vadd.f32 %v943, %v1085
  %v1158 = vadd.f32 %v944, %v1087
  %v1159 = vadd.f32 %v945, %v1089
  %v1160 = vadd.f32 %v946, %v1091
  %v1161 = vadd.f32 %v947, %v1095
  %v1162 = vadd.f32 %v948, %v1097
  %v1163 = vadd.f32 %v949, %v1099
  %v1164 = vadd.f32 %v950, %v1101
  %v1165 = vadd.f32 %v951, %v1105
  %v1166 = vadd.f32 %v952, %v1107
  %v1167 = vadd.f32 %v953, %v1109
  %v1168 = vadd.f32 %v954, %v1111
  %v1169 = vadd.f32 %v955, %v1115
  %v1170 = vadd.f32 %v956, %v1117
  %v1171 = vadd.f32 %v957, %v1119
  %v1172 = vadd.f32 %v958, %v1121
  %v1173 = vadd.f32 %v959, %v1125
  %v1174 = vadd.f32 %v960, %v1127
  %v1175 = vadd.f32 %v961, %v1129
  %v1176 = vadd.f32 %v962, %v1131
  %v1177 = vadd.f32 %v963, %v1135
  %v1178 = vadd.f32 %v964, %v1137
  %v1179 = vadd.f32 %v965, %v1139
  %v1180 = vadd.f32 %v966, %v1141
  %v1181 = vadd.f32 %v967, %v1145
  %v1182 = vadd.f32 %v968, %v1147
  %v1183 = vadd.f32 %v969, %v1149
  %v1184 = vadd.f32 %v970, %v1151
  %v1185 = vrot.slane %v40, 2
  %v1186 = vrot.slane %v41, 2
  %v1187 = vsel %vm502, %v1185, %v1186
  %v1188 = vrot.slane %v60, 2
  %v1189 = vrot.slane %v61, 2
  %v1190 = vsel %vm502, %v1188, %v1189
  %v1193 = vpack.c.bf16 %v511, %v508
  %v1194 = vpack.c.bf16 %v517, %v514
  %v1195 = vpack.c.bf16 %v523, %v520
  %v1196 = vpack.c.bf16 %v1187, %v526
  %v1197 = vpack.c.bf16 %v535, %v532
  %v1198 = vpack.c.bf16 %v541, %v538
  %v1199 = vpack.c.bf16 %v547, %v544
  %v1200 = vpack.c.bf16 %v1190, %v550
  %s1201 = scalar_lea.vmem %s1, 120
  %v1202 = vld [vmem:[%s1201] sm:$0xff]
  %v1203 = vld [vmem:[%s1201 + $0x8] sm:$0xff]
  %v1204 = vld [vmem:[%s1201 + $0x10] sm:$0x77]
  %v1208 = vunpack.c.l.b16 %v1202
  %v1209 = vunpack.c.h.b16 %v1202
  %v1210 = vunpack.c.l.b16 %v1203
  %v1211 = vunpack.c.h.b16 %v1203
  %v1212 = vunpack.c.l.b16 %v1204
  %v1213 = vunpack.c.h.b16 %v1204
  %v1214 = vpack.c.b16 %v1210, %v1208
  %v1215 = vpack.c.b16 %v1211, %v1209
  %v1216 = vpack.c.b16 %v1212, %v1212
  %v1217 = vpack.c.b16 %v1213, %v1213
  %v1221 = vsel %vm199, %v1193, 0
  %v1224 = vsel %vm199, %v1194, 0
  %v1227 = vsel %vm199, %v1195, 0
  %v1230 = vsel %vm199, %v1196, 0
  %v1233 = vsel %vm199, %v1197, 0
  %v1236 = vsel %vm199, %v1198, 0
  %v1239 = vsel %vm199, %v1199, 0
  %v1242 = vsel %vm199, %v1200, 0
  %v1245 = vsel %vm224, %v1216, 0
  %v1248 = vsel %vm224, %v1217, 0
  %1250 = vmatprep.subr.bf16.mxu0 0
  %1251 = vmatpush1.bf16.msra.mxu0 0
  %1252 = vmatprep.subr.bf16.mxu0 0
  %1253 = vmatpush1.bf16.msra.mxu0 0
  %1254 = vmatprep.subr.bf16.mxu0 0
  %1255 = vmatpush1.bf16.msra.mxu0 0
  %1256 = vmatprep.subr.bf16.mxu0 0
  %1257 = vmatpush1.bf16.msra.mxu0 0
  %1258 = vmatprep.subr.bf16.mxu0 0
  %1259 = vmatpush1.bf16.msra.mxu0 0
  %1260 = vmatprep.subr.bf16.mxu0 0
  %1261 = vmatpush1.bf16.msra.mxu0 0
  %1262 = vmatprep.subr.bf16.mxu0 %v1248
  %1263 = vmatpush1.bf16.msra.mxu0 %v1245
  %1264 = vmatprep.subr.bf16.mxu0 %v1215
  %1265 = vmatpush1.bf16.msra.mxu0 %v1214
  %1266 = vmatprep.subr.bf16.mxu0 0
  %1267 = vmatpush2.bf16.msra.mxu0 0
  %1268 = vmatprep.subr.bf16.mxu0 0
  %1269 = vmatpush2.bf16.msra.mxu0 0
  %1270 = vmatprep.subr.bf16.mxu0 0
  %1271 = vmatpush2.bf16.msra.mxu0 0
  %1272 = vmatprep.subr.bf16.mxu0 0
  %1273 = vmatpush2.bf16.msra.mxu0 0
  %1274 = vmatprep.subr.bf16.mxu0 0
  %1275 = vmatpush2.bf16.msra.mxu0 0
  %1276 = vmatprep.subr.bf16.mxu0 0
  %1277 = vmatpush2.bf16.msra.mxu0 0
  %1278 = vmatprep.subr.bf16.mxu0 0
  %1279 = vmatpush2.bf16.msra.mxu0 0
  %1280 = vmatprep.subr.bf16.mxu0 0
  %1281 = vmatpush2.bf16.msra.mxu0 0
  %1282 = vmatprep.mubr.bf16.mxu0 0
  %1283 = vmatmul.mubr.bf16.gmra.mxu0 %v1221
  %v1284 = vpop.f32.mrf.mxu0
  %v1285 = vadd.f32 0.0, %v1284
  %v1286 = vpop.f32.mrf.mxu0
  %v1287 = vadd.f32 0.0, %v1286
  %v1288 = vpop.f32.mrf.mxu0
  %v1289 = vadd.f32 0.0, %v1288
  %v1290 = vpop.f32.mrf.mxu0
  %v1291 = vadd.f32 0.0, %v1290
  %1292 = vmatprep.mubr.bf16.mxu0 0
  %1293 = vmatmul.mubr.bf16.gmra.mxu0 %v1224
  %v1294 = vpop.f32.mrf.mxu0
  %v1295 = vadd.f32 0.0, %v1294
  %v1296 = vpop.f32.mrf.mxu0
  %v1297 = vadd.f32 0.0, %v1296
  %v1298 = vpop.f32.mrf.mxu0
  %v1299 = vadd.f32 0.0, %v1298
  %v1300 = vpop.f32.mrf.mxu0
  %v1301 = vadd.f32 0.0, %v1300
  %1302 = vmatprep.mubr.bf16.mxu0 0
  %1303 = vmatmul.mubr.bf16.gmra.mxu0 %v1227
  %v1304 = vpop.f32.mrf.mxu0
  %v1305 = vadd.f32 0.0, %v1304
  %v1306 = vpop.f32.mrf.mxu0
  %v1307 = vadd.f32 0.0, %v1306
  %v1308 = vpop.f32.mrf.mxu0
  %v1309 = vadd.f32 0.0, %v1308
  %v1310 = vpop.f32.mrf.mxu0
  %v1311 = vadd.f32 0.0, %v1310
  %1312 = vmatprep.mubr.bf16.mxu0 0
  %1313 = vmatmul.mubr.bf16.gmra.mxu0 %v1230
  %v1314 = vpop.f32.mrf.mxu0
  %v1315 = vadd.f32 0.0, %v1314
  %v1316 = vpop.f32.mrf.mxu0
  %v1317 = vadd.f32 0.0, %v1316
  %v1318 = vpop.f32.mrf.mxu0
  %v1319 = vadd.f32 0.0, %v1318
  %v1320 = vpop.f32.mrf.mxu0
  %v1321 = vadd.f32 0.0, %v1320
  %1322 = vmatprep.mubr.bf16.mxu0 0
  %1323 = vmatmul.mubr.bf16.gmra.mxu0 %v1233
  %v1324 = vpop.f32.mrf.mxu0
  %v1325 = vadd.f32 0.0, %v1324
  %v1326 = vpop.f32.mrf.mxu0
  %v1327 = vadd.f32 0.0, %v1326
  %v1328 = vpop.f32.mrf.mxu0
  %v1329 = vadd.f32 0.0, %v1328
  %v1330 = vpop.f32.mrf.mxu0
  %v1331 = vadd.f32 0.0, %v1330
  %1332 = vmatprep.mubr.bf16.mxu0 0
  %1333 = vmatmul.mubr.bf16.gmra.mxu0 %v1236
  %v1334 = vpop.f32.mrf.mxu0
  %v1335 = vadd.f32 0.0, %v1334
  %v1336 = vpop.f32.mrf.mxu0
  %v1337 = vadd.f32 0.0, %v1336
  %v1338 = vpop.f32.mrf.mxu0
  %v1339 = vadd.f32 0.0, %v1338
  %v1340 = vpop.f32.mrf.mxu0
  %v1341 = vadd.f32 0.0, %v1340
  %1342 = vmatprep.mubr.bf16.mxu0 0
  %1343 = vmatmul.mubr.bf16.gmra.mxu0 %v1239
  %v1344 = vpop.f32.mrf.mxu0
  %v1345 = vadd.f32 0.0, %v1344
  %v1346 = vpop.f32.mrf.mxu0
  %v1347 = vadd.f32 0.0, %v1346
  %v1348 = vpop.f32.mrf.mxu0
  %v1349 = vadd.f32 0.0, %v1348
  %v1350 = vpop.f32.mrf.mxu0
  %v1351 = vadd.f32 0.0, %v1350
  %1352 = vmatprep.mubr.bf16.mxu0 0
  %1353 = vmatmul.mubr.bf16.gmra.mxu0 %v1242
  %v1354 = vpop.f32.mrf.mxu0
  %v1355 = vadd.f32 0.0, %v1354
  %v1356 = vpop.f32.mrf.mxu0
  %v1357 = vadd.f32 0.0, %v1356
  %v1358 = vpop.f32.mrf.mxu0
  %v1359 = vadd.f32 0.0, %v1358
  %v1360 = vpop.f32.mrf.mxu0
  %v1361 = vadd.f32 0.0, %v1360
  %1362 = vdwg.mxu0
  %v1363 = vadd.f32 %v1153, %v1285
  %v1364 = vadd.f32 %v1154, %v1287
  %v1365 = vadd.f32 %v1155, %v1289
  %v1366 = vadd.f32 %v1156, %v1291
  %v1367 = vadd.f32 %v1157, %v1295
  %v1368 = vadd.f32 %v1158, %v1297
  %v1369 = vadd.f32 %v1159, %v1299
  %v1370 = vadd.f32 %v1160, %v1301
  %v1371 = vadd.f32 %v1161, %v1305
  %v1372 = vadd.f32 %v1162, %v1307
  %v1373 = vadd.f32 %v1163, %v1309
  %v1374 = vadd.f32 %v1164, %v1311
  %v1375 = vadd.f32 %v1165, %v1315
  %v1376 = vadd.f32 %v1166, %v1317
  %v1377 = vadd.f32 %v1167, %v1319
  %v1378 = vadd.f32 %v1168, %v1321
  %v1379 = vadd.f32 %v1169, %v1325
  %v1380 = vadd.f32 %v1170, %v1327
  %v1381 = vadd.f32 %v1171, %v1329
  %v1382 = vadd.f32 %v1172, %v1331
  %v1383 = vadd.f32 %v1173, %v1335
  %v1384 = vadd.f32 %v1174, %v1337
  %v1385 = vadd.f32 %v1175, %v1339
  %v1386 = vadd.f32 %v1176, %v1341
  %v1387 = vadd.f32 %v1177, %v1345
  %v1388 = vadd.f32 %v1178, %v1347
  %v1389 = vadd.f32 %v1179, %v1349
  %v1390 = vadd.f32 %v1180, %v1351
  %v1391 = vadd.f32 %v1181, %v1355
  %v1392 = vadd.f32 %v1182, %v1357
  %v1393 = vadd.f32 %v1183, %v1359
  %v1394 = vadd.f32 %v1184, %v1361
  %v1395 = vpack.c.bf16 %v42, %v40
  %v1396 = vpack.c.bf16 %v62, %v60
  %s1397 = scalar_lea.vmem %s1, 144
  %v1398 = vld [vmem:[%s1397] sm:$0xff]
  %v1399 = vld [vmem:[%s1397 + $0x8] sm:$0xff]
  %v1400 = vld [vmem:[%s1397 + $0x10] sm:$0x77]
  %v1404 = vunpack.c.l.b16 %v1398
  %v1405 = vunpack.c.h.b16 %v1398
  %v1406 = vunpack.c.l.b16 %v1399
  %v1407 = vunpack.c.h.b16 %v1399
  %v1408 = vunpack.c.l.b16 %v1400
  %v1409 = vunpack.c.h.b16 %v1400
  %v1410 = vpack.c.b16 %v1406, %v1404
  %v1411 = vpack.c.b16 %v1407, %v1405
  %v1412 = vpack.c.b16 %v1408, %v1408
  %v1413 = vpack.c.b16 %v1409, %v1409
  %v1417 = vsel %vm199, %v1395, 0
  %v1420 = vsel %vm199, %v1396, 0
  %v1423 = vsel %vm224, %v1412, 0
  %v1426 = vsel %vm224, %v1413, 0
  %1428 = vmatprep.subr.bf16.mxu0 0
  %1429 = vmatpush1.bf16.msra.mxu0 0
  %1430 = vmatprep.subr.bf16.mxu0 0
  %1431 = vmatpush1.bf16.msra.mxu0 0
  %1432 = vmatprep.subr.bf16.mxu0 0
  %1433 = vmatpush1.bf16.msra.mxu0 0
  %1434 = vmatprep.subr.bf16.mxu0 0
  %1435 = vmatpush1.bf16.msra.mxu0 0
  %1436 = vmatprep.subr.bf16.mxu0 0
  %1437 = vmatpush1.bf16.msra.mxu0 0
  %1438 = vmatprep.subr.bf16.mxu0 0
  %1439 = vmatpush1.bf16.msra.mxu0 0
  %1440 = vmatprep.subr.bf16.mxu0 %v1426
  %1441 = vmatpush1.bf16.msra.mxu0 %v1423
  %1442 = vmatprep.subr.bf16.mxu0 %v1411
  %1443 = vmatpush1.bf16.msra.mxu0 %v1410
  %1444 = vmatprep.subr.bf16.mxu0 0
  %1445 = vmatpush2.bf16.msra.mxu0 0
  %1446 = vmatprep.subr.bf16.mxu0 0
  %1447 = vmatpush2.bf16.msra.mxu0 0
  %1448 = vmatprep.subr.bf16.mxu0 0
  %1449 = vmatpush2.bf16.msra.mxu0 0
  %1450 = vmatprep.subr.bf16.mxu0 0
  %1451 = vmatpush2.bf16.msra.mxu0 0
  %1452 = vmatprep.subr.bf16.mxu0 0
  %1453 = vmatpush2.bf16.msra.mxu0 0
  %1454 = vmatprep.subr.bf16.mxu0 0
  %1455 = vmatpush2.bf16.msra.mxu0 0
  %1456 = vmatprep.subr.bf16.mxu0 0
  %1457 = vmatpush2.bf16.msra.mxu0 0
  %1458 = vmatprep.subr.bf16.mxu0 0
  %1459 = vmatpush2.bf16.msra.mxu0 0
  %1460 = vmatprep.mubr.bf16.mxu0 0
  %1461 = vmatmul.mubr.bf16.gmra.mxu0 %v363
  %v1462 = vpop.f32.mrf.mxu0
  %v1463 = vadd.f32 0.0, %v1462
  %v1464 = vpop.f32.mrf.mxu0
  %v1465 = vadd.f32 0.0, %v1464
  %v1466 = vpop.f32.mrf.mxu0
  %v1467 = vadd.f32 0.0, %v1466
  %v1468 = vpop.f32.mrf.mxu0
  %v1469 = vadd.f32 0.0, %v1468
  %1470 = vmatprep.mubr.bf16.mxu0 0
  %1471 = vmatmul.mubr.bf16.gmra.mxu0 %v366
  %v1472 = vpop.f32.mrf.mxu0
  %v1473 = vadd.f32 0.0, %v1472
  %v1474 = vpop.f32.mrf.mxu0
  %v1475 = vadd.f32 0.0, %v1474
  %v1476 = vpop.f32.mrf.mxu0
  %v1477 = vadd.f32 0.0, %v1476
  %v1478 = vpop.f32.mrf.mxu0
  %v1479 = vadd.f32 0.0, %v1478
  %1480 = vmatprep.mubr.bf16.mxu0 0
  %1481 = vmatmul.mubr.bf16.gmra.mxu0 %v369
  %v1482 = vpop.f32.mrf.mxu0
  %v1483 = vadd.f32 0.0, %v1482
  %v1484 = vpop.f32.mrf.mxu0
  %v1485 = vadd.f32 0.0, %v1484
  %v1486 = vpop.f32.mrf.mxu0
  %v1487 = vadd.f32 0.0, %v1486
  %v1488 = vpop.f32.mrf.mxu0
  %v1489 = vadd.f32 0.0, %v1488
  %1490 = vmatprep.mubr.bf16.mxu0 0
  %1491 = vmatmul.mubr.bf16.gmra.mxu0 %v1417
  %v1492 = vpop.f32.mrf.mxu0
  %v1493 = vadd.f32 0.0, %v1492
  %v1494 = vpop.f32.mrf.mxu0
  %v1495 = vadd.f32 0.0, %v1494
  %v1496 = vpop.f32.mrf.mxu0
  %v1497 = vadd.f32 0.0, %v1496
  %v1498 = vpop.f32.mrf.mxu0
  %v1499 = vadd.f32 0.0, %v1498
  %1500 = vmatprep.mubr.bf16.mxu0 0
  %1501 = vmatmul.mubr.bf16.gmra.mxu0 %v375
  %v1502 = vpop.f32.mrf.mxu0
  %v1503 = vadd.f32 0.0, %v1502
  %v1504 = vpop.f32.mrf.mxu0
  %v1505 = vadd.f32 0.0, %v1504
  %v1506 = vpop.f32.mrf.mxu0
  %v1507 = vadd.f32 0.0, %v1506
  %v1508 = vpop.f32.mrf.mxu0
  %v1509 = vadd.f32 0.0, %v1508
  %1510 = vmatprep.mubr.bf16.mxu0 0
  %1511 = vmatmul.mubr.bf16.gmra.mxu0 %v378
  %v1512 = vpop.f32.mrf.mxu0
  %v1513 = vadd.f32 0.0, %v1512
  %v1514 = vpop.f32.mrf.mxu0
  %v1515 = vadd.f32 0.0, %v1514
  %v1516 = vpop.f32.mrf.mxu0
  %v1517 = vadd.f32 0.0, %v1516
  %v1518 = vpop.f32.mrf.mxu0
  %v1519 = vadd.f32 0.0, %v1518
  %1520 = vmatprep.mubr.bf16.mxu0 0
  %1521 = vmatmul.mubr.bf16.gmra.mxu0 %v381
  %v1522 = vpop.f32.mrf.mxu0
  %v1523 = vadd.f32 0.0, %v1522
  %v1524 = vpop.f32.mrf.mxu0
  %v1525 = vadd.f32 0.0, %v1524
  %v1526 = vpop.f32.mrf.mxu0
  %v1527 = vadd.f32 0.0, %v1526
  %v1528 = vpop.f32.mrf.mxu0
  %v1529 = vadd.f32 0.0, %v1528
  %1530 = vmatprep.mubr.bf16.mxu0 0
  %1531 = vmatmul.mubr.bf16.gmra.mxu0 %v1420
  %v1532 = vpop.f32.mrf.mxu0
  %v1533 = vadd.f32 0.0, %v1532
  %v1534 = vpop.f32.mrf.mxu0
  %v1535 = vadd.f32 0.0, %v1534
  %v1536 = vpop.f32.mrf.mxu0
  %v1537 = vadd.f32 0.0, %v1536
  %v1538 = vpop.f32.mrf.mxu0
  %v1539 = vadd.f32 0.0, %v1538
  %1540 = vdwg.mxu0
  %v1541 = vadd.f32 %v1363, %v1463
  %v1542 = vadd.f32 %v1364, %v1465
  %v1543 = vadd.f32 %v1365, %v1467
  %v1544 = vadd.f32 %v1366, %v1469
  %v1545 = vadd.f32 %v1367, %v1473
  %v1546 = vadd.f32 %v1368, %v1475
  %v1547 = vadd.f32 %v1369, %v1477
  %v1548 = vadd.f32 %v1370, %v1479
  %v1549 = vadd.f32 %v1371, %v1483
  %v1550 = vadd.f32 %v1372, %v1485
  %v1551 = vadd.f32 %v1373, %v1487
  %v1552 = vadd.f32 %v1374, %v1489
  %v1553 = vadd.f32 %v1375, %v1493
  %v1554 = vadd.f32 %v1376, %v1495
  %v1555 = vadd.f32 %v1377, %v1497
  %v1556 = vadd.f32 %v1378, %v1499
  %v1557 = vadd.f32 %v1379, %v1503
  %v1558 = vadd.f32 %v1380, %v1505
  %v1559 = vadd.f32 %v1381, %v1507
  %v1560 = vadd.f32 %v1382, %v1509
  %v1561 = vadd.f32 %v1383, %v1513
  %v1562 = vadd.f32 %v1384, %v1515
  %v1563 = vadd.f32 %v1385, %v1517
  %v1564 = vadd.f32 %v1386, %v1519
  %v1565 = vadd.f32 %v1387, %v1523
  %v1566 = vadd.f32 %v1388, %v1525
  %v1567 = vadd.f32 %v1389, %v1527
  %v1568 = vadd.f32 %v1390, %v1529
  %v1569 = vadd.f32 %v1391, %v1533
  %v1570 = vadd.f32 %v1392, %v1535
  %v1571 = vadd.f32 %v1393, %v1537
  %v1572 = vadd.f32 %v1394, %v1539
  %v1577 = vrot.slane %v42, 1
  %v1578 = vrot.slane %v43, 1
  %v1579 = vsel %vm107, %v1577, %v1578
  %v1580 = vrot.slane %v62, 1
  %v1581 = vrot.slane %v63, 1
  %v1582 = vsel %vm107, %v1580, %v1581
  %v1585 = vpack.c.bf16 %v1579, %v977
  %v1586 = vpack.c.bf16 %v1582, %v980
  %s1587 = scalar_lea.vmem %s1, 168
  %v1588 = vld [vmem:[%s1587] sm:$0xff]
  %v1589 = vld [vmem:[%s1587 + $0x8] sm:$0xff]
  %v1590 = vld [vmem:[%s1587 + $0x10] sm:$0x77]
  %v1594 = vunpack.c.l.b16 %v1588
  %v1595 = vunpack.c.h.b16 %v1588
  %v1596 = vunpack.c.l.b16 %v1589
  %v1597 = vunpack.c.h.b16 %v1589
  %v1598 = vunpack.c.l.b16 %v1590
  %v1599 = vunpack.c.h.b16 %v1590
  %v1600 = vpack.c.b16 %v1596, %v1594
  %v1601 = vpack.c.b16 %v1597, %v1595
  %v1602 = vpack.c.b16 %v1598, %v1598
  %v1603 = vpack.c.b16 %v1599, %v1599
  %v1607 = vsel %vm199, %v1585, 0
  %v1610 = vsel %vm199, %v1586, 0
  %v1613 = vsel %vm224, %v1602, 0
  %v1616 = vsel %vm224, %v1603, 0
  %1618 = vmatprep.subr.bf16.mxu0 0
  %1619 = vmatpush1.bf16.msra.mxu0 0
  %1620 = vmatprep.subr.bf16.mxu0 0
  %1621 = vmatpush1.bf16.msra.mxu0 0
  %1622 = vmatprep.subr.bf16.mxu0 0
  %1623 = vmatpush1.bf16.msra.mxu0 0
  %1624 = vmatprep.subr.bf16.mxu0 0
  %1625 = vmatpush1.bf16.msra.mxu0 0
  %1626 = vmatprep.subr.bf16.mxu0 0
  %1627 = vmatpush1.bf16.msra.mxu0 0
  %1628 = vmatprep.subr.bf16.mxu0 0
  %1629 = vmatpush1.bf16.msra.mxu0 0
  %1630 = vmatprep.subr.bf16.mxu0 %v1616
  %1631 = vmatpush1.bf16.msra.mxu0 %v1613
  %1632 = vmatprep.subr.bf16.mxu0 %v1601
  %1633 = vmatpush1.bf16.msra.mxu0 %v1600
  %1634 = vmatprep.subr.bf16.mxu0 0
  %1635 = vmatpush2.bf16.msra.mxu0 0
  %1636 = vmatprep.subr.bf16.mxu0 0
  %1637 = vmatpush2.bf16.msra.mxu0 0
  %1638 = vmatprep.subr.bf16.mxu0 0
  %1639 = vmatpush2.bf16.msra.mxu0 0
  %1640 = vmatprep.subr.bf16.mxu0 0
  %1641 = vmatpush2.bf16.msra.mxu0 0
  %1642 = vmatprep.subr.bf16.mxu0 0
  %1643 = vmatpush2.bf16.msra.mxu0 0
  %1644 = vmatprep.subr.bf16.mxu0 0
  %1645 = vmatpush2.bf16.msra.mxu0 0
  %1646 = vmatprep.subr.bf16.mxu0 0
  %1647 = vmatpush2.bf16.msra.mxu0 0
  %1648 = vmatprep.subr.bf16.mxu0 0
  %1649 = vmatpush2.bf16.msra.mxu0 0
  %1650 = vmatprep.mubr.bf16.mxu0 0
  %1651 = vmatmul.mubr.bf16.gmra.mxu0 %v204
  %v1652 = vpop.f32.mrf.mxu0
  %v1653 = vadd.f32 0.0, %v1652
  %v1654 = vpop.f32.mrf.mxu0
  %v1655 = vadd.f32 0.0, %v1654
  %v1656 = vpop.f32.mrf.mxu0
  %v1657 = vadd.f32 0.0, %v1656
  %v1658 = vpop.f32.mrf.mxu0
  %v1659 = vadd.f32 0.0, %v1658
  %1660 = vmatprep.mubr.bf16.mxu0 0
  %1661 = vmatmul.mubr.bf16.gmra.mxu0 %v207
  %v1662 = vpop.f32.mrf.mxu0
  %v1663 = vadd.f32 0.0, %v1662
  %v1664 = vpop.f32.mrf.mxu0
  %v1665 = vadd.f32 0.0, %v1664
  %v1666 = vpop.f32.mrf.mxu0
  %v1667 = vadd.f32 0.0, %v1666
  %v1668 = vpop.f32.mrf.mxu0
  %v1669 = vadd.f32 0.0, %v1668
  %1670 = vmatprep.mubr.bf16.mxu0 0
  %1671 = vmatmul.mubr.bf16.gmra.mxu0 %v210
  %v1672 = vpop.f32.mrf.mxu0
  %v1673 = vadd.f32 0.0, %v1672
  %v1674 = vpop.f32.mrf.mxu0
  %v1675 = vadd.f32 0.0, %v1674
  %v1676 = vpop.f32.mrf.mxu0
  %v1677 = vadd.f32 0.0, %v1676
  %v1678 = vpop.f32.mrf.mxu0
  %v1679 = vadd.f32 0.0, %v1678
  %1680 = vmatprep.mubr.bf16.mxu0 0
  %1681 = vmatmul.mubr.bf16.gmra.mxu0 %v1607
  %v1682 = vpop.f32.mrf.mxu0
  %v1683 = vadd.f32 0.0, %v1682
  %v1684 = vpop.f32.mrf.mxu0
  %v1685 = vadd.f32 0.0, %v1684
  %v1686 = vpop.f32.mrf.mxu0
  %v1687 = vadd.f32 0.0, %v1686
  %v1688 = vpop.f32.mrf.mxu0
  %v1689 = vadd.f32 0.0, %v1688
  %1690 = vmatprep.mubr.bf16.mxu0 0
  %1691 = vmatmul.mubr.bf16.gmra.mxu0 %v216
  %v1692 = vpop.f32.mrf.mxu0
  %v1693 = vadd.f32 0.0, %v1692
  %v1694 = vpop.f32.mrf.mxu0
  %v1695 = vadd.f32 0.0, %v1694
  %v1696 = vpop.f32.mrf.mxu0
  %v1697 = vadd.f32 0.0, %v1696
  %v1698 = vpop.f32.mrf.mxu0
  %v1699 = vadd.f32 0.0, %v1698
  %1700 = vmatprep.mubr.bf16.mxu0 0
  %1701 = vmatmul.mubr.bf16.gmra.mxu0 %v219
  %v1702 = vpop.f32.mrf.mxu0
  %v1703 = vadd.f32 0.0, %v1702
  %v1704 = vpop.f32.mrf.mxu0
  %v1705 = vadd.f32 0.0, %v1704
  %v1706 = vpop.f32.mrf.mxu0
  %v1707 = vadd.f32 0.0, %v1706
  %v1708 = vpop.f32.mrf.mxu0
  %v1709 = vadd.f32 0.0, %v1708
  %1710 = vmatprep.mubr.bf16.mxu0 0
  %1711 = vmatmul.mubr.bf16.gmra.mxu0 %v222
  %v1712 = vpop.f32.mrf.mxu0
  %v1713 = vadd.f32 0.0, %v1712
  %v1714 = vpop.f32.mrf.mxu0
  %v1715 = vadd.f32 0.0, %v1714
  %v1716 = vpop.f32.mrf.mxu0
  %v1717 = vadd.f32 0.0, %v1716
  %v1718 = vpop.f32.mrf.mxu0
  %v1719 = vadd.f32 0.0, %v1718
  %1720 = vmatprep.mubr.bf16.mxu0 0
  %1721 = vmatmul.mubr.bf16.gmra.mxu0 %v1610
  %v1722 = vpop.f32.mrf.mxu0
  %v1723 = vadd.f32 0.0, %v1722
  %v1724 = vpop.f32.mrf.mxu0
  %v1725 = vadd.f32 0.0, %v1724
  %v1726 = vpop.f32.mrf.mxu0
  %v1727 = vadd.f32 0.0, %v1726
  %v1728 = vpop.f32.mrf.mxu0
  %v1729 = vadd.f32 0.0, %v1728
  %1730 = vdwg.mxu0
  %v1731 = vadd.f32 %v1541, %v1653
  %v1732 = vadd.f32 %v1542, %v1655
  %v1733 = vadd.f32 %v1543, %v1657
  %v1734 = vadd.f32 %v1544, %v1659
  %v1735 = vadd.f32 %v1545, %v1663
  %v1736 = vadd.f32 %v1546, %v1665
  %v1737 = vadd.f32 %v1547, %v1667
  %v1738 = vadd.f32 %v1548, %v1669
  %v1739 = vadd.f32 %v1549, %v1673
  %v1740 = vadd.f32 %v1550, %v1675
  %v1741 = vadd.f32 %v1551, %v1677
  %v1742 = vadd.f32 %v1552, %v1679
  %v1743 = vadd.f32 %v1553, %v1683
  %v1744 = vadd.f32 %v1554, %v1685
  %v1745 = vadd.f32 %v1555, %v1687
  %v1746 = vadd.f32 %v1556, %v1689
  %v1747 = vadd.f32 %v1557, %v1693
  %v1748 = vadd.f32 %v1558, %v1695
  %v1749 = vadd.f32 %v1559, %v1697
  %v1750 = vadd.f32 %v1560, %v1699
  %v1751 = vadd.f32 %v1561, %v1703
  %v1752 = vadd.f32 %v1562, %v1705
  %v1753 = vadd.f32 %v1563, %v1707
  %v1754 = vadd.f32 %v1564, %v1709
  %v1755 = vadd.f32 %v1565, %v1713
  %v1756 = vadd.f32 %v1566, %v1715
  %v1757 = vadd.f32 %v1567, %v1717
  %v1758 = vadd.f32 %v1568, %v1719
  %v1759 = vadd.f32 %v1569, %v1723
  %v1760 = vadd.f32 %v1570, %v1725
  %v1761 = vadd.f32 %v1571, %v1727
  %v1762 = vadd.f32 %v1572, %v1729
  %v1763 = vrot.slane %v42, 2
  %v1764 = vrot.slane %v43, 2
  %v1765 = vsel %vm502, %v1763, %v1764
  %v1766 = vrot.slane %v62, 2
  %v1767 = vrot.slane %v63, 2
  %v1768 = vsel %vm502, %v1766, %v1767
  %v1771 = vpack.c.bf16 %v1765, %v1187
  %v1772 = vpack.c.bf16 %v1768, %v1190
  %s1773 = scalar_lea.vmem %s1, 192
  %v1774 = vld [vmem:[%s1773] sm:$0xff]
  %v1775 = vld [vmem:[%s1773 + $0x8] sm:$0xff]
  %v1776 = vld [vmem:[%s1773 + $0x10] sm:$0x77]
  %v1780 = vunpack.c.l.b16 %v1774
  %v1781 = vunpack.c.h.b16 %v1774
  %v1782 = vunpack.c.l.b16 %v1775
  %v1783 = vunpack.c.h.b16 %v1775
  %v1784 = vunpack.c.l.b16 %v1776
  %v1785 = vunpack.c.h.b16 %v1776
  %v1786 = vpack.c.b16 %v1782, %v1780
  %v1787 = vpack.c.b16 %v1783, %v1781
  %v1788 = vpack.c.b16 %v1784, %v1784
  %v1789 = vpack.c.b16 %v1785, %v1785
  %v1793 = vsel %vm199, %v1771, 0
  %v1796 = vsel %vm199, %v1772, 0
  %v1799 = vsel %vm224, %v1788, 0
  %v1802 = vsel %vm224, %v1789, 0
  %1804 = vmatprep.subr.bf16.mxu0 0
  %1805 = vmatpush1.bf16.msra.mxu0 0
  %1806 = vmatprep.subr.bf16.mxu0 0
  %1807 = vmatpush1.bf16.msra.mxu0 0
  %1808 = vmatprep.subr.bf16.mxu0 0
  %1809 = vmatpush1.bf16.msra.mxu0 0
  %1810 = vmatprep.subr.bf16.mxu0 0
  %1811 = vmatpush1.bf16.msra.mxu0 0
  %1812 = vmatprep.subr.bf16.mxu0 0
  %1813 = vmatpush1.bf16.msra.mxu0 0
  %1814 = vmatprep.subr.bf16.mxu0 0
  %1815 = vmatpush1.bf16.msra.mxu0 0
  %1816 = vmatprep.subr.bf16.mxu0 %v1802
  %1817 = vmatpush1.bf16.msra.mxu0 %v1799
  %1818 = vmatprep.subr.bf16.mxu0 %v1787
  %1819 = vmatpush1.bf16.msra.mxu0 %v1786
  %1820 = vmatprep.subr.bf16.mxu0 0
  %1821 = vmatpush2.bf16.msra.mxu0 0
  %1822 = vmatprep.subr.bf16.mxu0 0
  %1823 = vmatpush2.bf16.msra.mxu0 0
  %1824 = vmatprep.subr.bf16.mxu0 0
  %1825 = vmatpush2.bf16.msra.mxu0 0
  %1826 = vmatprep.subr.bf16.mxu0 0
  %1827 = vmatpush2.bf16.msra.mxu0 0
  %1828 = vmatprep.subr.bf16.mxu0 0
  %1829 = vmatpush2.bf16.msra.mxu0 0
  %1830 = vmatprep.subr.bf16.mxu0 0
  %1831 = vmatpush2.bf16.msra.mxu0 0
  %1832 = vmatprep.subr.bf16.mxu0 0
  %1833 = vmatpush2.bf16.msra.mxu0 0
  %1834 = vmatprep.subr.bf16.mxu0 0
  %1835 = vmatpush2.bf16.msra.mxu0 0
  %1836 = vmatprep.mubr.bf16.mxu0 0
  %1837 = vmatmul.mubr.bf16.gmra.mxu0 %v598
  %v1838 = vpop.f32.mrf.mxu0
  %v1839 = vadd.f32 0.0, %v1838
  %v1840 = vpop.f32.mrf.mxu0
  %v1841 = vadd.f32 0.0, %v1840
  %v1842 = vpop.f32.mrf.mxu0
  %v1843 = vadd.f32 0.0, %v1842
  %v1844 = vpop.f32.mrf.mxu0
  %v1845 = vadd.f32 0.0, %v1844
  %1846 = vmatprep.mubr.bf16.mxu0 0
  %1847 = vmatmul.mubr.bf16.gmra.mxu0 %v601
  %v1848 = vpop.f32.mrf.mxu0
  %v1849 = vadd.f32 0.0, %v1848
  %v1850 = vpop.f32.mrf.mxu0
  %v1851 = vadd.f32 0.0, %v1850
  %v1852 = vpop.f32.mrf.mxu0
  %v1853 = vadd.f32 0.0, %v1852
  %v1854 = vpop.f32.mrf.mxu0
  %v1855 = vadd.f32 0.0, %v1854
  %1856 = vmatprep.mubr.bf16.mxu0 0
  %1857 = vmatmul.mubr.bf16.gmra.mxu0 %v604
  %v1858 = vpop.f32.mrf.mxu0
  %v1859 = vadd.f32 0.0, %v1858
  %v1860 = vpop.f32.mrf.mxu0
  %v1861 = vadd.f32 0.0, %v1860
  %v1862 = vpop.f32.mrf.mxu0
  %v1863 = vadd.f32 0.0, %v1862
  %v1864 = vpop.f32.mrf.mxu0
  %v1865 = vadd.f32 0.0, %v1864
  %1866 = vmatprep.mubr.bf16.mxu0 0
  %1867 = vmatmul.mubr.bf16.gmra.mxu0 %v1793
  %v1868 = vpop.f32.mrf.mxu0
  %v1869 = vadd.f32 0.0, %v1868
  %v1870 = vpop.f32.mrf.mxu0
  %v1871 = vadd.f32 0.0, %v1870
  %v1872 = vpop.f32.mrf.mxu0
  %v1873 = vadd.f32 0.0, %v1872
  %v1874 = vpop.f32.mrf.mxu0
  %v1875 = vadd.f32 0.0, %v1874
  %1876 = vmatprep.mubr.bf16.mxu0 0
  %1877 = vmatmul.mubr.bf16.gmra.mxu0 %v610
  %v1878 = vpop.f32.mrf.mxu0
  %v1879 = vadd.f32 0.0, %v1878
  %v1880 = vpop.f32.mrf.mxu0
  %v1881 = vadd.f32 0.0, %v1880
  %v1882 = vpop.f32.mrf.mxu0
  %v1883 = vadd.f32 0.0, %v1882
  %v1884 = vpop.f32.mrf.mxu0
  %v1885 = vadd.f32 0.0, %v1884
  %1886 = vmatprep.mubr.bf16.mxu0 0
  %1887 = vmatmul.mubr.bf16.gmra.mxu0 %v613
  %v1888 = vpop.f32.mrf.mxu0
  %v1889 = vadd.f32 0.0, %v1888
  %v1890 = vpop.f32.mrf.mxu0
  %v1891 = vadd.f32 0.0, %v1890
  %v1892 = vpop.f32.mrf.mxu0
  %v1893 = vadd.f32 0.0, %v1892
  %v1894 = vpop.f32.mrf.mxu0
  %v1895 = vadd.f32 0.0, %v1894
  %1896 = vmatprep.mubr.bf16.mxu0 0
  %1897 = vmatmul.mubr.bf16.gmra.mxu0 %v616
  %v1898 = vpop.f32.mrf.mxu0
  %v1899 = vadd.f32 0.0, %v1898
  %v1900 = vpop.f32.mrf.mxu0
  %v1901 = vadd.f32 0.0, %v1900
  %v1902 = vpop.f32.mrf.mxu0
  %v1903 = vadd.f32 0.0, %v1902
  %v1904 = vpop.f32.mrf.mxu0
  %v1905 = vadd.f32 0.0, %v1904
  %1906 = vmatprep.mubr.bf16.mxu0 0
  %1907 = vmatmul.mubr.bf16.gmra.mxu0 %v1796
  %v1908 = vpop.f32.mrf.mxu0
  %v1909 = vadd.f32 0.0, %v1908
  %v1910 = vpop.f32.mrf.mxu0
  %v1911 = vadd.f32 0.0, %v1910
  %v1912 = vpop.f32.mrf.mxu0
  %v1913 = vadd.f32 0.0, %v1912
  %v1914 = vpop.f32.mrf.mxu0
  %v1915 = vadd.f32 0.0, %v1914
  %1916 = vdwg.mxu0
  %v1917 = vadd.f32 %v1731, %v1839
  %v1918 = vadd.f32 %v1732, %v1841
  %v1919 = vadd.f32 %v1733, %v1843
  %v1920 = vadd.f32 %v1734, %v1845
  %v1921 = vadd.f32 %v1735, %v1849
  %v1922 = vadd.f32 %v1736, %v1851
  %v1923 = vadd.f32 %v1737, %v1853
  %v1924 = vadd.f32 %v1738, %v1855
  %v1925 = vadd.f32 %v1739, %v1859
  %v1926 = vadd.f32 %v1740, %v1861
  %v1927 = vadd.f32 %v1741, %v1863
  %v1928 = vadd.f32 %v1742, %v1865
  %v1929 = vadd.f32 %v1743, %v1869
  %v1930 = vadd.f32 %v1744, %v1871
  %v1931 = vadd.f32 %v1745, %v1873
  %v1932 = vadd.f32 %v1746, %v1875
  %v1933 = vadd.f32 %v1747, %v1879
  %v1934 = vadd.f32 %v1748, %v1881
  %v1935 = vadd.f32 %v1749, %v1883
  %v1936 = vadd.f32 %v1750, %v1885
  %v1937 = vadd.f32 %v1751, %v1889
  %v1938 = vadd.f32 %v1752, %v1891
  %v1939 = vadd.f32 %v1753, %v1893
  %v1940 = vadd.f32 %v1754, %v1895
  %v1941 = vadd.f32 %v1755, %v1899
  %v1942 = vadd.f32 %v1756, %v1901
  %v1943 = vadd.f32 %v1757, %v1903
  %v1944 = vadd.f32 %v1758, %v1905
  %v1945 = vadd.f32 %v1759, %v1909
  %v1946 = vadd.f32 %v1760, %v1911
  %v1947 = vadd.f32 %v1761, %v1913
  %v1948 = vadd.f32 %v1762, %v1915
  %v1949 = vld [vmem:[%s2] sm:$0x3]
  %v1950 = vadd.f32 %v1917, %v1919
  %v1951 = vadd.f32 %v1950, %v1921
  %v1952 = vadd.f32 %v1951, %v1923
  %v1953 = vadd.f32 %v1952, %v1925
  %v1954 = vadd.f32 %v1953, %v1927
  %v1955 = vadd.f32 %v1954, %v1929
  %v1956 = vadd.f32 %v1955, %v1931
  %v1957 = vadd.f32 %v1956, %v1933
  %v1958 = vadd.f32 %v1957, %v1935
  %v1959 = vadd.f32 %v1958, %v1937
  %v1960 = vadd.f32 %v1959, %v1939
  %v1961 = vadd.f32 %v1960, %v1941
  %v1962 = vadd.f32 %v1961, %v1943
  %v1963 = vadd.f32 %v1962, %v1945
  %v1964 = vadd.f32 %v1963, %v1947
  %v1965 = vrot.slane %v1964, 4
  %v1966 = vadd.f32 %v1964, %v1965
  %v1967 = vrot.slane %v1966, 2
  %v1968 = vadd.f32 %v1966, %v1967
  %v1969 = vrot.slane %v1968, 1
  %v1970 = vadd.f32 %v1968, %v1969
  %v1971 = vadd.f32 %v1918, %v1920
  %v1972 = vadd.f32 %v1971, %v1922
  %v1973 = vadd.f32 %v1972, %v1924
  %v1974 = vadd.f32 %v1973, %v1926
  %v1975 = vadd.f32 %v1974, %v1928
  %v1976 = vadd.f32 %v1975, %v1930
  %v1977 = vadd.f32 %v1976, %v1932
  %v1978 = vadd.f32 %v1977, %v1934
  %v1979 = vadd.f32 %v1978, %v1936
  %v1980 = vadd.f32 %v1979, %v1938
  %v1981 = vadd.f32 %v1980, %v1940
  %v1982 = vadd.f32 %v1981, %v1942
  %v1983 = vadd.f32 %v1982, %v1944
  %v1984 = vadd.f32 %v1983, %v1946
  %v1985 = vadd.f32 %v1984, %v1948
  %v1986 = vrot.slane %v1985, 4
  %v1987 = vadd.f32 %v1985, %v1986
  %v1988 = vrot.slane %v1987, 2
  %v1989 = vadd.f32 %v1987, %v1988
  %v1990 = vrot.slane %v1989, 1
  %v1991 = vadd.f32 %v1989, %v1990
  %v1994 = vcombine.low %v1970, %v1991
  %v1996 = vunpack.c.l.s4 1966171168
  %v1997 = vunpack.c.0.s8 %v1996
  %v1998 = vlaneseq
  %v1999 = vshrl.u32 %v1998, 7
  %v2000 = vsub.s32 %v1997, %v1999
  %v2001 = vrot.slane %v1994, %v2000
  %v2003 = vunpack.c.l.s4 1966171168
  %v2004 = vunpack.c.0.s8 %v2003
  %v2005 = vlaneseq
  %v2006 = vshrl.u32 %v2005, 7
  %v2007 = vsub.s32 %v2004, %v2006
  %v2008 = vrot.slane %v2001, %v2007
  %v2010 = vadd.f32 %v1949, %v2008
  %v2011 = vlaneseq
  %vm2012 = vcmp.ge.s32.totalorder %v2011, 0
  %vm2013 = vcmp.lt.s32.totalorder %v2011, 256
  %vm2014 = vmand %vm2012, %vm2013
  %2015 = vst.msk [vmem:[%s2] sm:$0x3] %vm2014, %v2010
  %v2016 = vld [vmem:[%s3] sm:$0x3]
  %v2017 = vmul.f32 %v1917, %v1917
  %v2018 = vmul.f32 %v1918, %v1918
  %v2019 = vmul.f32 %v1919, %v1919
  %v2020 = vmul.f32 %v1920, %v1920
  %v2021 = vmul.f32 %v1921, %v1921
  %v2022 = vmul.f32 %v1922, %v1922
  %v2023 = vmul.f32 %v1923, %v1923
  %v2024 = vmul.f32 %v1924, %v1924
  %v2025 = vmul.f32 %v1925, %v1925
  %v2026 = vmul.f32 %v1926, %v1926
  %v2027 = vmul.f32 %v1927, %v1927
  %v2028 = vmul.f32 %v1928, %v1928
  %v2029 = vmul.f32 %v1929, %v1929
  %v2030 = vmul.f32 %v1930, %v1930
  %v2031 = vmul.f32 %v1931, %v1931
  %v2032 = vmul.f32 %v1932, %v1932
  %v2033 = vmul.f32 %v1933, %v1933
  %v2034 = vmul.f32 %v1934, %v1934
  %v2035 = vmul.f32 %v1935, %v1935
  %v2036 = vmul.f32 %v1936, %v1936
  %v2037 = vmul.f32 %v1937, %v1937
  %v2038 = vmul.f32 %v1938, %v1938
  %v2039 = vmul.f32 %v1939, %v1939
  %v2040 = vmul.f32 %v1940, %v1940
  %v2041 = vmul.f32 %v1941, %v1941
  %v2042 = vmul.f32 %v1942, %v1942
  %v2043 = vmul.f32 %v1943, %v1943
  %v2044 = vmul.f32 %v1944, %v1944
  %v2045 = vmul.f32 %v1945, %v1945
  %v2046 = vmul.f32 %v1946, %v1946
  %v2047 = vmul.f32 %v1947, %v1947
  %v2048 = vmul.f32 %v1948, %v1948
  %v2049 = vadd.f32 %v2017, %v2019
  %v2050 = vadd.f32 %v2049, %v2021
  %v2051 = vadd.f32 %v2050, %v2023
  %v2052 = vadd.f32 %v2051, %v2025
  %v2053 = vadd.f32 %v2052, %v2027
  %v2054 = vadd.f32 %v2053, %v2029
  %v2055 = vadd.f32 %v2054, %v2031
  %v2056 = vadd.f32 %v2055, %v2033
  %v2057 = vadd.f32 %v2056, %v2035
  %v2058 = vadd.f32 %v2057, %v2037
  %v2059 = vadd.f32 %v2058, %v2039
  %v2060 = vadd.f32 %v2059, %v2041
  %v2061 = vadd.f32 %v2060, %v2043
  %v2062 = vadd.f32 %v2061, %v2045
  %v2063 = vadd.f32 %v2062, %v2047
  %v2064 = vrot.slane %v2063, 4
  %v2065 = vadd.f32 %v2063, %v2064
  %v2066 = vrot.slane %v2065, 2
  %v2067 = vadd.f32 %v2065, %v2066
  %v2068 = vrot.slane %v2067, 1
  %v2069 = vadd.f32 %v2067, %v2068
  %v2070 = vadd.f32 %v2018, %v2020
  %v2071 = vadd.f32 %v2070, %v2022
  %v2072 = vadd.f32 %v2071, %v2024
  %v2073 = vadd.f32 %v2072, %v2026
  %v2074 = vadd.f32 %v2073, %v2028
  %v2075 = vadd.f32 %v2074, %v2030
  %v2076 = vadd.f32 %v2075, %v2032
  %v2077 = vadd.f32 %v2076, %v2034
  %v2078 = vadd.f32 %v2077, %v2036
  %v2079 = vadd.f32 %v2078, %v2038
  %v2080 = vadd.f32 %v2079, %v2040
  %v2081 = vadd.f32 %v2080, %v2042
  %v2082 = vadd.f32 %v2081, %v2044
  %v2083 = vadd.f32 %v2082, %v2046
  %v2084 = vadd.f32 %v2083, %v2048
  %v2085 = vrot.slane %v2084, 4
  %v2086 = vadd.f32 %v2084, %v2085
  %v2087 = vrot.slane %v2086, 2
  %v2088 = vadd.f32 %v2086, %v2087
  %v2089 = vrot.slane %v2088, 1
  %v2090 = vadd.f32 %v2088, %v2089
  %v2093 = vcombine.low %v2069, %v2090
  %v2095 = vunpack.c.l.s4 1966171168
  %v2096 = vunpack.c.0.s8 %v2095
  %v2097 = vlaneseq
  %v2098 = vshrl.u32 %v2097, 7
  %v2099 = vsub.s32 %v2096, %v2098
  %v2100 = vrot.slane %v2093, %v2099
  %v2102 = vunpack.c.l.s4 1966171168
  %v2103 = vunpack.c.0.s8 %v2102
  %v2104 = vlaneseq
  %v2105 = vshrl.u32 %v2104, 7
  %v2106 = vsub.s32 %v2103, %v2105
  %v2107 = vrot.slane %v2100, %v2106
  %v2109 = vadd.f32 %v2016, %v2107
  %2110 = vst.msk [vmem:[%s3] sm:$0x3] %vm2014, %v2109
  // Predicated region
  $region14: #{conv_block_forward.2} parent=0 // pred_check
    _
  $region15: #{conv_block_forward.2} parent=0 // pred_check_branch
    %2112 = sbr.rel (0) target = $region17
  $region16: #{conv_block_forward.2} parent=0 // pred_region
    _
  $region17: #{conv_block_forward.2} parent=0 // pred_fallthru
    _
  // Predicated region
  $region18: #{conv_block_forward.2} parent=0 // pred_check
    _
  $region19: #{conv_block_forward.2} parent=0 // pred_check_branch
    %2114 = sbr.rel (0) target = $region21
  $region20: #{conv_block_forward.2} parent=0 // pred_region
    _
  $region21: #{conv_block_forward.2} parent=0 // pred_fallthru
    _
  // Predicated region
  $region22: #{conv_block_forward.2} parent=0 // pred_check
    _
  $region23: #{conv_block_forward.2} parent=0 // pred_check_branch
    %2116 = sbr.rel (0) target = $region25
  $region24: #{conv_block_forward.2} parent=0 // pred_region
    _
  $region25: #{conv_block_forward.2} parent=0 // pred_fallthru
    _
  // Predicated region
  $region26: #{conv_block_forward.2} parent=0 // pred_check
    _
  $region27: #{conv_block_forward.2} parent=0 // pred_check_branch
    %2118 = sbr.rel (0) target = $region29
  $region28: #{conv_block_forward.2} parent=0 // pred_region
    _
  $region29: #{conv_block_forward.2} parent=0 // pred_fallthru
    _

</llo_original>
